<compile_context>
chip_gen: v5e
topology: v5e:2x2
jax: 0.10.0
libtpu: 0.0.40
codegen_flags: <defaults>
</compile_context>

<pallas_src>
import functools
import math

import jax
import jax.numpy as jnp
from jax.experimental import pallas as pl
from jax.experimental.pallas import tpu as pltpu


def _mhsa_kernel(x_ref, wq_ref, bq_ref, wk_ref, bk_ref, wv_ref, bv_ref,
                 wo_ref, bo_ref, out_ref, attn_ref,
                 k_scratch, v_scratch, acc_ref, *, tq):
    # Blocks:
    #   x_ref:    (1, S, D)   full sequence for this batch element (f32)
    #   wq/wk/wv: (H, D, hd)  resident bf16 projection weights (constant index_map)
    #   bq/bk/bv: (H, 1, hd)  resident f32 biases (scale folded into bq)
    #   wo_ref:   (H, hd, D)  resident bf16 output-projection rows
    #   bo_ref:   (1, D)      f32
    #   out_ref:  (1, TQ, D)  resident across the head (reduction) axis
    #   attn_ref: (1, 1, TQ, S)
    qi = pl.program_id(1)
    h = pl.program_id(2)
    n_heads = pl.num_programs(2)

    # ---- K / V projections for (batch, head): compute once at the first query tile,
    #      cache in bf16 VMEM scratch, reuse for all remaining query tiles of this batch.
    @pl.when(qi == 0)
    def _():
        x_bf = x_ref[0].astype(jnp.bfloat16)                               # (S, D) bf16
        kh = jnp.dot(x_bf, wk_ref[h], preferred_element_type=jnp.float32) + bk_ref[h]
        vh = jnp.dot(x_bf, wv_ref[h], preferred_element_type=jnp.float32) + bv_ref[h]
        k_scratch[h] = kh.astype(jnp.bfloat16)
        v_scratch[h] = vh.astype(jnp.bfloat16)

    # ---- Q projection for this query tile / head (1/sqrt(hd) already folded into W_q, b_q).
    q_start = pl.multiple_of(qi * tq, tq)
    xq = x_ref[0, pl.ds(q_start, tq), :].astype(jnp.bfloat16)              # (TQ, D) bf16
    qh = (jnp.dot(xq, wq_ref[h], preferred_element_type=jnp.float32)
          + bq_ref[h]).astype(jnp.bfloat16)                                # (TQ, hd) bf16

    kh = k_scratch[h]                                                      # (S, hd) bf16
    vh = v_scratch[h]                                                      # (S, hd) bf16

    # ---- scores: contract last dims of Q and K (bf16 MXU, f32 accumulation, no transpose).
    s = jax.lax.dot_general(qh, kh,
                            dimension_numbers=(((1,), (1,)), ((), ())),
                            preferred_element_type=jnp.float32)            # (TQ, S) f32
    # TODO(synk): optional attention `mask` is not implemented (mask=None path only).

    # ---- softmax in f32; reciprocal goes to the EUP instead of a VALU divide.
    s = s - jnp.max(s, axis=-1, keepdims=True)
    e = jnp.exp(s)
    inv = pl.reciprocal(jnp.sum(e, axis=-1, keepdims=True), approx=True)
    a = e * inv                                                            # (TQ, S) f32
    attn_ref[0, 0] = a.astype(attn_ref.dtype)

    # ---- this head's attention output and its slice of the output projection (bf16 MXU).
    ao = jnp.dot(a.astype(jnp.bfloat16), vh,
                 preferred_element_type=jnp.float32)                       # (TQ, hd) f32
    proj = jnp.dot(ao.astype(jnp.bfloat16), wo_ref[h],
                   preferred_element_type=jnp.float32)                     # (TQ, D)  f32

    # First head writes the accumulator directly (no zero store + RMW), later heads add.
    @pl.when(h == 0)
    def _():
        acc_ref[...] = proj

    @pl.when(h > 0)
    def _():
        acc_ref[...] += proj

    @pl.when(h == n_heads - 1)
    def _():
        out_ref[0] = (acc_ref[...] + bo_ref[...]).astype(out_ref.dtype)


def _tpu_vmem_capacity_bytes():
    try:
        return int(pltpu.get_tpu_info().vmem_capacity_bytes)
    except Exception:
        return 64 * 1024 * 1024                     # conservative (v7x-sized) fallback


def _pick_q_tile(S, vmem_cap):
    # 128 MiB chips (v5e / v6e): big query tiles amortize the ~0.35 us per-grid-step cost.
    # 64 MiB chips (v7x): cap TQ so x block + bf16 K/V scratch + attn block still fit.
    cap = 512 if vmem_cap >= (96 << 20) else 256
    if S <= cap:
        return S
    for cand in (512, 256, 128):
        if cand <= cap and S % cand == 0:
            return cand
    return S


def multihead_self_attention(x, params, n_heads, q_tile=None, attn_dtype=None):
    """x: (B, S, D). Returns (out (B, S, D), attn_weights (B, H, S, S))."""
    B, S, D = x.shape
    H = n_heads
    assert D % H == 0, "d_model must be divisible by n_heads"
    hd = D // H

    vmem_cap = _tpu_vmem_capacity_bytes()
    if q_tile is None:
        q_tile = _pick_q_tile(S, vmem_cap)
    TQ = q_tile
    assert S % TQ == 0 and TQ % 8 == 0, "query tile must divide S and be a multiple of 8"
    NQ = S // TQ

    attn_dtype = x.dtype if attn_dtype is None else attn_dtype

    wq, bq, wk, bk, wv, bv, wo, bo = params
    scale = 1.0 / math.sqrt(hd)

    def split_in(w, b, s=1.0):
        # (D, D) -> (H, D, hd) column blocks (bf16 for the MXU); (1, D) -> (H, 1, hd) f32.
        wh = ((w * s).reshape(D, H, hd).transpose(1, 0, 2)).astype(jnp.bfloat16)
        bh = (b * s).reshape(H, 1, hd).astype(jnp.float32)
        return wh, bh

    wq_h, bq_h = split_in(wq, bq, scale)   # fold 1/sqrt(hd) into W_q / b_q (free)
    wk_h, bk_h = split_in(wk, bk)
    wv_h, bv_h = split_in(wv, bv)
    wo_h = wo.reshape(H, hd, D).astype(jnp.bfloat16)   # per-head row blocks of W_o
    bo_f = bo.astype(jnp.float32)

    kernel = functools.partial(_mhsa_kernel, tq=TQ)

    # Resident weights: constant block index => DMA'd once, never re-fetched per grid step.
    w_in_spec = pl.BlockSpec((H, D, hd), lambda b, qi, h: (0, 0, 0))
    b_in_spec = pl.BlockSpec((H, 1, hd), lambda b, qi, h: (0, 0, 0))

    # vmem limit: leave headroom below the physical capacity (64 MiB on v7x, 128 on v5e/v6e).
    vmem_limit = min(int(vmem_cap * 0.85), 100 * 1024 * 1024)

    out, attn = pl.pallas_call(
        kernel,
        out_shape=(
            jax.ShapeDtypeStruct((B, S, D), x.dtype),
            jax.ShapeDtypeStruct((B, H, S, S), attn_dtype),
        ),
        grid_spec=pltpu.PrefetchScalarGridSpec(
            num_scalar_prefetch=0,
            grid=(B, NQ, H),
            in_specs=[
                pl.BlockSpec((1, S, D), lambda b, qi, h: (b, 0, 0)),     # x (per batch)
                w_in_spec, b_in_spec,                                    # W_q, b_q (pre-scaled)
                w_in_spec, b_in_spec,                                    # W_k, b_k
                w_in_spec, b_in_spec,                                    # W_v, b_v
                pl.BlockSpec((H, hd, D), lambda b, qi, h: (0, 0, 0)),    # W_o (resident)
                pl.BlockSpec((1, D), lambda b, qi, h: (0, 0)),           # b_o
            ],
            out_specs=[
                pl.BlockSpec((1, TQ, D), lambda b, qi, h: (b, qi, 0)),       # out
                pl.BlockSpec((1, 1, TQ, S), lambda b, qi, h: (b, h, qi, 0)), # attn (lane-dense)
            ],
            scratch_shapes=[
                pltpu.VMEM((H, S, hd), jnp.bfloat16),   # cached K projections (bf16)
                pltpu.VMEM((H, S, hd), jnp.bfloat16),   # cached V projections (bf16)
                pltpu.VMEM((TQ, D), jnp.float32),       # output-projection accumulator
            ],
        ),
        compiler_params=pltpu.CompilerParams(
            # qi must stay "arbitrary": K/V scratch is written only at qi == 0.
            dimension_semantics=("parallel", "arbitrary", "arbitrary"),
            vmem_limit_bytes=vmem_limit,
        ),
    )(x, wq_h, bq_h, wk_h, bk_h, wv_h, bv_h, wo_h, bo_f)
    return out, attn


def _init_params(key, d_model):
    """Deterministic PyTorch-style Linear init: U(-1/sqrt(fan_in), 1/sqrt(fan_in)).
    Weights stored as (D_in, D_out); biases as (1, D_out)."""
    bound = 1.0 / math.sqrt(d_model)
    keys = jax.random.split(key, 8)
    params = []
    for i in range(4):
        w = jax.random.uniform(keys[2 * i], (d_model, d_model),
                               minval=-bound, maxval=bound, dtype=jnp.float32)
        b = jax.random.uniform(keys[2 * i + 1], (1, d_model),
                               minval=-bound, maxval=bound, dtype=jnp.float32)
        params += [w, b]
    return tuple(params)


def _reference(x, params, n_heads):
    """Pure-JAX f32 reference mirroring the PyTorch forward."""
    wq, bq, wk, bk, wv, bv, wo, bo = params
    B, S, D = x.shape
    hd = D // n_heads

    def proj(w, b):
        y = x @ w + b
        return y.reshape(B, S, n_heads, hd).transpose(0, 2, 1, 3)   # (B, H, S, hd)

    Q, K, V = proj(wq, bq), proj(wk, bk), proj(wv, bv)
    scores = jnp.einsum('bhqd,bhkd->bhqk', Q, K) / math.sqrt(hd)
    attn = jax.nn.softmax(scores, axis=-1)
    ao = jnp.einsum('bhqk,bhkd->bhqd', attn, V)
    ao = ao.transpose(0, 2, 1, 3).reshape(B, S, D)
    return ao @ wo + bo, attn


if __name__ == "__main__":
    # Small, TPU-aligned shapes; q_tile=128 forces 2 query tiles so the K/V-cache path runs.
    B, S, D, H = 2, 256, 256, 2

    key = jax.random.PRNGKey(0)
    kx, kp = jax.random.split(key)
    x = jax.random.normal(kx, (B, S, D), dtype=jnp.float32)
    params = _init_params(kp, D)

    out, attn = multihead_self_attention(x, params, H, q_tile=128)
    out, attn = jax.block_until_ready((out, attn))

    ref_out, ref_attn = _reference(x, params, H)
    # Tolerances account for bf16 MXU operands (f32 accumulation) and the EUP approximate
    # reciprocal in the softmax denominator, vs. the pure-f32 reference.
    assert jnp.allclose(out, ref_out, atol=1e-2, rtol=1e-2), "output mismatch"
    assert jnp.allclose(attn, ref_attn, atol=5e-3, rtol=5e-3), "attn mismatch"

    print("KERNEL_OK")
</pallas_src>

<mosaic_0001>
module attributes {stable_mosaic.version = 11 : i64} {
  func.func @_mhsa_kernel(%arg0: i32, %arg1: i32, %arg2: i32, %arg3: memref<1x256x256xf32, #tpu.memory_space<vmem>>, %arg4: memref<2x256x128xbf16, #tpu.memory_space<vmem>>, %arg5: memref<2x1x128xf32, #tpu.memory_space<vmem>>, %arg6: memref<2x256x128xbf16, #tpu.memory_space<vmem>>, %arg7: memref<2x1x128xf32, #tpu.memory_space<vmem>>, %arg8: memref<2x256x128xbf16, #tpu.memory_space<vmem>>, %arg9: memref<2x1x128xf32, #tpu.memory_space<vmem>>, %arg10: memref<2x128x256xbf16, #tpu.memory_space<vmem>>, %arg11: memref<1x256xf32, #tpu.memory_space<vmem>>, %arg12: memref<1x128x256xf32, #tpu.memory_space<vmem>>, %arg13: memref<1x1x128x256xf32, #tpu.memory_space<vmem>>, %arg14: memref<2x256x128xbf16, #tpu.memory_space<vmem>>, %arg15: memref<2x256x128xbf16, #tpu.memory_space<vmem>>, %arg16: memref<128x256xf32, #tpu.memory_space<vmem>>) attributes {dimension_semantics = [#tpu.dimension_semantics<parallel>, #tpu.dimension_semantics<arbitrary>, #tpu.dimension_semantics<arbitrary>], iteration_bounds = array<i64: 2, 2, 2>, scalar_prefetch = 0 : i64, scratch_operands = 3 : i64, tpu.core_type = #tpu.core_type<tc>, window_params = [{transform_indices = @transform_0, window_bounds = array<i64: 1, 256, 256>}, {pipeline_mode = #tpu.pipeline_mode<synchronous>, transform_indices = @transform_1, window_bounds = array<i64: 2, 256, 128>}, {pipeline_mode = #tpu.pipeline_mode<synchronous>, transform_indices = @transform_2, window_bounds = array<i64: 2, 1, 128>}, {pipeline_mode = #tpu.pipeline_mode<synchronous>, transform_indices = @transform_3, window_bounds = array<i64: 2, 256, 128>}, {pipeline_mode = #tpu.pipeline_mode<synchronous>, transform_indices = @transform_4, window_bounds = array<i64: 2, 1, 128>}, {pipeline_mode = #tpu.pipeline_mode<synchronous>, transform_indices = @transform_5, window_bounds = array<i64: 2, 256, 128>}, {pipeline_mode = #tpu.pipeline_mode<synchronous>, transform_indices = @transform_6, window_bounds = array<i64: 2, 1, 128>}, {pipeline_mode = #tpu.pipeline_mode<synchronous>, transform_indices = @transform_7, window_bounds = array<i64: 2, 128, 256>}, {pipeline_mode = #tpu.pipeline_mode<synchronous>, transform_indices = @transform_8, window_bounds = array<i64: 1, 256>}, {transform_indices = @transform_9, window_bounds = array<i64: 1, 128, 256>}, {transform_indices = @transform_10, window_bounds = array<i64: 1, 1, 128, 256>}]} {
    %c0_i32 = arith.constant 0 : i32
    %0 = arith.cmpi eq, %arg1, %c0_i32 : i32
    %1 = arith.extui %0 : i1 to i32
    %c0_i32_0 = arith.constant 0 : i32
    %2 = arith.cmpi ne, %1, %c0_i32_0 : i32
    scf.if %2 {
      %c0_26 = arith.constant 0 : index
      %c0_27 = arith.constant 0 : index
      %c0_28 = arith.constant 0 : index
      %55 = vector.load %arg3[%c0_26, %c0_27, %c0_28] : memref<1x256x256xf32, #tpu.memory_space<vmem>>, vector<1x256x256xf32>
      %56 = vector.shape_cast %55 : vector<1x256x256xf32> to vector<256x256xf32>
      %57 = arith.truncf %56 : vector<256x256xf32> to vector<256x256xbf16>
      %58 = arith.index_cast %arg2 : i32 to index
      %c0_29 = arith.constant 0 : index
      %c0_30 = arith.constant 0 : index
      %59 = vector.load %arg6[%58, %c0_29, %c0_30] : memref<2x256x128xbf16, #tpu.memory_space<vmem>>, vector<1x256x128xbf16>
      %60 = vector.shape_cast %59 : vector<1x256x128xbf16> to vector<256x128xbf16>
      %cst_31 = arith.constant dense<0.000000e+00> : vector<256x128xf32>
      %61 = tpu.matmul %57, %60, %cst_31 {dimension_numbers = #tpu.dot_dimension_numbers<[1], [0], [0], [1], [0, 0, 1, 1], [], []>} : vector<256x256xbf16>, vector<256x128xbf16>, vector<256x128xf32> -> vector<256x128xf32>
      %62 = arith.index_cast %arg2 : i32 to index
      %c0_32 = arith.constant 0 : index
      %c0_33 = arith.constant 0 : index
      %63 = vector.load %arg7[%62, %c0_32, %c0_33] : memref<2x1x128xf32, #tpu.memory_space<vmem>>, vector<1x1x128xf32>
      %64 = vector.shape_cast %63 : vector<1x1x128xf32> to vector<1x128xf32>
      %65 = vector.broadcast %64 : vector<1x128xf32> to vector<256x128xf32>
      %66 = arith.addf %61, %65 : vector<256x128xf32>
      %67 = arith.index_cast %arg2 : i32 to index
      %c0_34 = arith.constant 0 : index
      %c0_35 = arith.constant 0 : index
      %68 = vector.load %arg8[%67, %c0_34, %c0_35] : memref<2x256x128xbf16, #tpu.memory_space<vmem>>, vector<1x256x128xbf16>
      %69 = vector.shape_cast %68 : vector<1x256x128xbf16> to vector<256x128xbf16>
      %cst_36 = arith.constant dense<0.000000e+00> : vector<256x128xf32>
      %70 = tpu.matmul %57, %69, %cst_36 {dimension_numbers = #tpu.dot_dimension_numbers<[1], [0], [0], [1], [0, 0, 1, 1], [], []>} : vector<256x256xbf16>, vector<256x128xbf16>, vector<256x128xf32> -> vector<256x128xf32>
      %71 = arith.index_cast %arg2 : i32 to index
      %c0_37 = arith.constant 0 : index
      %c0_38 = arith.constant 0 : index
      %72 = vector.load %arg9[%71, %c0_37, %c0_38] : memref<2x1x128xf32, #tpu.memory_space<vmem>>, vector<1x1x128xf32>
      %73 = vector.shape_cast %72 : vector<1x1x128xf32> to vector<1x128xf32>
      %74 = vector.broadcast %73 : vector<1x128xf32> to vector<256x128xf32>
      %75 = arith.addf %70, %74 : vector<256x128xf32>
      %76 = arith.truncf %66 : vector<256x128xf32> to vector<256x128xbf16>
      %77 = arith.index_cast %arg2 : i32 to index
      %c0_39 = arith.constant 0 : index
      %c0_40 = arith.constant 0 : index
      %78 = vector.load %arg14[%77, %c0_39, %c0_40] : memref<2x256x128xbf16, #tpu.memory_space<vmem>>, vector<1x256x128xbf16>
      %79 = vector.shape_cast %78 : vector<1x256x128xbf16> to vector<256x128xbf16>
      %80 = vector.shape_cast %76 : vector<256x128xbf16> to vector<1x256x128xbf16>
      tpu.vector_store %arg14[%77, %c0_39, %c0_40], %80 {strides = array<i32>} : memref<2x256x128xbf16, #tpu.memory_space<vmem>>, vector<1x256x128xbf16>,
      %81 = arith.truncf %75 : vector<256x128xf32> to vector<256x128xbf16>
      %82 = arith.index_cast %arg2 : i32 to index
      %c0_41 = arith.constant 0 : index
      %c0_42 = arith.constant 0 : index
      %83 = vector.load %arg15[%82, %c0_41, %c0_42] : memref<2x256x128xbf16, #tpu.memory_space<vmem>>, vector<1x256x128xbf16>
      %84 = vector.shape_cast %83 : vector<1x256x128xbf16> to vector<256x128xbf16>
      %85 = vector.shape_cast %81 : vector<256x128xbf16> to vector<1x256x128xbf16>
      tpu.vector_store %arg15[%82, %c0_41, %c0_42], %85 {strides = array<i32>} : memref<2x256x128xbf16, #tpu.memory_space<vmem>>, vector<1x256x128xbf16>,
    } else {
    }
    %c128_i32 = arith.constant 128 : i32
    %3 = arith.muli %arg1, %c128_i32 : i32
    %4 = tpu.assume_multiple %3, 128 : i32
    %c0 = arith.constant 0 : index
    %5 = arith.index_cast %4 : i32 to index
    %c0_1 = arith.constant 0 : index
    %6 = vector.load %arg3[%c0, %5, %c0_1] : memref<1x256x256xf32, #tpu.memory_space<vmem>>, vector<1x128x256xf32>
    %7 = vector.shape_cast %6 : vector<1x128x256xf32> to vector<128x256xf32>
    %8 = arith.truncf %7 : vector<128x256xf32> to vector<128x256xbf16>
    %9 = arith.index_cast %arg2 : i32 to index
    %c0_2 = arith.constant 0 : index
    %c0_3 = arith.constant 0 : index
    %10 = vector.load %arg4[%9, %c0_2, %c0_3] : memref<2x256x128xbf16, #tpu.memory_space<vmem>>, vector<1x256x128xbf16>
    %11 = vector.shape_cast %10 : vector<1x256x128xbf16> to vector<256x128xbf16>
    %cst = arith.constant dense<0.000000e+00> : vector<128x128xf32>
    %12 = tpu.matmul %8, %11, %cst {dimension_numbers = #tpu.dot_dimension_numbers<[1], [0], [0], [1], [0, 0, 1, 1], [], []>} : vector<128x256xbf16>, vector<256x128xbf16>, vector<128x128xf32> -> vector<128x128xf32>
    %13 = arith.index_cast %arg2 : i32 to index
    %c0_4 = arith.constant 0 : index
    %c0_5 = arith.constant 0 : index
    %14 = vector.load %arg5[%13, %c0_4, %c0_5] : memref<2x1x128xf32, #tpu.memory_space<vmem>>, vector<1x1x128xf32>
    %15 = vector.shape_cast %14 : vector<1x1x128xf32> to vector<1x128xf32>
    %16 = vector.broadcast %15 : vector<1x128xf32> to vector<128x128xf32>
    %17 = arith.addf %12, %16 : vector<128x128xf32>
    %18 = arith.truncf %17 : vector<128x128xf32> to vector<128x128xbf16>
    %19 = arith.index_cast %arg2 : i32 to index
    %c0_6 = arith.constant 0 : index
    %c0_7 = arith.constant 0 : index
    %20 = vector.load %arg14[%19, %c0_6, %c0_7] : memref<2x256x128xbf16, #tpu.memory_space<vmem>>, vector<1x256x128xbf16>
    %21 = vector.shape_cast %20 : vector<1x256x128xbf16> to vector<256x128xbf16>
    %22 = arith.index_cast %arg2 : i32 to index
    %c0_8 = arith.constant 0 : index
    %c0_9 = arith.constant 0 : index
    %23 = vector.load %arg15[%22, %c0_8, %c0_9] : memref<2x256x128xbf16, #tpu.memory_space<vmem>>, vector<1x256x128xbf16>
    %24 = vector.shape_cast %23 : vector<1x256x128xbf16> to vector<256x128xbf16>
    %cst_10 = arith.constant dense<0.000000e+00> : vector<128x256xf32>
    %25 = tpu.matmul %18, %21, %cst_10 {dimension_numbers = #tpu.dot_dimension_numbers<[1], [1], [0], [0], [0, 0, 1, 0], [], []>} : vector<128x128xbf16>, vector<256x128xbf16>, vector<128x256xf32> -> vector<128x256xf32>
    %cst_11 = arith.constant dense<0xFF800000> : vector<128xf32>
    %26 = vector.multi_reduction <maximumf>, %25, %cst_11 [1] : vector<128x256xf32> to vector<128xf32>
    %27 = vector.shape_cast %26 : vector<128xf32> to vector<128x1xf32>
    %28 = vector.broadcast %27 : vector<128x1xf32> to vector<128x256xf32>
    %29 = arith.subf %25, %28 : vector<128x256xf32>
    %30 = math.exp %29 : vector<128x256xf32>
    %cst_12 = arith.constant dense<0.000000e+00> : vector<128xf32>
    %31 = vector.multi_reduction <add>, %30, %cst_12 [1] : vector<128x256xf32> to vector<128xf32>
    %32 = vector.shape_cast %31 : vector<128xf32> to vector<128x1xf32>
    %33 = tpu.reciprocal %32 {approx = true} : vector<128x1xf32> -> vector<128x1xf32>
    %34 = vector.broadcast %33 : vector<128x1xf32> to vector<128x256xf32>
    %35 = arith.mulf %30, %34 : vector<128x256xf32>
    %c0_13 = arith.constant 0 : index
    %c0_14 = arith.constant 0 : index
    %c0_15 = arith.constant 0 : index
    %c0_16 = arith.constant 0 : index
    %36 = vector.load %arg13[%c0_13, %c0_14, %c0_15, %c0_16] : memref<1x1x128x256xf32, #tpu.memory_space<vmem>>, vector<1x1x128x256xf32>
    %37 = vector.shape_cast %36 : vector<1x1x128x256xf32> to vector<128x256xf32>
    %38 = vector.shape_cast %35 : vector<128x256xf32> to vector<1x1x128x256xf32>
    tpu.vector_store %arg13[%c0_13, %c0_14, %c0_15, %c0_16], %38 {strides = array<i32>} : memref<1x1x128x256xf32, #tpu.memory_space<vmem>>, vector<1x1x128x256xf32>,
    %39 = arith.truncf %35 : vector<128x256xf32> to vector<128x256xbf16>
    %cst_17 = arith.constant dense<0.000000e+00> : vector<128x128xf32>
    %40 = tpu.matmul %39, %24, %cst_17 {dimension_numbers = #tpu.dot_dimension_numbers<[1], [0], [0], [1], [0, 0, 1, 1], [], []>} : vector<128x256xbf16>, vector<256x128xbf16>, vector<128x128xf32> -> vector<128x128xf32>
    %41 = arith.truncf %40 : vector<128x128xf32> to vector<128x128xbf16>
    %42 = arith.index_cast %arg2 : i32 to index
    %c0_18 = arith.constant 0 : index
    %c0_19 = arith.constant 0 : index
    %43 = vector.load %arg10[%42, %c0_18, %c0_19] : memref<2x128x256xbf16, #tpu.memory_space<vmem>>, vector<1x128x256xbf16>
    %44 = vector.shape_cast %43 : vector<1x128x256xbf16> to vector<128x256xbf16>
    %cst_20 = arith.constant dense<0.000000e+00> : vector<128x256xf32>
    %45 = tpu.matmul %41, %44, %cst_20 {dimension_numbers = #tpu.dot_dimension_numbers<[1], [0], [0], [1], [0, 0, 1, 1], [], []>} : vector<128x128xbf16>, vector<128x256xbf16>, vector<128x256xf32> -> vector<128x256xf32>
    %c0_i32_21 = arith.constant 0 : i32
    %46 = arith.cmpi eq, %arg2, %c0_i32_21 : i32
    %47 = arith.extui %46 : i1 to i32
    %c0_i32_22 = arith.constant 0 : i32
    %48 = arith.cmpi ne, %47, %c0_i32_22 : i32
    scf.if %48 {
      %c0_26 = arith.constant 0 : index
      %c0_27 = arith.constant 0 : index
      %55 = vector.load %arg16[%c0_26, %c0_27] : memref<128x256xf32, #tpu.memory_space<vmem>>, vector<128x256xf32>
      tpu.vector_store %arg16[%c0_26, %c0_27], %45 {strides = array<i32>} : memref<128x256xf32, #tpu.memory_space<vmem>>, vector<128x256xf32>,
    } else {
    }
    %c0_i32_23 = arith.constant 0 : i32
    %49 = arith.cmpi sgt, %arg2, %c0_i32_23 : i32
    %50 = arith.extui %49 : i1 to i32
    %c0_i32_24 = arith.constant 0 : i32
    %51 = arith.cmpi ne, %50, %c0_i32_24 : i32
    scf.if %51 {
      %c0_26 = arith.constant 0 : index
      %c0_27 = arith.constant 0 : index
      %55 = vector.load %arg16[%c0_26, %c0_27] : memref<128x256xf32, #tpu.memory_space<vmem>>, vector<128x256xf32>
      %56 = arith.addf %55, %45 : vector<128x256xf32>
      %c0_28 = arith.constant 0 : index
      %c0_29 = arith.constant 0 : index
      %57 = vector.load %arg16[%c0_28, %c0_29] : memref<128x256xf32, #tpu.memory_space<vmem>>, vector<128x256xf32>
      tpu.vector_store %arg16[%c0_28, %c0_29], %56 {strides = array<i32>} : memref<128x256xf32, #tpu.memory_space<vmem>>, vector<128x256xf32>,
    } else {
    }
    %c1_i32 = arith.constant 1 : i32
    %52 = arith.cmpi eq, %arg2, %c1_i32 : i32
    %53 = arith.extui %52 : i1 to i32
    %c0_i32_25 = arith.constant 0 : i32
    %54 = arith.cmpi ne, %53, %c0_i32_25 : i32
    scf.if %54 {
      %c0_26 = arith.constant 0 : index
      %c0_27 = arith.constant 0 : index
      %55 = vector.load %arg16[%c0_26, %c0_27] : memref<128x256xf32, #tpu.memory_space<vmem>>, vector<128x256xf32>
      %c0_28 = arith.constant 0 : index
      %c0_29 = arith.constant 0 : index
      %56 = vector.load %arg11[%c0_28, %c0_29] : memref<1x256xf32, #tpu.memory_space<vmem>>, vector<1x256xf32>
      %57 = vector.broadcast %56 : vector<1x256xf32> to vector<128x256xf32>
      %58 = arith.addf %55, %57 : vector<128x256xf32>
      %c0_30 = arith.constant 0 : index
      %c0_31 = arith.constant 0 : index
      %c0_32 = arith.constant 0 : index
      %59 = vector.load %arg12[%c0_30, %c0_31, %c0_32] : memref<1x128x256xf32, #tpu.memory_space<vmem>>, vector<1x128x256xf32>
      %60 = vector.shape_cast %59 : vector<1x128x256xf32> to vector<128x256xf32>
      %61 = vector.shape_cast %58 : vector<128x256xf32> to vector<1x128x256xf32>
      tpu.vector_store %arg12[%c0_30, %c0_31, %c0_32], %61 {strides = array<i32>} : memref<1x128x256xf32, #tpu.memory_space<vmem>>, vector<1x128x256xf32>,
    } else {
    }
    return
  }
  func.func @transform_0(%arg0: i32, %arg1: i32, %arg2: i32) -> (i32, i32, i32) {
    %c0_i32 = arith.constant 0 : i32
    %c0_i32_0 = arith.constant 0 : i32
    %c0_i32_1 = arith.constant 0 : i32
    return %arg0, %c0_i32, %c0_i32_0 : i32, i32, i32
  }
  func.func @transform_1(%arg0: i32, %arg1: i32, %arg2: i32) -> (i32, i32, i32) {
    %c0_i32 = arith.constant 0 : i32
    %c0_i32_0 = arith.constant 0 : i32
    %c0_i32_1 = arith.constant 0 : i32
    %c0_i32_2 = arith.constant 0 : i32
    return %c0_i32, %c0_i32_0, %c0_i32_1 : i32, i32, i32
  }
  func.func @transform_2(%arg0: i32, %arg1: i32, %arg2: i32) -> (i32, i32, i32) {
    %c0_i32 = arith.constant 0 : i32
    %c0_i32_0 = arith.constant 0 : i32
    %c0_i32_1 = arith.constant 0 : i32
    %c0_i32_2 = arith.constant 0 : i32
    return %c0_i32, %c0_i32_0, %c0_i32_1 : i32, i32, i32
  }
  func.func @transform_3(%arg0: i32, %arg1: i32, %arg2: i32) -> (i32, i32, i32) {
    %c0_i32 = arith.constant 0 : i32
    %c0_i32_0 = arith.constant 0 : i32
    %c0_i32_1 = arith.constant 0 : i32
    %c0_i32_2 = arith.constant 0 : i32
    return %c0_i32, %c0_i32_0, %c0_i32_1 : i32, i32, i32
  }
  func.func @transform_4(%arg0: i32, %arg1: i32, %arg2: i32) -> (i32, i32, i32) {
    %c0_i32 = arith.constant 0 : i32
    %c0_i32_0 = arith.constant 0 : i32
    %c0_i32_1 = arith.constant 0 : i32
    %c0_i32_2 = arith.constant 0 : i32
    return %c0_i32, %c0_i32_0, %c0_i32_1 : i32, i32, i32
  }
  func.func @transform_5(%arg0: i32, %arg1: i32, %arg2: i32) -> (i32, i32, i32) {
    %c0_i32 = arith.constant 0 : i32
    %c0_i32_0 = arith.constant 0 : i32
    %c0_i32_1 = arith.constant 0 : i32
    %c0_i32_2 = arith.constant 0 : i32
    return %c0_i32, %c0_i32_0, %c0_i32_1 : i32, i32, i32
  }
  func.func @transform_6(%arg0: i32, %arg1: i32, %arg2: i32) -> (i32, i32, i32) {
    %c0_i32 = arith.constant 0 : i32
    %c0_i32_0 = arith.constant 0 : i32
    %c0_i32_1 = arith.constant 0 : i32
    %c0_i32_2 = arith.constant 0 : i32
    return %c0_i32, %c0_i32_0, %c0_i32_1 : i32, i32, i32
  }
  func.func @transform_7(%arg0: i32, %arg1: i32, %arg2: i32) -> (i32, i32, i32) {
    %c0_i32 = arith.constant 0 : i32
    %c0_i32_0 = arith.constant 0 : i32
    %c0_i32_1 = arith.constant 0 : i32
    %c0_i32_2 = arith.constant 0 : i32
    return %c0_i32, %c0_i32_0, %c0_i32_1 : i32, i32, i32
  }
  func.func @transform_8(%arg0: i32, %arg1: i32, %arg2: i32) -> (i32, i32) {
    %c0_i32 = arith.constant 0 : i32
    %c0_i32_0 = arith.constant 0 : i32
    %c0_i32_1 = arith.constant 0 : i32
    return %c0_i32, %c0_i32_0 : i32, i32
  }
  func.func @transform_9(%arg0: i32, %arg1: i32, %arg2: i32) -> (i32, i32, i32) {
    %c0_i32 = arith.constant 0 : i32
    %c0_i32_0 = arith.constant 0 : i32
    return %arg0, %arg1, %c0_i32 : i32, i32, i32
  }
  func.func @transform_10(%arg0: i32, %arg1: i32, %arg2: i32) -> (i32, i32, i32, i32) {
    %c0_i32 = arith.constant 0 : i32
    %c0_i32_0 = arith.constant 0 : i32
    return %arg0, %arg2, %arg1, %c0_i32 : i32, i32, i32, i32
  }
}

</mosaic_0001>

<llo_original>
// kernel: tpu_custom_call.1
$region0: #{tpu_custom_call.1}
  #allocation0 [shape = 'u32[]', space=smem, size = 0x4, offset = 0x4, fixed_abs, tag = 'smem constant byte address 0x4 - core index']
  #allocation1 [shape = 'u32[72,128]{1,0:T(1,128)}', space=vmem, size = 0x9000, scoped, tag = 'internal scratch']
  #allocation2 [shape = 'bf16[2,256,128]{2,1,0:T(8,128)(2,1)}', space=vmem, size = 0x20000, scoped, tag = 'scratch operand']
  #allocation3 [shape = 'bf16[2,256,128]{2,1,0:T(8,128)(2,1)}', space=vmem, size = 0x20000, scoped, tag = 'scratch operand']
  #allocation4 [shape = 'f32[128,256]{1,0:T(8,128)}', space=vmem, size = 0x20000, scoped, tag = 'scratch operand']
  %s0 = inlined_call_operand.hbm [shape: f32[2,256,256], index: 0, kind: input, shape index: {}]
  %s1 = inlined_call_operand.hbm [shape: bf16[2,256,128], index: 1, kind: input, shape index: {}]
  %s2 = inlined_call_operand.hbm [shape: f32[2,1,128], index: 2, kind: input, shape index: {}]
  %s3 = inlined_call_operand.hbm [shape: bf16[2,256,128], index: 3, kind: input, shape index: {}]
  %s4 = inlined_call_operand.vmem [shape: f32[2,1,128], index: 4, kind: input, shape index: {}]
  %s5 = inlined_call_operand.hbm [shape: bf16[2,256,128], index: 5, kind: input, shape index: {}]
  %s6 = inlined_call_operand.vmem [shape: f32[2,1,128], index: 6, kind: input, shape index: {}]
  %s7 = inlined_call_operand.hbm [shape: bf16[2,128,256], index: 7, kind: input, shape index: {}]
  %s8 = inlined_call_operand.vmem [shape: f32[1,256], index: 8, kind: input, shape index: {}]
  %s9 = inlined_call_operand.hbm [shape: f32[2,256,256], index: 9, kind: output, shape index: {0}]
  %s10 = inlined_call_operand.hbm [shape: f32[2,2,256,256], index: 10, kind: output, shape index: {1}]
  %11 = xla_tuple %s9, %s10
  %s12 = sld [smem:[#allocation0]]
  $region117: #{tpu_custom_call.1} parent=0
    _
  %s14 = ssub.s32 1, %s12
  %s15 = scalar_select 0, %s14, %s12
  $region1: #{tpu_custom_call.1} parent=0
    #allocation5 [shape = 'u8[524288]{0}', space=vmem, size = 0x80000, scoped, tag = 'input window, operand 0']
    #allocation6 [shape = 's32[2]{0}', space=sflag, size = 0x8, scoped, tag = 'scoped memory for tpu_custom_call.1']
    #allocation7 [shape = 's32[2]{0}', space=sflag, size = 0x8, scoped, tag = 'scoped memory for tpu_custom_call.1']
    #allocation8 [shape = 'u8[131072]{0}', space=vmem, size = 0x20000, scoped, tag = 'input window, operand 1, single buffered']
    #allocation9 [shape = 's32[1]{0}', space=sflag, size = 0x4, scoped, tag = 'scoped memory for tpu_custom_call.1']
    #allocation10 [shape = 'u8[1024]{0}', space=vmem, size = 0x400, scoped, tag = 'input window, operand 2, single buffered']
    #allocation11 [shape = 'u8[131072]{0}', space=vmem, size = 0x20000, scoped, tag = 'input window, operand 3, single buffered']
    #allocation12 [shape = 's32[1]{0}', space=sflag, size = 0x4, scoped, tag = 'scoped memory for tpu_custom_call.1']
    #allocation13 [shape = 'u8[131072]{0}', space=vmem, size = 0x20000, scoped, tag = 'input window, operand 5, single buffered']
    #allocation14 [shape = 'u8[131072]{0}', space=vmem, size = 0x20000, scoped, tag = 'input window, operand 7, single buffered']
    #allocation15 [shape = 's32[1]{0}', space=sflag, size = 0x4, scoped, tag = 'scoped memory for tpu_custom_call.1']
    #allocation16 [shape = 'u8[262144]{0}', space=vmem, size = 0x40000, scoped, tag = 'output window, operand 0']
    #allocation17 [shape = 'u8[262144]{0}', space=vmem, size = 0x40000, scoped, tag = 'output window, operand 1']
    #allocation18 [shape = 's32[2]{0}', space=sflag, size = 0x8, scoped, tag = 'scoped memory for tpu_custom_call.1']
    %16 = vsyncpa [#allocation6], 0
    %s17 = scalar_lea.sflag [#allocation6], 1
    %18 = vsyncpa %s17, 0
    %19 = vsyncpa [#allocation9], 0
    %20 = vsyncpa [#allocation12], 0
    %21 = vsyncpa [#allocation15], 0
    %22 = vsyncpa [#allocation7], 0
    %s23 = scalar_lea.sflag [#allocation7], 1
    %24 = vsyncpa %s23, 0
    %25 = vsyncpa [#allocation18], 0
    %s26 = scalar_lea.sflag [#allocation18], 1
    %27 = vsyncpa %s26, 0
    loop: start=0, step=1, limit=10
    $region2: #{tpu_custom_call.1} parent=1 // loop_pre_header
      _
    $region3: #{tpu_custom_call.1} parent=1 // loop_header
      %s29 = sphi 0, %s33
      %p30 = scmp.ge.s32.totalorder %s29, 10
      %s36 = sphi 0, %s55
      %s37 = sphi 0, %s51
      %s38 = sphi 0, %s47
      %s39 = sphi 0, %s36
      %s40 = sphi 0, %s37
      %s41 = sphi 0, %s38
      %s42 = sphi 0, %s39
      %s43 = sphi 0, %s40
      %s44 = sphi 0, %s41
      %s58 = sphi 0, %s60
      %s61 = sphi 0, %s58
      %s62 = sphi 0, %s61
      %s78 = sphi 0, %s62
      %s82 = sphi 0, %s82
      %s84 = sphi 0, %s82
      %s85 = sphi 0, %s84
      %s99 = sphi 0, %s85
      %s103 = sphi 0, %s103
      %s105 = sphi 0, %s103
      %s106 = sphi 0, %s105
      %s120 = sphi 0, %s106
      %s124 = sphi 0, %s124
      %s126 = sphi 0, %s124
      %s127 = sphi 0, %s126
      %s141 = sphi 0, %s127
      %s145 = sphi 0, %s145
      %s147 = sphi 0, %s145
      %s148 = sphi 0, %s147
      %s162 = sphi 0, %s148
      %s166 = sphi 0, %s166
      %s168 = sphi 0, %s166
      %s169 = sphi 0, %s168
      %s183 = sphi 0, %s169
      %s187 = sphi 0, %s187
      %s189 = sphi 0, %s187
      %s190 = sphi 0, %s189
      %s204 = sphi 0, %s190
      %s208 = sphi 0, %s208
      %s210 = sphi 0, %s208
      %s211 = sphi 0, %s210
      %s225 = sphi 0, %s211
      %s229 = sphi 0, %s229
      %s231 = sphi 0, %s229
      %s232 = sphi 0, %s231
      %s246 = sphi 0, %s232
      %s254 = sphi 0, %s256
      %s257 = sphi 0, %s254
      %s258 = sphi 0, %s257
      %s274 = sphi 0, %s258
      %s284 = sphi 0, %s286
      %s287 = sphi 0, %s284
      %s288 = sphi 0, %s287
      %s304 = sphi 0, %s288
    $region4: #{tpu_custom_call.1} parent=1 // loop_header_branch
      %32 = sbr.rel (%p30) target = $region8
    $region5: #{tpu_custom_call.1} parent=1 // loop_body
      %s34 = ssub.s32 %s29, 1
      %s35 = ssub.s32 %s29, 2
      %s45 = sadd.s32 1, %s38
      %p46 = scmp.ge.s32.totalorder %s45, 2
      %s47 = scalar_select %p46, 0, %s45
      %s48 = sadd.s32 1, %s37
      %s49 = scalar_select %p46, %s48, %s37
      %p50 = scmp.ge.s32.totalorder %s49, 2
      %s51 = scalar_select %p50, 0, %s49
      %s52 = sadd.s32 1, %s36
      %s53 = scalar_select %p50, %s52, %s36
      %p54 = scmp.ge.s32.totalorder %s53, 2
      %s55 = scalar_select %p54, 0, %s53
      %s56 = ssub.s32 %s36, %s55
      %p57 = scmp.eq.s32.totalorder %s56, 0
      %s59 = sadd.s32 %s58, 1
      %s60 = scalar_select %p57, %s58, %s59
      %p63 = pneg %p57
      %p64 = scmp.eq.s32.totalorder %s29, 7
      %p65 = por %p63, %p64
      %p66 = scmp.ne.s32.totalorder %s58, %s61
      %p67 = scmp.eq.s32.totalorder %s29, 0
      %p68 = por %p66, %p67
      %p69 = scmp.ne.s32.totalorder %s58, %s61
      %p70 = scmp.eq.s32.totalorder %s34, 7
      %p71 = por %p69, %p70
      %p72 = scmp.ne.s32.totalorder %s61, %s62
      %p73 = scmp.eq.s32.totalorder %s34, 0
      %p74 = por %p72, %p73
      %p75 = scmp.ne.s32.totalorder %s61, %s62
      %p76 = scmp.eq.s32.totalorder %s35, 7
      %p77 = por %p75, %p76
      %p79 = scmp.ne.s32.totalorder %s62, %s78
      %p80 = scmp.eq.s32.totalorder %s35, 0
      %p81 = por %p79, %p80
      %s83 = sadd.s32 %s82, 1
      %p86 = scmp.eq.s32.totalorder %s29, 7
      %p87 = scmp.ne.s32.totalorder %s82, %s84
      %p88 = scmp.eq.s32.totalorder %s29, 0
      %p89 = por %p87, %p88
      %p90 = scmp.ne.s32.totalorder %s82, %s84
      %p91 = scmp.eq.s32.totalorder %s34, 7
      %p92 = por %p90, %p91
      %p93 = scmp.ne.s32.totalorder %s84, %s85
      %p94 = scmp.eq.s32.totalorder %s34, 0
      %p95 = por %p93, %p94
      %p96 = scmp.ne.s32.totalorder %s84, %s85
      %p97 = scmp.eq.s32.totalorder %s35, 7
      %p98 = por %p96, %p97
      %p100 = scmp.ne.s32.totalorder %s85, %s99
      %p101 = scmp.eq.s32.totalorder %s35, 0
      %p102 = por %p100, %p101
      %s104 = sadd.s32 %s103, 1
      %p107 = scmp.eq.s32.totalorder %s29, 7
      %p108 = scmp.ne.s32.totalorder %s103, %s105
      %p109 = scmp.eq.s32.totalorder %s29, 0
      %p110 = por %p108, %p109
      %p111 = scmp.ne.s32.totalorder %s103, %s105
      %p112 = scmp.eq.s32.totalorder %s34, 7
      %p113 = por %p111, %p112
      %p114 = scmp.ne.s32.totalorder %s105, %s106
      %p115 = scmp.eq.s32.totalorder %s34, 0
      %p116 = por %p114, %p115
      %p117 = scmp.ne.s32.totalorder %s105, %s106
      %p118 = scmp.eq.s32.totalorder %s35, 7
      %p119 = por %p117, %p118
      %p121 = scmp.ne.s32.totalorder %s106, %s120
      %p122 = scmp.eq.s32.totalorder %s35, 0
      %p123 = por %p121, %p122
      %s125 = sadd.s32 %s124, 1
      %p128 = scmp.eq.s32.totalorder %s29, 7
      %p129 = scmp.ne.s32.totalorder %s124, %s126
      %p130 = scmp.eq.s32.totalorder %s29, 0
      %p131 = por %p129, %p130
      %p132 = scmp.ne.s32.totalorder %s124, %s126
      %p133 = scmp.eq.s32.totalorder %s34, 7
      %p134 = por %p132, %p133
      %p135 = scmp.ne.s32.totalorder %s126, %s127
      %p136 = scmp.eq.s32.totalorder %s34, 0
      %p137 = por %p135, %p136
      %p138 = scmp.ne.s32.totalorder %s126, %s127
      %p139 = scmp.eq.s32.totalorder %s35, 7
      %p140 = por %p138, %p139
      %p142 = scmp.ne.s32.totalorder %s127, %s141
      %p143 = scmp.eq.s32.totalorder %s35, 0
      %p144 = por %p142, %p143
      %s146 = sadd.s32 %s145, 1
      %p149 = scmp.eq.s32.totalorder %s29, 7
      %p150 = scmp.ne.s32.totalorder %s145, %s147
      %p151 = scmp.eq.s32.totalorder %s29, 0
      %p152 = por %p150, %p151
      %p153 = scmp.ne.s32.totalorder %s145, %s147
      %p154 = scmp.eq.s32.totalorder %s34, 7
      %p155 = por %p153, %p154
      %p156 = scmp.ne.s32.totalorder %s147, %s148
      %p157 = scmp.eq.s32.totalorder %s34, 0
      %p158 = por %p156, %p157
      %p159 = scmp.ne.s32.totalorder %s147, %s148
      %p160 = scmp.eq.s32.totalorder %s35, 7
      %p161 = por %p159, %p160
      %p163 = scmp.ne.s32.totalorder %s148, %s162
      %p164 = scmp.eq.s32.totalorder %s35, 0
      %p165 = por %p163, %p164
      %s167 = sadd.s32 %s166, 1
      %p170 = scmp.eq.s32.totalorder %s29, 7
      %p171 = scmp.ne.s32.totalorder %s166, %s168
      %p172 = scmp.eq.s32.totalorder %s29, 0
      %p173 = por %p171, %p172
      %p174 = scmp.ne.s32.totalorder %s166, %s168
      %p175 = scmp.eq.s32.totalorder %s34, 7
      %p176 = por %p174, %p175
      %p177 = scmp.ne.s32.totalorder %s168, %s169
      %p178 = scmp.eq.s32.totalorder %s34, 0
      %p179 = por %p177, %p178
      %p180 = scmp.ne.s32.totalorder %s168, %s169
      %p181 = scmp.eq.s32.totalorder %s35, 7
      %p182 = por %p180, %p181
      %p184 = scmp.ne.s32.totalorder %s169, %s183
      %p185 = scmp.eq.s32.totalorder %s35, 0
      %p186 = por %p184, %p185
      %s188 = sadd.s32 %s187, 1
      %p191 = scmp.eq.s32.totalorder %s29, 7
      %p192 = scmp.ne.s32.totalorder %s187, %s189
      %p193 = scmp.eq.s32.totalorder %s29, 0
      %p194 = por %p192, %p193
      %p195 = scmp.ne.s32.totalorder %s187, %s189
      %p196 = scmp.eq.s32.totalorder %s34, 7
      %p197 = por %p195, %p196
      %p198 = scmp.ne.s32.totalorder %s189, %s190
      %p199 = scmp.eq.s32.totalorder %s34, 0
      %p200 = por %p198, %p199
      %p201 = scmp.ne.s32.totalorder %s189, %s190
      %p202 = scmp.eq.s32.totalorder %s35, 7
      %p203 = por %p201, %p202
      %p205 = scmp.ne.s32.totalorder %s190, %s204
      %p206 = scmp.eq.s32.totalorder %s35, 0
      %p207 = por %p205, %p206
      %s209 = sadd.s32 %s208, 1
      %p212 = scmp.eq.s32.totalorder %s29, 7
      %p213 = scmp.ne.s32.totalorder %s208, %s210
      %p214 = scmp.eq.s32.totalorder %s29, 0
      %p215 = por %p213, %p214
      %p216 = scmp.ne.s32.totalorder %s208, %s210
      %p217 = scmp.eq.s32.totalorder %s34, 7
      %p218 = por %p216, %p217
      %p219 = scmp.ne.s32.totalorder %s210, %s211
      %p220 = scmp.eq.s32.totalorder %s34, 0
      %p221 = por %p219, %p220
      %p222 = scmp.ne.s32.totalorder %s210, %s211
      %p223 = scmp.eq.s32.totalorder %s35, 7
      %p224 = por %p222, %p223
      %p226 = scmp.ne.s32.totalorder %s211, %s225
      %p227 = scmp.eq.s32.totalorder %s35, 0
      %p228 = por %p226, %p227
      %s230 = sadd.s32 %s229, 1
      %p233 = scmp.eq.s32.totalorder %s29, 7
      %p234 = scmp.ne.s32.totalorder %s229, %s231
      %p235 = scmp.eq.s32.totalorder %s29, 0
      %p236 = por %p234, %p235
      %p237 = scmp.ne.s32.totalorder %s229, %s231
      %p238 = scmp.eq.s32.totalorder %s34, 7
      %p239 = por %p237, %p238
      %p240 = scmp.ne.s32.totalorder %s231, %s232
      %p241 = scmp.eq.s32.totalorder %s34, 0
      %p242 = por %p240, %p241
      %p243 = scmp.ne.s32.totalorder %s231, %s232
      %p244 = scmp.eq.s32.totalorder %s35, 7
      %p245 = por %p243, %p244
      %p247 = scmp.ne.s32.totalorder %s232, %s246
      %p248 = scmp.eq.s32.totalorder %s35, 0
      %p249 = por %p247, %p248
      %s250 = ssub.s32 %s36, %s55
      %s251 = ssub.s32 %s37, %s51
      %s252 = sor.u32 %s250, %s251
      %p253 = scmp.eq.s32.totalorder %s252, 0
      %s255 = sadd.s32 %s254, 1
      %s256 = scalar_select %p253, %s254, %s255
      %p259 = pneg %p253
      %p260 = scmp.eq.s32.totalorder %s29, 7
      %p261 = por %p259, %p260
      %p262 = scmp.ne.s32.totalorder %s254, %s257
      %p263 = scmp.eq.s32.totalorder %s29, 0
      %p264 = por %p262, %p263
      %p265 = scmp.ne.s32.totalorder %s254, %s257
      %p266 = scmp.eq.s32.totalorder %s34, 7
      %p267 = por %p265, %p266
      %p268 = scmp.ne.s32.totalorder %s257, %s258
      %p269 = scmp.eq.s32.totalorder %s34, 0
      %p270 = por %p268, %p269
      %p271 = scmp.ne.s32.totalorder %s257, %s258
      %p272 = scmp.eq.s32.totalorder %s35, 7
      %p273 = por %p271, %p272
      %p275 = scmp.ne.s32.totalorder %s258, %s274
      %p276 = scmp.eq.s32.totalorder %s35, 0
      %p277 = por %p275, %p276
      %s278 = ssub.s32 %s36, %s55
      %s279 = ssub.s32 %s38, %s47
      %s280 = sor.u32 %s278, %s279
      %s281 = ssub.s32 %s37, %s51
      %s282 = sor.u32 %s280, %s281
      %p283 = scmp.eq.s32.totalorder %s282, 0
      %s285 = sadd.s32 %s284, 1
      %s286 = scalar_select %p283, %s284, %s285
      %p289 = pneg %p283
      %p290 = scmp.eq.s32.totalorder %s29, 7
      %p291 = por %p289, %p290
      %p292 = scmp.ne.s32.totalorder %s284, %s287
      %p293 = scmp.eq.s32.totalorder %s29, 0
      %p294 = por %p292, %p293
      %p295 = scmp.ne.s32.totalorder %s284, %s287
      %p296 = scmp.eq.s32.totalorder %s34, 7
      %p297 = por %p295, %p296
      %p298 = scmp.ne.s32.totalorder %s287, %s288
      %p299 = scmp.eq.s32.totalorder %s34, 0
      %p300 = por %p298, %p299
      %p301 = scmp.ne.s32.totalorder %s287, %s288
      %p302 = scmp.eq.s32.totalorder %s35, 7
      %p303 = por %p301, %p302
      %p305 = scmp.ne.s32.totalorder %s288, %s304
      %p306 = scmp.eq.s32.totalorder %s35, 0
      %p307 = por %p305, %p306
      %p308 = scmp.le.s32.totalorder 1, %s29
      %p309 = scmp.lt.s32.totalorder %s29, 9
      %p310 = pnand %p308, %p309
      %p311 = pneg %p310
      // Predicated region
      $region9: #{tpu_custom_call.1} parent=5 // pred_check
        _
      $region10: #{tpu_custom_call.1} parent=5 // pred_check_branch
        %313 = sbr.rel (%p310) target = $region12
      $region11: #{tpu_custom_call.1} parent=5 // pred_region
        %s314 = ssub.s32 %s29, 1
        // Predicated region
        $region13: #{tpu_custom_call.1} parent=11 // pred_check
          %p315 = pneg %p95
        $region14: #{tpu_custom_call.1} parent=11 // pred_check_branch
          %317 = sbr.rel (%p315) target = $region16
        $region15: #{tpu_custom_call.1} parent=11 // pred_region
          %319 = vsyncadd [#allocation9], 0
          %s320 = sshll.u32 %s1, 4
          %s321 = int_to_ptr.hbm [resolvable:$true] %s320
          %s322 = sshll.u32 [#allocation8], 4
          %s323 = int_to_ptr.vmem [resolvable:$true] %s322
          %328 = dma.hbm_to_vmem [thread:$0]  %s321, 4096, %s323, [#allocation9], 64, 64, 4
        $region16: #{tpu_custom_call.1} parent=11 // pred_fallthru
          _
        // Predicated region
        $region17: #{tpu_custom_call.1} parent=11 // pred_check
          %p329 = pneg %p116
        $region18: #{tpu_custom_call.1} parent=11 // pred_check_branch
          %331 = sbr.rel (%p329) target = $region20
        $region19: #{tpu_custom_call.1} parent=11 // pred_region
          %333 = vsyncadd [#allocation9], 0
          %s334 = sshll.u32 %s2, 4
          %s335 = int_to_ptr.hbm [resolvable:$true] %s334
          %s336 = sshll.u32 [#allocation10], 4
          %s337 = int_to_ptr.vmem [resolvable:$true] %s336
          %342 = dma.hbm_to_vmem [thread:$0]  %s335, 32, %s337, [#allocation9], 16, 16, 1
        $region20: #{tpu_custom_call.1} parent=11 // pred_fallthru
          _
        // Predicated region
        $region21: #{tpu_custom_call.1} parent=11 // pred_check
          %p343 = pneg %p137
        $region22: #{tpu_custom_call.1} parent=11 // pred_check_branch
          %345 = sbr.rel (%p343) target = $region24
        $region23: #{tpu_custom_call.1} parent=11 // pred_region
          %347 = vsyncadd [#allocation12], 0
          %s348 = sshll.u32 %s3, 4
          %s349 = int_to_ptr.hbm [resolvable:$true] %s348
          %s350 = sshll.u32 [#allocation11], 4
          %s351 = int_to_ptr.vmem [resolvable:$true] %s350
          %356 = dma.hbm_to_vmem [thread:$0]  %s349, 4096, %s351, [#allocation12], 64, 64, 4
        $region24: #{tpu_custom_call.1} parent=11 // pred_fallthru
          _
        // Predicated region
        $region25: #{tpu_custom_call.1} parent=11 // pred_check
          %p357 = pneg %p158
        $region26: #{tpu_custom_call.1} parent=11 // pred_check_branch
          %359 = sbr.rel (%p357) target = $region28
        $region27: #{tpu_custom_call.1} parent=11 // pred_region
          _
        $region28: #{tpu_custom_call.1} parent=11 // pred_fallthru
          _
        // Predicated region
        $region29: #{tpu_custom_call.1} parent=11 // pred_check
          %p360 = pneg %p179
        $region30: #{tpu_custom_call.1} parent=11 // pred_check_branch
          %362 = sbr.rel (%p360) target = $region32
        $region31: #{tpu_custom_call.1} parent=11 // pred_region
          %364 = vsyncadd [#allocation12], 0
          %s365 = sshll.u32 %s5, 4
          %s366 = int_to_ptr.hbm [resolvable:$true] %s365
          %s367 = sshll.u32 [#allocation13], 4
          %s368 = int_to_ptr.vmem [resolvable:$true] %s367
          %373 = dma.hbm_to_vmem [thread:$0]  %s366, 4096, %s368, [#allocation12], 64, 64, 4
        $region32: #{tpu_custom_call.1} parent=11 // pred_fallthru
          _
        // Predicated region
        $region33: #{tpu_custom_call.1} parent=11 // pred_check
          %p374 = pneg %p200
        $region34: #{tpu_custom_call.1} parent=11 // pred_check_branch
          %376 = sbr.rel (%p374) target = $region36
        $region35: #{tpu_custom_call.1} parent=11 // pred_region
          _
        $region36: #{tpu_custom_call.1} parent=11 // pred_fallthru
          _
        // Predicated region
        $region37: #{tpu_custom_call.1} parent=11 // pred_check
          %p377 = pneg %p221
        $region38: #{tpu_custom_call.1} parent=11 // pred_check_branch
          %379 = sbr.rel (%p377) target = $region40
        $region39: #{tpu_custom_call.1} parent=11 // pred_region
          %381 = vsyncadd [#allocation15], 0
          %s382 = sshll.u32 %s7, 4
          %s383 = int_to_ptr.hbm [resolvable:$true] %s382
          %s384 = sshll.u32 [#allocation14], 4
          %s385 = int_to_ptr.vmem [resolvable:$true] %s384
          %390 = dma.hbm_to_vmem [thread:$0]  %s383, 4096, %s385, [#allocation15], 128, 128, 8
        $region40: #{tpu_custom_call.1} parent=11 // pred_fallthru
          _
        // Predicated region
        $region41: #{tpu_custom_call.1} parent=11 // pred_check
          %p391 = pneg %p242
        $region42: #{tpu_custom_call.1} parent=11 // pred_check_branch
          %393 = sbr.rel (%p391) target = $region44
        $region43: #{tpu_custom_call.1} parent=11 // pred_region
          _
        $region44: #{tpu_custom_call.1} parent=11 // pred_fallthru
          _
      $region12: #{tpu_custom_call.1} parent=5 // pred_fallthru
        _
      %p394 = scmp.lt.s32.totalorder %s29, 8
      // Predicated region
      $region45: #{tpu_custom_call.1} parent=5 // pred_check
        %p395 = pneg %p394
      $region46: #{tpu_custom_call.1} parent=5 // pred_check_branch
        %397 = sbr.rel (%p395) target = $region48
      $region47: #{tpu_custom_call.1} parent=5 // pred_region
        // Predicated region
        $region49: #{tpu_custom_call.1} parent=47 // pred_check
          %p398 = pneg %p68
        $region50: #{tpu_custom_call.1} parent=47 // pred_check_branch
          %400 = sbr.rel (%p398) target = $region52
        $region51: #{tpu_custom_call.1} parent=47 // pred_region
          %s401 = sand.u32 %s58, 1
          %s402 = scalar_lea.sflag [#allocation6], %s401
          %s403 = sand.u32 %s58, 1
          %s404 = smul.addr %s403, 512
          %s405 = scalar_lea.vmem [#allocation5], %s404
          %407 = vsyncadd %s402, 0
          %s408 = smul.addr %s36, 64
          %s409 = smul.addr %s408, 8
          %s410 = scalar_lea.hbm %s0, %s409
          %s411 = sshll.u32 %s410, 4
          %s412 = int_to_ptr.hbm [resolvable:$true] %s411
          %s413 = sshll.u32 %s405, 4
          %s414 = int_to_ptr.vmem [resolvable:$true] %s413
          %419 = dma.hbm_to_vmem [thread:$0]  %s412, 8192, %s414, %s402, 256, 256, 16
        $region52: #{tpu_custom_call.1} parent=47 // pred_fallthru
          _
      $region48: #{tpu_custom_call.1} parent=5 // pred_fallthru
        _
      %p420 = scmp.le.s32.totalorder 1, %s29
      %p421 = scmp.lt.s32.totalorder %s29, 9
      %p422 = pnand %p420, %p421
      %p423 = pneg %p422
      // Predicated region
      $region53: #{tpu_custom_call.1} parent=5 // pred_check
        _
      $region54: #{tpu_custom_call.1} parent=5 // pred_check_branch
        %425 = sbr.rel (%p422) target = $region56
      $region55: #{tpu_custom_call.1} parent=5 // pred_region
        %s426 = ssub.s32 %s29, 1
        %s427 = sand.u32 %s61, 1
        %s428 = scalar_lea.sflag [#allocation6], %s427
        %s429 = sand.u32 %s61, 1
        %s430 = smul.addr %s429, 512
        %s431 = scalar_lea.vmem [#allocation5], %s430
        // Predicated region
        $region57: #{tpu_custom_call.1} parent=55 // pred_check
          %p432 = pneg %p74
        $region58: #{tpu_custom_call.1} parent=55 // pred_check_branch
          %434 = sbr.rel (%p432) target = $region60
        $region59: #{tpu_custom_call.1} parent=55 // pred_region
          %436 = dma.done %s428, 8192
        $region60: #{tpu_custom_call.1} parent=55 // pred_fallthru
          _
        // Predicated region
        $region61: #{tpu_custom_call.1} parent=55 // pred_check
          %p437 = pneg %p95
        $region62: #{tpu_custom_call.1} parent=55 // pred_check_branch
          %439 = sbr.rel (%p437) target = $region64
        $region63: #{tpu_custom_call.1} parent=55 // pred_region
          %441 = dma.done [#allocation9], 4096
        $region64: #{tpu_custom_call.1} parent=55 // pred_fallthru
          _
        // Predicated region
        $region65: #{tpu_custom_call.1} parent=55 // pred_check
          %p442 = pneg %p116
        $region66: #{tpu_custom_call.1} parent=55 // pred_check_branch
          %444 = sbr.rel (%p442) target = $region68
        $region67: #{tpu_custom_call.1} parent=55 // pred_region
          %446 = dma.done [#allocation9], 32
        $region68: #{tpu_custom_call.1} parent=55 // pred_fallthru
          _
        // Predicated region
        $region69: #{tpu_custom_call.1} parent=55 // pred_check
          %p447 = pneg %p137
        $region70: #{tpu_custom_call.1} parent=55 // pred_check_branch
          %449 = sbr.rel (%p447) target = $region72
        $region71: #{tpu_custom_call.1} parent=55 // pred_region
          %451 = dma.done [#allocation12], 4096
        $region72: #{tpu_custom_call.1} parent=55 // pred_fallthru
          _
        // Predicated region
        $region73: #{tpu_custom_call.1} parent=55 // pred_check
          %p452 = pneg %p179
        $region74: #{tpu_custom_call.1} parent=55 // pred_check_branch
          %454 = sbr.rel (%p452) target = $region76
        $region75: #{tpu_custom_call.1} parent=55 // pred_region
          %456 = dma.done [#allocation12], 4096
        $region76: #{tpu_custom_call.1} parent=55 // pred_fallthru
          _
        // Predicated region
        $region77: #{tpu_custom_call.1} parent=55 // pred_check
          %p457 = pneg %p221
        $region78: #{tpu_custom_call.1} parent=55 // pred_check_branch
          %459 = sbr.rel (%p457) target = $region80
        $region79: #{tpu_custom_call.1} parent=55 // pred_region
          %461 = dma.done [#allocation15], 4096
        $region80: #{tpu_custom_call.1} parent=55 // pred_fallthru
          _
        %s462 = sand.u32 %s61, 1
        %s463 = scalar_lea.sflag [#allocation6], %s462
        %s464 = sand.u32 %s61, 1
        %s465 = smul.addr %s464, 512
        %s466 = scalar_lea.vmem [#allocation5], %s465
        %p467 = pneg %p74
        %p468 = pneg %p71
        %p469 = pneg %p95
        %p470 = pneg %p92
        %p471 = pneg %p116
        %p472 = pneg %p113
        %p473 = pneg %p137
        %p474 = pneg %p134
        %p475 = pneg %p158
        %p476 = pneg %p155
        %p477 = pneg %p179
        %p478 = pneg %p176
        %p479 = pneg %p200
        %p480 = pneg %p197
        %p481 = pneg %p221
        %p482 = pneg %p218
        %p483 = pneg %p242
        %p484 = pneg %p239
        %p485 = pneg %p270
        %p486 = pneg %p267
        %s487 = sand.u32 %s257, 1
        %s488 = scalar_lea.sflag [#allocation7], %s487
        %s489 = sand.u32 %s257, 1
        %s490 = smul.addr %s489, 256
        %s491 = scalar_lea.vmem [#allocation16], %s490
        %p492 = pneg %p300
        %p493 = pneg %p297
        %s494 = sand.u32 %s287, 1
        %s495 = scalar_lea.sflag [#allocation18], %s494
        %s496 = sand.u32 %s287, 1
        %s497 = smul.addr %s496, 256
        %s498 = scalar_lea.vmem [#allocation17], %s497
        %s499 = smul.u32 16, %s40
        %s500 = smul.u32 16, %s40
        %p501 = scmp.eq.s32.totalorder %s40, 0
        // Predicated region
        $region81: #{tpu_custom_call.1} parent=55 // pred_check
          %p502 = pneg %p501
        $region82: #{tpu_custom_call.1} parent=55 // pred_check_branch
          %504 = sbr.rel (%p502) target = $region84
        $region83: #{tpu_custom_call.1} parent=55 // pred_region
          %v505 = vld [vmem:[%s431] sm:$0xff]
          %v506 = vld [vmem:[%s431 + $0x8] sm:$0xff]
          %v507 = vld [vmem:[%s431 + $0x10] sm:$0xff]
          %v508 = vld [vmem:[%s431 + $0x18] sm:$0xff]
          %v509 = vld [vmem:[%s431 + $0x20] sm:$0xff]
          %v510 = vld [vmem:[%s431 + $0x28] sm:$0xff]
          %v511 = vld [vmem:[%s431 + $0x30] sm:$0xff]
          %v512 = vld [vmem:[%s431 + $0x38] sm:$0xff]
          %v513 = vld [vmem:[%s431 + $0x40] sm:$0xff]
          %v514 = vld [vmem:[%s431 + $0x48] sm:$0xff]
          %v515 = vld [vmem:[%s431 + $0x50] sm:$0xff]
          %v516 = vld [vmem:[%s431 + $0x58] sm:$0xff]
          %v517 = vld [vmem:[%s431 + $0x60] sm:$0xff]
          %v518 = vld [vmem:[%s431 + $0x68] sm:$0xff]
          %v519 = vld [vmem:[%s431 + $0x70] sm:$0xff]
          %v520 = vld [vmem:[%s431 + $0x78] sm:$0xff]
          %v521 = vld [vmem:[%s431 + $0x80] sm:$0xff]
          %v522 = vld [vmem:[%s431 + $0x88] sm:$0xff]
          %v523 = vld [vmem:[%s431 + $0x90] sm:$0xff]
          %v524 = vld [vmem:[%s431 + $0x98] sm:$0xff]
          %v525 = vld [vmem:[%s431 + $0xa0] sm:$0xff]
          %v526 = vld [vmem:[%s431 + $0xa8] sm:$0xff]
          %v527 = vld [vmem:[%s431 + $0xb0] sm:$0xff]
          %v528 = vld [vmem:[%s431 + $0xb8] sm:$0xff]
          %v529 = vld [vmem:[%s431 + $0xc0] sm:$0xff]
          %v530 = vld [vmem:[%s431 + $0xc8] sm:$0xff]
          %v531 = vld [vmem:[%s431 + $0xd0] sm:$0xff]
          %v532 = vld [vmem:[%s431 + $0xd8] sm:$0xff]
          %v533 = vld [vmem:[%s431 + $0xe0] sm:$0xff]
          %v534 = vld [vmem:[%s431 + $0xe8] sm:$0xff]
          %v535 = vld [vmem:[%s431 + $0xf0] sm:$0xff]
          %v536 = vld [vmem:[%s431 + $0xf8] sm:$0xff]
          %v537 = vld [vmem:[%s431 + $0x100] sm:$0xff]
          %v538 = vld [vmem:[%s431 + $0x108] sm:$0xff]
          %v539 = vld [vmem:[%s431 + $0x110] sm:$0xff]
          %v540 = vld [vmem:[%s431 + $0x118] sm:$0xff]
          %v541 = vld [vmem:[%s431 + $0x120] sm:$0xff]
          %v542 = vld [vmem:[%s431 + $0x128] sm:$0xff]
          %v543 = vld [vmem:[%s431 + $0x130] sm:$0xff]
          %v544 = vld [vmem:[%s431 + $0x138] sm:$0xff]
          %v545 = vld [vmem:[%s431 + $0x140] sm:$0xff]
          %v546 = vld [vmem:[%s431 + $0x148] sm:$0xff]
          %v547 = vld [vmem:[%s431 + $0x150] sm:$0xff]
          %v548 = vld [vmem:[%s431 + $0x158] sm:$0xff]
          %v549 = vld [vmem:[%s431 + $0x160] sm:$0xff]
          %v550 = vld [vmem:[%s431 + $0x168] sm:$0xff]
          %v551 = vld [vmem:[%s431 + $0x170] sm:$0xff]
          %v552 = vld [vmem:[%s431 + $0x178] sm:$0xff]
          %v553 = vld [vmem:[%s431 + $0x180] sm:$0xff]
          %v554 = vld [vmem:[%s431 + $0x188] sm:$0xff]
          %v555 = vld [vmem:[%s431 + $0x190] sm:$0xff]
          %v556 = vld [vmem:[%s431 + $0x198] sm:$0xff]
          %v557 = vld [vmem:[%s431 + $0x1a0] sm:$0xff]
          %v558 = vld [vmem:[%s431 + $0x1a8] sm:$0xff]
          %v559 = vld [vmem:[%s431 + $0x1b0] sm:$0xff]
          %v560 = vld [vmem:[%s431 + $0x1b8] sm:$0xff]
          %v561 = vld [vmem:[%s431 + $0x1c0] sm:$0xff]
          %v562 = vld [vmem:[%s431 + $0x1c8] sm:$0xff]
          %v563 = vld [vmem:[%s431 + $0x1d0] sm:$0xff]
          %v564 = vld [vmem:[%s431 + $0x1d8] sm:$0xff]
          %v565 = vld [vmem:[%s431 + $0x1e0] sm:$0xff]
          %v566 = vld [vmem:[%s431 + $0x1e8] sm:$0xff]
          %v567 = vld [vmem:[%s431 + $0x1f0] sm:$0xff]
          %v568 = vld [vmem:[%s431 + $0x1f8] sm:$0xff]
          %v569 = vpack.c.bf16 %v507, %v505
          %v570 = vpack.c.bf16 %v508, %v506
          %v571 = vpack.c.bf16 %v511, %v509
          %v572 = vpack.c.bf16 %v512, %v510
          %v573 = vpack.c.bf16 %v515, %v513
          %v574 = vpack.c.bf16 %v516, %v514
          %v575 = vpack.c.bf16 %v519, %v517
          %v576 = vpack.c.bf16 %v520, %v518
          %v577 = vpack.c.bf16 %v523, %v521
          %v578 = vpack.c.bf16 %v524, %v522
          %v579 = vpack.c.bf16 %v527, %v525
          %v580 = vpack.c.bf16 %v528, %v526
          %v581 = vpack.c.bf16 %v531, %v529
          %v582 = vpack.c.bf16 %v532, %v530
          %v583 = vpack.c.bf16 %v535, %v533
          %v584 = vpack.c.bf16 %v536, %v534
          %v585 = vpack.c.bf16 %v539, %v537
          %v586 = vpack.c.bf16 %v540, %v538
          %v587 = vpack.c.bf16 %v543, %v541
          %v588 = vpack.c.bf16 %v544, %v542
          %v589 = vpack.c.bf16 %v547, %v545
          %v590 = vpack.c.bf16 %v548, %v546
          %v591 = vpack.c.bf16 %v551, %v549
          %v592 = vpack.c.bf16 %v552, %v550
          %v593 = vpack.c.bf16 %v555, %v553
          %v594 = vpack.c.bf16 %v556, %v554
          %v595 = vpack.c.bf16 %v559, %v557
          %v596 = vpack.c.bf16 %v560, %v558
          %v597 = vpack.c.bf16 %v563, %v561
          %v598 = vpack.c.bf16 %v564, %v562
          %v599 = vpack.c.bf16 %v567, %v565
          %v600 = vpack.c.bf16 %v568, %v566
          %s601 = smul.u32 %s41, 32
          %s602 = smul.addr %s601, 4
          %s603 = scalar_lea.vmem [#allocation11], %s602
          %v604 = vld [vmem:[%s603] sm:$0xf]
          %v605 = vld [vmem:[%s603 + $0x4] sm:$0xf]
          %v606 = vld [vmem:[%s603 + $0x8] sm:$0xf]
          %v607 = vld [vmem:[%s603 + $0xc] sm:$0xf]
          %v608 = vld [vmem:[%s603 + $0x10] sm:$0xf]
          %v609 = vld [vmem:[%s603 + $0x14] sm:$0xf]
          %v610 = vld [vmem:[%s603 + $0x18] sm:$0xf]
          %v611 = vld [vmem:[%s603 + $0x1c] sm:$0xf]
          %v612 = vld [vmem:[%s603 + $0x20] sm:$0xf]
          %v613 = vld [vmem:[%s603 + $0x24] sm:$0xf]
          %v614 = vld [vmem:[%s603 + $0x28] sm:$0xf]
          %v615 = vld [vmem:[%s603 + $0x2c] sm:$0xf]
          %v616 = vld [vmem:[%s603 + $0x30] sm:$0xf]
          %v617 = vld [vmem:[%s603 + $0x34] sm:$0xf]
          %v618 = vld [vmem:[%s603 + $0x38] sm:$0xf]
          %v619 = vld [vmem:[%s603 + $0x3c] sm:$0xf]
          %v620 = vld [vmem:[%s603 + $0x40] sm:$0xf]
          %v621 = vld [vmem:[%s603 + $0x44] sm:$0xf]
          %v622 = vld [vmem:[%s603 + $0x48] sm:$0xf]
          %v623 = vld [vmem:[%s603 + $0x4c] sm:$0xf]
          %v624 = vld [vmem:[%s603 + $0x50] sm:$0xf]
          %v625 = vld [vmem:[%s603 + $0x54] sm:$0xf]
          %v626 = vld [vmem:[%s603 + $0x58] sm:$0xf]
          %v627 = vld [vmem:[%s603 + $0x5c] sm:$0xf]
          %v628 = vld [vmem:[%s603 + $0x60] sm:$0xf]
          %v629 = vld [vmem:[%s603 + $0x64] sm:$0xf]
          %v630 = vld [vmem:[%s603 + $0x68] sm:$0xf]
          %v631 = vld [vmem:[%s603 + $0x6c] sm:$0xf]
          %v632 = vld [vmem:[%s603 + $0x70] sm:$0xf]
          %v633 = vld [vmem:[%s603 + $0x74] sm:$0xf]
          %v634 = vld [vmem:[%s603 + $0x78] sm:$0xf]
          %v635 = vld [vmem:[%s603 + $0x7c] sm:$0xf]
          %s636 = scalar_lea.vmem %s4, %s41
          %v637 = vld [vmem:[%s636] sm:$0x1]
          %v639 = vperm.slane %v637, 0
          %v673 = vunpack.c.l.b16 %v604
          %v674 = vunpack.c.l.b16 %v605
          %v675 = vunpack.c.l.b16 %v606
          %v676 = vunpack.c.l.b16 %v607
          %v677 = vunpack.c.l.b16 %v608
          %v678 = vunpack.c.l.b16 %v609
          %v679 = vunpack.c.l.b16 %v610
          %v680 = vunpack.c.l.b16 %v611
          %v681 = vunpack.c.l.b16 %v612
          %v682 = vunpack.c.l.b16 %v613
          %v683 = vunpack.c.l.b16 %v614
          %v684 = vunpack.c.l.b16 %v615
          %v685 = vunpack.c.l.b16 %v616
          %v686 = vunpack.c.l.b16 %v617
          %v687 = vunpack.c.l.b16 %v618
          %v688 = vunpack.c.l.b16 %v619
          %v689 = vunpack.c.l.b16 %v620
          %v690 = vunpack.c.l.b16 %v621
          %v691 = vunpack.c.l.b16 %v622
          %v692 = vunpack.c.l.b16 %v623
          %v693 = vunpack.c.l.b16 %v624
          %v694 = vunpack.c.l.b16 %v625
          %v695 = vunpack.c.l.b16 %v626
          %v696 = vunpack.c.l.b16 %v627
          %v697 = vunpack.c.l.b16 %v628
          %v698 = vunpack.c.l.b16 %v629
          %v699 = vunpack.c.l.b16 %v630
          %v700 = vunpack.c.l.b16 %v631
          %v701 = vunpack.c.l.b16 %v632
          %v702 = vunpack.c.l.b16 %v633
          %v703 = vunpack.c.l.b16 %v634
          %v704 = vunpack.c.l.b16 %v635
          %v705 = vpack.c.b16 %v674, %v673
          %v706 = vpack.c.b16 %v676, %v675
          %v707 = vpack.c.b16 %v678, %v677
          %v708 = vpack.c.b16 %v680, %v679
          %v709 = vpack.c.b16 %v682, %v681
          %v710 = vpack.c.b16 %v684, %v683
          %v711 = vpack.c.b16 %v686, %v685
          %v712 = vpack.c.b16 %v688, %v687
          %v713 = vpack.c.b16 %v690, %v689
          %v714 = vpack.c.b16 %v692, %v691
          %v715 = vpack.c.b16 %v694, %v693
          %v716 = vpack.c.b16 %v696, %v695
          %v717 = vpack.c.b16 %v698, %v697
          %v718 = vpack.c.b16 %v700, %v699
          %v719 = vpack.c.b16 %v702, %v701
          %v720 = vpack.c.b16 %v704, %v703
          %737 = vmatpush.bf16.msra.mxu0 %v712
          %738 = vmatpush.bf16.msra.mxu0 %v711
          %739 = vmatpush.bf16.msra.mxu0 %v710
          %740 = vmatpush.bf16.msra.mxu0 %v709
          %741 = vmatpush.bf16.msra.mxu0 %v708
          %742 = vmatpush.bf16.msra.mxu0 %v707
          %743 = vmatpush.bf16.msra.mxu0 %v706
          %744 = vmatpush.bf16.msra.mxu0 %v705
          %745 = vmatmul.bf16.gmra.mxu0 %v569
          %v746 = vpop.f32.mrf.mxu0
          %v747 = vadd.f32 %v639, %v746
          %v748 = vpop.f32.mrf.mxu0
          %v749 = vadd.f32 %v639, %v748
          %750 = vmatmul.bf16.gmra.mxu0 %v571
          %v751 = vpop.f32.mrf.mxu0
          %v752 = vadd.f32 %v639, %v751
          %v753 = vpop.f32.mrf.mxu0
          %v754 = vadd.f32 %v639, %v753
          %755 = vmatmul.bf16.gmra.mxu0 %v573
          %v756 = vpop.f32.mrf.mxu0
          %v757 = vadd.f32 %v639, %v756
          %v758 = vpop.f32.mrf.mxu0
          %v759 = vadd.f32 %v639, %v758
          %760 = vmatmul.bf16.gmra.mxu0 %v575
          %v761 = vpop.f32.mrf.mxu0
          %v762 = vadd.f32 %v639, %v761
          %v763 = vpop.f32.mrf.mxu0
          %v764 = vadd.f32 %v639, %v763
          %765 = vmatmul.bf16.gmra.mxu0 %v577
          %v766 = vpop.f32.mrf.mxu0
          %v767 = vadd.f32 %v639, %v766
          %v768 = vpop.f32.mrf.mxu0
          %v769 = vadd.f32 %v639, %v768
          %770 = vmatmul.bf16.gmra.mxu0 %v579
          %v771 = vpop.f32.mrf.mxu0
          %v772 = vadd.f32 %v639, %v771
          %v773 = vpop.f32.mrf.mxu0
          %v774 = vadd.f32 %v639, %v773
          %775 = vmatmul.bf16.gmra.mxu0 %v581
          %v776 = vpop.f32.mrf.mxu0
          %v777 = vadd.f32 %v639, %v776
          %v778 = vpop.f32.mrf.mxu0
          %v779 = vadd.f32 %v639, %v778
          %780 = vmatmul.bf16.gmra.mxu0 %v583
          %v781 = vpop.f32.mrf.mxu0
          %v782 = vadd.f32 %v639, %v781
          %v783 = vpop.f32.mrf.mxu0
          %v784 = vadd.f32 %v639, %v783
          %785 = vmatmul.bf16.gmra.mxu0 %v585
          %v786 = vpop.f32.mrf.mxu0
          %v787 = vadd.f32 %v639, %v786
          %v788 = vpop.f32.mrf.mxu0
          %v789 = vadd.f32 %v639, %v788
          %790 = vmatmul.bf16.gmra.mxu0 %v587
          %v791 = vpop.f32.mrf.mxu0
          %v792 = vadd.f32 %v639, %v791
          %v793 = vpop.f32.mrf.mxu0
          %v794 = vadd.f32 %v639, %v793
          %795 = vmatmul.bf16.gmra.mxu0 %v589
          %v796 = vpop.f32.mrf.mxu0
          %v797 = vadd.f32 %v639, %v796
          %v798 = vpop.f32.mrf.mxu0
          %v799 = vadd.f32 %v639, %v798
          %800 = vmatmul.bf16.gmra.mxu0 %v591
          %v801 = vpop.f32.mrf.mxu0
          %v802 = vadd.f32 %v639, %v801
          %v803 = vpop.f32.mrf.mxu0
          %v804 = vadd.f32 %v639, %v803
          %805 = vmatmul.bf16.gmra.mxu0 %v593
          %v806 = vpop.f32.mrf.mxu0
          %v807 = vadd.f32 %v639, %v806
          %v808 = vpop.f32.mrf.mxu0
          %v809 = vadd.f32 %v639, %v808
          %810 = vmatmul.bf16.gmra.mxu0 %v595
          %v811 = vpop.f32.mrf.mxu0
          %v812 = vadd.f32 %v639, %v811
          %v813 = vpop.f32.mrf.mxu0
          %v814 = vadd.f32 %v639, %v813
          %815 = vmatmul.bf16.gmra.mxu0 %v597
          %v816 = vpop.f32.mrf.mxu0
          %v817 = vadd.f32 %v639, %v816
          %v818 = vpop.f32.mrf.mxu0
          %v819 = vadd.f32 %v639, %v818
          %820 = vmatmul.bf16.gmra.mxu0 %v599
          %v821 = vpop.f32.mrf.mxu0
          %v822 = vadd.f32 %v639, %v821
          %v823 = vpop.f32.mrf.mxu0
          %v824 = vadd.f32 %v639, %v823
          %825 = vdwg.mxu0
          %826 = vmatpush.bf16.msra.mxu0 %v720
          %827 = vmatpush.bf16.msra.mxu0 %v719
          %828 = vmatpush.bf16.msra.mxu0 %v718
          %829 = vmatpush.bf16.msra.mxu0 %v717
          %830 = vmatpush.bf16.msra.mxu0 %v716
          %831 = vmatpush.bf16.msra.mxu0 %v715
          %832 = vmatpush.bf16.msra.mxu0 %v714
          %833 = vmatpush.bf16.msra.mxu0 %v713
          %834 = vmatmul.bf16.gmra.mxu0 %v570
          %v835 = vpop.f32.mrf.mxu0
          %v836 = vadd.f32 %v747, %v835
          %v837 = vpop.f32.mrf.mxu0
          %v838 = vadd.f32 %v749, %v837
          %839 = vmatmul.bf16.gmra.mxu0 %v572
          %v840 = vpop.f32.mrf.mxu0
          %v841 = vadd.f32 %v752, %v840
          %v842 = vpop.f32.mrf.mxu0
          %v843 = vadd.f32 %v754, %v842
          %844 = vmatmul.bf16.gmra.mxu0 %v574
          %v845 = vpop.f32.mrf.mxu0
          %v846 = vadd.f32 %v757, %v845
          %v847 = vpop.f32.mrf.mxu0
          %v848 = vadd.f32 %v759, %v847
          %849 = vmatmul.bf16.gmra.mxu0 %v576
          %v850 = vpop.f32.mrf.mxu0
          %v851 = vadd.f32 %v762, %v850
          %v852 = vpop.f32.mrf.mxu0
          %v853 = vadd.f32 %v764, %v852
          %854 = vmatmul.bf16.gmra.mxu0 %v578
          %v855 = vpop.f32.mrf.mxu0
          %v856 = vadd.f32 %v767, %v855
          %v857 = vpop.f32.mrf.mxu0
          %v858 = vadd.f32 %v769, %v857
          %859 = vmatmul.bf16.gmra.mxu0 %v580
          %v860 = vpop.f32.mrf.mxu0
          %v861 = vadd.f32 %v772, %v860
          %v862 = vpop.f32.mrf.mxu0
          %v863 = vadd.f32 %v774, %v862
          %864 = vmatmul.bf16.gmra.mxu0 %v582
          %v865 = vpop.f32.mrf.mxu0
          %v866 = vadd.f32 %v777, %v865
          %v867 = vpop.f32.mrf.mxu0
          %v868 = vadd.f32 %v779, %v867
          %869 = vmatmul.bf16.gmra.mxu0 %v584
          %v870 = vpop.f32.mrf.mxu0
          %v871 = vadd.f32 %v782, %v870
          %v872 = vpop.f32.mrf.mxu0
          %v873 = vadd.f32 %v784, %v872
          %874 = vmatmul.bf16.gmra.mxu0 %v586
          %v875 = vpop.f32.mrf.mxu0
          %v876 = vadd.f32 %v787, %v875
          %v877 = vpop.f32.mrf.mxu0
          %v878 = vadd.f32 %v789, %v877
          %879 = vmatmul.bf16.gmra.mxu0 %v588
          %v880 = vpop.f32.mrf.mxu0
          %v881 = vadd.f32 %v792, %v880
          %v882 = vpop.f32.mrf.mxu0
          %v883 = vadd.f32 %v794, %v882
          %884 = vmatmul.bf16.gmra.mxu0 %v590
          %v885 = vpop.f32.mrf.mxu0
          %v886 = vadd.f32 %v797, %v885
          %v887 = vpop.f32.mrf.mxu0
          %v888 = vadd.f32 %v799, %v887
          %889 = vmatmul.bf16.gmra.mxu0 %v592
          %v890 = vpop.f32.mrf.mxu0
          %v891 = vadd.f32 %v802, %v890
          %v892 = vpop.f32.mrf.mxu0
          %v893 = vadd.f32 %v804, %v892
          %894 = vmatmul.bf16.gmra.mxu0 %v594
          %v895 = vpop.f32.mrf.mxu0
          %v896 = vadd.f32 %v807, %v895
          %v897 = vpop.f32.mrf.mxu0
          %v898 = vadd.f32 %v809, %v897
          %899 = vmatmul.bf16.gmra.mxu0 %v596
          %v900 = vpop.f32.mrf.mxu0
          %v901 = vadd.f32 %v812, %v900
          %v902 = vpop.f32.mrf.mxu0
          %v903 = vadd.f32 %v814, %v902
          %904 = vmatmul.bf16.gmra.mxu0 %v598
          %v905 = vpop.f32.mrf.mxu0
          %v906 = vadd.f32 %v817, %v905
          %v907 = vpop.f32.mrf.mxu0
          %v908 = vadd.f32 %v819, %v907
          %909 = vmatmul.bf16.gmra.mxu0 %v600
          %v910 = vpop.f32.mrf.mxu0
          %v911 = vadd.f32 %v822, %v910
          %v912 = vpop.f32.mrf.mxu0
          %v913 = vadd.f32 %v824, %v912
          %914 = vdwg.mxu0
          %s915 = smul.addr %s601, 4
          %s916 = scalar_lea.vmem [#allocation13], %s915
          %v917 = vld [vmem:[%s916] sm:$0xf]
          %v918 = vld [vmem:[%s916 + $0x4] sm:$0xf]
          %v919 = vld [vmem:[%s916 + $0x8] sm:$0xf]
          %v920 = vld [vmem:[%s916 + $0xc] sm:$0xf]
          %v921 = vld [vmem:[%s916 + $0x10] sm:$0xf]
          %v922 = vld [vmem:[%s916 + $0x14] sm:$0xf]
          %v923 = vld [vmem:[%s916 + $0x18] sm:$0xf]
          %v924 = vld [vmem:[%s916 + $0x1c] sm:$0xf]
          %v925 = vld [vmem:[%s916 + $0x20] sm:$0xf]
          %v926 = vld [vmem:[%s916 + $0x24] sm:$0xf]
          %v927 = vld [vmem:[%s916 + $0x28] sm:$0xf]
          %v928 = vld [vmem:[%s916 + $0x2c] sm:$0xf]
          %v929 = vld [vmem:[%s916 + $0x30] sm:$0xf]
          %v930 = vld [vmem:[%s916 + $0x34] sm:$0xf]
          %v931 = vld [vmem:[%s916 + $0x38] sm:$0xf]
          %v932 = vld [vmem:[%s916 + $0x3c] sm:$0xf]
          %v933 = vld [vmem:[%s916 + $0x40] sm:$0xf]
          %v934 = vld [vmem:[%s916 + $0x44] sm:$0xf]
          %v935 = vld [vmem:[%s916 + $0x48] sm:$0xf]
          %v936 = vld [vmem:[%s916 + $0x4c] sm:$0xf]
          %v937 = vld [vmem:[%s916 + $0x50] sm:$0xf]
          %v938 = vld [vmem:[%s916 + $0x54] sm:$0xf]
          %v939 = vld [vmem:[%s916 + $0x58] sm:$0xf]
          %v940 = vld [vmem:[%s916 + $0x5c] sm:$0xf]
          %v941 = vld [vmem:[%s916 + $0x60] sm:$0xf]
          %v942 = vld [vmem:[%s916 + $0x64] sm:$0xf]
          %v943 = vld [vmem:[%s916 + $0x68] sm:$0xf]
          %v944 = vld [vmem:[%s916 + $0x6c] sm:$0xf]
          %v945 = vld [vmem:[%s916 + $0x70] sm:$0xf]
          %v946 = vld [vmem:[%s916 + $0x74] sm:$0xf]
          %v947 = vld [vmem:[%s916 + $0x78] sm:$0xf]
          %v948 = vld [vmem:[%s916 + $0x7c] sm:$0xf]
          %s949 = scalar_lea.vmem %s6, %s41
          %v950 = vld [vmem:[%s949] sm:$0x1]
          %v952 = vperm.slane %v950, 0
          %v986 = vunpack.c.l.b16 %v917
          %v987 = vunpack.c.l.b16 %v918
          %v988 = vunpack.c.l.b16 %v919
          %v989 = vunpack.c.l.b16 %v920
          %v990 = vunpack.c.l.b16 %v921
          %v991 = vunpack.c.l.b16 %v922
          %v992 = vunpack.c.l.b16 %v923
          %v993 = vunpack.c.l.b16 %v924
          %v994 = vunpack.c.l.b16 %v925
          %v995 = vunpack.c.l.b16 %v926
          %v996 = vunpack.c.l.b16 %v927
          %v997 = vunpack.c.l.b16 %v928
          %v998 = vunpack.c.l.b16 %v929
          %v999 = vunpack.c.l.b16 %v930
          %v1000 = vunpack.c.l.b16 %v931
          %v1001 = vunpack.c.l.b16 %v932
          %v1002 = vunpack.c.l.b16 %v933
          %v1003 = vunpack.c.l.b16 %v934
          %v1004 = vunpack.c.l.b16 %v935
          %v1005 = vunpack.c.l.b16 %v936
          %v1006 = vunpack.c.l.b16 %v937
          %v1007 = vunpack.c.l.b16 %v938
          %v1008 = vunpack.c.l.b16 %v939
          %v1009 = vunpack.c.l.b16 %v940
          %v1010 = vunpack.c.l.b16 %v941
          %v1011 = vunpack.c.l.b16 %v942
          %v1012 = vunpack.c.l.b16 %v943
          %v1013 = vunpack.c.l.b16 %v944
          %v1014 = vunpack.c.l.b16 %v945
          %v1015 = vunpack.c.l.b16 %v946
          %v1016 = vunpack.c.l.b16 %v947
          %v1017 = vunpack.c.l.b16 %v948
          %v1018 = vpack.c.b16 %v987, %v986
          %v1019 = vpack.c.b16 %v989, %v988
          %v1020 = vpack.c.b16 %v991, %v990
          %v1021 = vpack.c.b16 %v993, %v992
          %v1022 = vpack.c.b16 %v995, %v994
          %v1023 = vpack.c.b16 %v997, %v996
          %v1024 = vpack.c.b16 %v999, %v998
          %v1025 = vpack.c.b16 %v1001, %v1000
          %v1026 = vpack.c.b16 %v1003, %v1002
          %v1027 = vpack.c.b16 %v1005, %v1004
          %v1028 = vpack.c.b16 %v1007, %v1006
          %v1029 = vpack.c.b16 %v1009, %v1008
          %v1030 = vpack.c.b16 %v1011, %v1010
          %v1031 = vpack.c.b16 %v1013, %v1012
          %v1032 = vpack.c.b16 %v1015, %v1014
          %v1033 = vpack.c.b16 %v1017, %v1016
          %1050 = vmatpush.bf16.msra.mxu0 %v1025
          %1051 = vmatpush.bf16.msra.mxu0 %v1024
          %1052 = vmatpush.bf16.msra.mxu0 %v1023
          %1053 = vmatpush.bf16.msra.mxu0 %v1022
          %1054 = vmatpush.bf16.msra.mxu0 %v1021
          %1055 = vmatpush.bf16.msra.mxu0 %v1020
          %1056 = vmatpush.bf16.msra.mxu0 %v1019
          %1057 = vmatpush.bf16.msra.mxu0 %v1018
          %1058 = vmatmul.bf16.gmra.mxu0 %v569
          %v1059 = vpop.f32.mrf.mxu0
          %v1060 = vadd.f32 %v952, %v1059
          %v1061 = vpop.f32.mrf.mxu0
          %v1062 = vadd.f32 %v952, %v1061
          %1063 = vmatmul.bf16.gmra.mxu0 %v571
          %v1064 = vpop.f32.mrf.mxu0
          %v1065 = vadd.f32 %v952, %v1064
          %v1066 = vpop.f32.mrf.mxu0
          %v1067 = vadd.f32 %v952, %v1066
          %1068 = vmatmul.bf16.gmra.mxu0 %v573
          %v1069 = vpop.f32.mrf.mxu0
          %v1070 = vadd.f32 %v952, %v1069
          %v1071 = vpop.f32.mrf.mxu0
          %v1072 = vadd.f32 %v952, %v1071
          %1073 = vmatmul.bf16.gmra.mxu0 %v575
          %v1074 = vpop.f32.mrf.mxu0
          %v1075 = vadd.f32 %v952, %v1074
          %v1076 = vpop.f32.mrf.mxu0
          %v1077 = vadd.f32 %v952, %v1076
          %1078 = vmatmul.bf16.gmra.mxu0 %v577
          %v1079 = vpop.f32.mrf.mxu0
          %v1080 = vadd.f32 %v952, %v1079
          %v1081 = vpop.f32.mrf.mxu0
          %v1082 = vadd.f32 %v952, %v1081
          %1083 = vmatmul.bf16.gmra.mxu0 %v579
          %v1084 = vpop.f32.mrf.mxu0
          %v1085 = vadd.f32 %v952, %v1084
          %v1086 = vpop.f32.mrf.mxu0
          %v1087 = vadd.f32 %v952, %v1086
          %1088 = vmatmul.bf16.gmra.mxu0 %v581
          %v1089 = vpop.f32.mrf.mxu0
          %v1090 = vadd.f32 %v952, %v1089
          %v1091 = vpop.f32.mrf.mxu0
          %v1092 = vadd.f32 %v952, %v1091
          %1093 = vmatmul.bf16.gmra.mxu0 %v583
          %v1094 = vpop.f32.mrf.mxu0
          %v1095 = vadd.f32 %v952, %v1094
          %v1096 = vpop.f32.mrf.mxu0
          %v1097 = vadd.f32 %v952, %v1096
          %1098 = vmatmul.bf16.gmra.mxu0 %v585
          %v1099 = vpop.f32.mrf.mxu0
          %v1100 = vadd.f32 %v952, %v1099
          %v1101 = vpop.f32.mrf.mxu0
          %v1102 = vadd.f32 %v952, %v1101
          %1103 = vmatmul.bf16.gmra.mxu0 %v587
          %v1104 = vpop.f32.mrf.mxu0
          %v1105 = vadd.f32 %v952, %v1104
          %v1106 = vpop.f32.mrf.mxu0
          %v1107 = vadd.f32 %v952, %v1106
          %1108 = vmatmul.bf16.gmra.mxu0 %v589
          %v1109 = vpop.f32.mrf.mxu0
          %v1110 = vadd.f32 %v952, %v1109
          %v1111 = vpop.f32.mrf.mxu0
          %v1112 = vadd.f32 %v952, %v1111
          %1113 = vmatmul.bf16.gmra.mxu0 %v591
          %v1114 = vpop.f32.mrf.mxu0
          %v1115 = vadd.f32 %v952, %v1114
          %v1116 = vpop.f32.mrf.mxu0
          %v1117 = vadd.f32 %v952, %v1116
          %1118 = vmatmul.bf16.gmra.mxu0 %v593
          %v1119 = vpop.f32.mrf.mxu0
          %v1120 = vadd.f32 %v952, %v1119
          %v1121 = vpop.f32.mrf.mxu0
          %v1122 = vadd.f32 %v952, %v1121
          %1123 = vmatmul.bf16.gmra.mxu0 %v595
          %v1124 = vpop.f32.mrf.mxu0
          %v1125 = vadd.f32 %v952, %v1124
          %v1126 = vpop.f32.mrf.mxu0
          %v1127 = vadd.f32 %v952, %v1126
          %1128 = vmatmul.bf16.gmra.mxu0 %v597
          %v1129 = vpop.f32.mrf.mxu0
          %v1130 = vadd.f32 %v952, %v1129
          %v1131 = vpop.f32.mrf.mxu0
          %v1132 = vadd.f32 %v952, %v1131
          %1133 = vmatmul.bf16.gmra.mxu0 %v599
          %v1134 = vpop.f32.mrf.mxu0
          %v1135 = vadd.f32 %v952, %v1134
          %v1136 = vpop.f32.mrf.mxu0
          %v1137 = vadd.f32 %v952, %v1136
          %1138 = vdwg.mxu0
          %1139 = vmatpush.bf16.msra.mxu0 %v1033
          %1140 = vmatpush.bf16.msra.mxu0 %v1032
          %1141 = vmatpush.bf16.msra.mxu0 %v1031
          %1142 = vmatpush.bf16.msra.mxu0 %v1030
          %1143 = vmatpush.bf16.msra.mxu0 %v1029
          %1144 = vmatpush.bf16.msra.mxu0 %v1028
          %1145 = vmatpush.bf16.msra.mxu0 %v1027
          %1146 = vmatpush.bf16.msra.mxu0 %v1026
          %1147 = vmatmul.bf16.gmra.mxu0 %v570
          %v1148 = vpop.f32.mrf.mxu0
          %v1149 = vadd.f32 %v1060, %v1148
          %v1150 = vpop.f32.mrf.mxu0
          %v1151 = vadd.f32 %v1062, %v1150
          %1152 = vmatmul.bf16.gmra.mxu0 %v572
          %v1153 = vpop.f32.mrf.mxu0
          %v1154 = vadd.f32 %v1065, %v1153
          %v1155 = vpop.f32.mrf.mxu0
          %v1156 = vadd.f32 %v1067, %v1155
          %1157 = vmatmul.bf16.gmra.mxu0 %v574
          %v1158 = vpop.f32.mrf.mxu0
          %v1159 = vadd.f32 %v1070, %v1158
          %v1160 = vpop.f32.mrf.mxu0
          %v1161 = vadd.f32 %v1072, %v1160
          %1162 = vmatmul.bf16.gmra.mxu0 %v576
          %v1163 = vpop.f32.mrf.mxu0
          %v1164 = vadd.f32 %v1075, %v1163
          %v1165 = vpop.f32.mrf.mxu0
          %v1166 = vadd.f32 %v1077, %v1165
          %1167 = vmatmul.bf16.gmra.mxu0 %v578
          %v1168 = vpop.f32.mrf.mxu0
          %v1169 = vadd.f32 %v1080, %v1168
          %v1170 = vpop.f32.mrf.mxu0
          %v1171 = vadd.f32 %v1082, %v1170
          %1172 = vmatmul.bf16.gmra.mxu0 %v580
          %v1173 = vpop.f32.mrf.mxu0
          %v1174 = vadd.f32 %v1085, %v1173
          %v1175 = vpop.f32.mrf.mxu0
          %v1176 = vadd.f32 %v1087, %v1175
          %1177 = vmatmul.bf16.gmra.mxu0 %v582
          %v1178 = vpop.f32.mrf.mxu0
          %v1179 = vadd.f32 %v1090, %v1178
          %v1180 = vpop.f32.mrf.mxu0
          %v1181 = vadd.f32 %v1092, %v1180
          %1182 = vmatmul.bf16.gmra.mxu0 %v584
          %v1183 = vpop.f32.mrf.mxu0
          %v1184 = vadd.f32 %v1095, %v1183
          %v1185 = vpop.f32.mrf.mxu0
          %v1186 = vadd.f32 %v1097, %v1185
          %1187 = vmatmul.bf16.gmra.mxu0 %v586
          %v1188 = vpop.f32.mrf.mxu0
          %v1189 = vadd.f32 %v1100, %v1188
          %v1190 = vpop.f32.mrf.mxu0
          %v1191 = vadd.f32 %v1102, %v1190
          %1192 = vmatmul.bf16.gmra.mxu0 %v588
          %v1193 = vpop.f32.mrf.mxu0
          %v1194 = vadd.f32 %v1105, %v1193
          %v1195 = vpop.f32.mrf.mxu0
          %v1196 = vadd.f32 %v1107, %v1195
          %1197 = vmatmul.bf16.gmra.mxu0 %v590
          %v1198 = vpop.f32.mrf.mxu0
          %v1199 = vadd.f32 %v1110, %v1198
          %v1200 = vpop.f32.mrf.mxu0
          %v1201 = vadd.f32 %v1112, %v1200
          %1202 = vmatmul.bf16.gmra.mxu0 %v592
          %v1203 = vpop.f32.mrf.mxu0
          %v1204 = vadd.f32 %v1115, %v1203
          %v1205 = vpop.f32.mrf.mxu0
          %v1206 = vadd.f32 %v1117, %v1205
          %1207 = vmatmul.bf16.gmra.mxu0 %v594
          %v1208 = vpop.f32.mrf.mxu0
          %v1209 = vadd.f32 %v1120, %v1208
          %v1210 = vpop.f32.mrf.mxu0
          %v1211 = vadd.f32 %v1122, %v1210
          %1212 = vmatmul.bf16.gmra.mxu0 %v596
          %v1213 = vpop.f32.mrf.mxu0
          %v1214 = vadd.f32 %v1125, %v1213
          %v1215 = vpop.f32.mrf.mxu0
          %v1216 = vadd.f32 %v1127, %v1215
          %1217 = vmatmul.bf16.gmra.mxu0 %v598
          %v1218 = vpop.f32.mrf.mxu0
          %v1219 = vadd.f32 %v1130, %v1218
          %v1220 = vpop.f32.mrf.mxu0
          %v1221 = vadd.f32 %v1132, %v1220
          %1222 = vmatmul.bf16.gmra.mxu0 %v600
          %v1223 = vpop.f32.mrf.mxu0
          %v1224 = vadd.f32 %v1135, %v1223
          %v1225 = vpop.f32.mrf.mxu0
          %v1226 = vadd.f32 %v1137, %v1225
          %1227 = vdwg.mxu0
          %v1228 = vpack.c.bf16 %v836, %v836
          %v1229 = vpack.c.bf16 %v838, %v838
          %v1230 = vpack.c.bf16 %v841, %v841
          %v1231 = vpack.c.bf16 %v843, %v843
          %v1232 = vpack.c.bf16 %v846, %v846
          %v1233 = vpack.c.bf16 %v848, %v848
          %v1234 = vpack.c.bf16 %v851, %v851
          %v1235 = vpack.c.bf16 %v853, %v853
          %v1236 = vpack.c.bf16 %v856, %v856
          %v1237 = vpack.c.bf16 %v858, %v858
          %v1238 = vpack.c.bf16 %v861, %v861
          %v1239 = vpack.c.bf16 %v863, %v863
          %v1240 = vpack.c.bf16 %v866, %v866
          %v1241 = vpack.c.bf16 %v868, %v868
          %v1242 = vpack.c.bf16 %v871, %v871
          %v1243 = vpack.c.bf16 %v873, %v873
          %v1244 = vpack.c.bf16 %v876, %v876
          %v1245 = vpack.c.bf16 %v878, %v878
          %v1246 = vpack.c.bf16 %v881, %v881
          %v1247 = vpack.c.bf16 %v883, %v883
          %v1248 = vpack.c.bf16 %v886, %v886
          %v1249 = vpack.c.bf16 %v888, %v888
          %v1250 = vpack.c.bf16 %v891, %v891
          %v1251 = vpack.c.bf16 %v893, %v893
          %v1252 = vpack.c.bf16 %v896, %v896
          %v1253 = vpack.c.bf16 %v898, %v898
          %v1254 = vpack.c.bf16 %v901, %v901
          %v1255 = vpack.c.bf16 %v903, %v903
          %v1256 = vpack.c.bf16 %v906, %v906
          %v1257 = vpack.c.bf16 %v908, %v908
          %v1258 = vpack.c.bf16 %v911, %v911
          %v1259 = vpack.c.bf16 %v913, %v913
          %s1260 = smul.addr %s601, 4
          %s1261 = scalar_lea.vmem [#allocation2], %s1260
          %1262 = vst [vmem:[%s1261] sm:$0xf] %v1228
          %1263 = vst [vmem:[%s1261 + $0x4] sm:$0xf] %v1229
          %1264 = vst [vmem:[%s1261 + $0x8] sm:$0xf] %v1230
          %1265 = vst [vmem:[%s1261 + $0xc] sm:$0xf] %v1231
          %1266 = vst [vmem:[%s1261 + $0x10] sm:$0xf] %v1232
          %1267 = vst [vmem:[%s1261 + $0x14] sm:$0xf] %v1233
          %1268 = vst [vmem:[%s1261 + $0x18] sm:$0xf] %v1234
          %1269 = vst [vmem:[%s1261 + $0x1c] sm:$0xf] %v1235
          %1270 = vst [vmem:[%s1261 + $0x20] sm:$0xf] %v1236
          %1271 = vst [vmem:[%s1261 + $0x24] sm:$0xf] %v1237
          %1272 = vst [vmem:[%s1261 + $0x28] sm:$0xf] %v1238
          %1273 = vst [vmem:[%s1261 + $0x2c] sm:$0xf] %v1239
          %1274 = vst [vmem:[%s1261 + $0x30] sm:$0xf] %v1240
          %1275 = vst [vmem:[%s1261 + $0x34] sm:$0xf] %v1241
          %1276 = vst [vmem:[%s1261 + $0x38] sm:$0xf] %v1242
          %1277 = vst [vmem:[%s1261 + $0x3c] sm:$0xf] %v1243
          %1278 = vst [vmem:[%s1261 + $0x40] sm:$0xf] %v1244
          %1279 = vst [vmem:[%s1261 + $0x44] sm:$0xf] %v1245
          %1280 = vst [vmem:[%s1261 + $0x48] sm:$0xf] %v1246
          %1281 = vst [vmem:[%s1261 + $0x4c] sm:$0xf] %v1247
          %1282 = vst [vmem:[%s1261 + $0x50] sm:$0xf] %v1248
          %1283 = vst [vmem:[%s1261 + $0x54] sm:$0xf] %v1249
          %1284 = vst [vmem:[%s1261 + $0x58] sm:$0xf] %v1250
          %1285 = vst [vmem:[%s1261 + $0x5c] sm:$0xf] %v1251
          %1286 = vst [vmem:[%s1261 + $0x60] sm:$0xf] %v1252
          %1287 = vst [vmem:[%s1261 + $0x64] sm:$0xf] %v1253
          %1288 = vst [vmem:[%s1261 + $0x68] sm:$0xf] %v1254
          %1289 = vst [vmem:[%s1261 + $0x6c] sm:$0xf] %v1255
          %1290 = vst [vmem:[%s1261 + $0x70] sm:$0xf] %v1256
          %1291 = vst [vmem:[%s1261 + $0x74] sm:$0xf] %v1257
          %1292 = vst [vmem:[%s1261 + $0x78] sm:$0xf] %v1258
          %1293 = vst [vmem:[%s1261 + $0x7c] sm:$0xf] %v1259
          %v1294 = vpack.c.bf16 %v1149, %v1149
          %v1295 = vpack.c.bf16 %v1151, %v1151
          %v1296 = vpack.c.bf16 %v1154, %v1154
          %v1297 = vpack.c.bf16 %v1156, %v1156
          %v1298 = vpack.c.bf16 %v1159, %v1159
          %v1299 = vpack.c.bf16 %v1161, %v1161
          %v1300 = vpack.c.bf16 %v1164, %v1164
          %v1301 = vpack.c.bf16 %v1166, %v1166
          %v1302 = vpack.c.bf16 %v1169, %v1169
          %v1303 = vpack.c.bf16 %v1171, %v1171
          %v1304 = vpack.c.bf16 %v1174, %v1174
          %v1305 = vpack.c.bf16 %v1176, %v1176
          %v1306 = vpack.c.bf16 %v1179, %v1179
          %v1307 = vpack.c.bf16 %v1181, %v1181
          %v1308 = vpack.c.bf16 %v1184, %v1184
          %v1309 = vpack.c.bf16 %v1186, %v1186
          %v1310 = vpack.c.bf16 %v1189, %v1189
          %v1311 = vpack.c.bf16 %v1191, %v1191
          %v1312 = vpack.c.bf16 %v1194, %v1194
          %v1313 = vpack.c.bf16 %v1196, %v1196
          %v1314 = vpack.c.bf16 %v1199, %v1199
          %v1315 = vpack.c.bf16 %v1201, %v1201
          %v1316 = vpack.c.bf16 %v1204, %v1204
          %v1317 = vpack.c.bf16 %v1206, %v1206
          %v1318 = vpack.c.bf16 %v1209, %v1209
          %v1319 = vpack.c.bf16 %v1211, %v1211
          %v1320 = vpack.c.bf16 %v1214, %v1214
          %v1321 = vpack.c.bf16 %v1216, %v1216
          %v1322 = vpack.c.bf16 %v1219, %v1219
          %v1323 = vpack.c.bf16 %v1221, %v1221
          %v1324 = vpack.c.bf16 %v1224, %v1224
          %v1325 = vpack.c.bf16 %v1226, %v1226
          %s1326 = smul.addr %s601, 4
          %s1327 = scalar_lea.vmem [#allocation3], %s1326
          %1328 = vst [vmem:[%s1327] sm:$0xf] %v1294
          %1329 = vst [vmem:[%s1327 + $0x4] sm:$0xf] %v1295
          %1330 = vst [vmem:[%s1327 + $0x8] sm:$0xf] %v1296
          %1331 = vst [vmem:[%s1327 + $0xc] sm:$0xf] %v1297
          %1332 = vst [vmem:[%s1327 + $0x10] sm:$0xf] %v1298
          %1333 = vst [vmem:[%s1327 + $0x14] sm:$0xf] %v1299
          %1334 = vst [vmem:[%s1327 + $0x18] sm:$0xf] %v1300
          %1335 = vst [vmem:[%s1327 + $0x1c] sm:$0xf] %v1301
          %1336 = vst [vmem:[%s1327 + $0x20] sm:$0xf] %v1302
          %1337 = vst [vmem:[%s1327 + $0x24] sm:$0xf] %v1303
          %1338 = vst [vmem:[%s1327 + $0x28] sm:$0xf] %v1304
          %1339 = vst [vmem:[%s1327 + $0x2c] sm:$0xf] %v1305
          %1340 = vst [vmem:[%s1327 + $0x30] sm:$0xf] %v1306
          %1341 = vst [vmem:[%s1327 + $0x34] sm:$0xf] %v1307
          %1342 = vst [vmem:[%s1327 + $0x38] sm:$0xf] %v1308
          %1343 = vst [vmem:[%s1327 + $0x3c] sm:$0xf] %v1309
          %1344 = vst [vmem:[%s1327 + $0x40] sm:$0xf] %v1310
          %1345 = vst [vmem:[%s1327 + $0x44] sm:$0xf] %v1311
          %1346 = vst [vmem:[%s1327 + $0x48] sm:$0xf] %v1312
          %1347 = vst [vmem:[%s1327 + $0x4c] sm:$0xf] %v1313
          %1348 = vst [vmem:[%s1327 + $0x50] sm:$0xf] %v1314
          %1349 = vst [vmem:[%s1327 + $0x54] sm:$0xf] %v1315
          %1350 = vst [vmem:[%s1327 + $0x58] sm:$0xf] %v1316
          %1351 = vst [vmem:[%s1327 + $0x5c] sm:$0xf] %v1317
          %1352 = vst [vmem:[%s1327 + $0x60] sm:$0xf] %v1318
          %1353 = vst [vmem:[%s1327 + $0x64] sm:$0xf] %v1319
          %1354 = vst [vmem:[%s1327 + $0x68] sm:$0xf] %v1320
          %1355 = vst [vmem:[%s1327 + $0x6c] sm:$0xf] %v1321
          %1356 = vst [vmem:[%s1327 + $0x70] sm:$0xf] %v1322
          %1357 = vst [vmem:[%s1327 + $0x74] sm:$0xf] %v1323
          %1358 = vst [vmem:[%s1327 + $0x78] sm:$0xf] %v1324
          %1359 = vst [vmem:[%s1327 + $0x7c] sm:$0xf] %v1325
        $region84: #{tpu_custom_call.1} parent=55 // pred_fallthru
          _
        %s1360 = smul.u32 %s40, 128
        %s1361 = sshra.s32 %s1360, 3
        %s1362 = sand.u32 %s1360, 7
        %s1363 = smul.u32 %s1361, 2
        %s1364 = smul.addr %s1363, 8
        %s1365 = scalar_lea.vmem %s431, %s1364 [#allocation5]
        %v1366 = vld [vmem:[%s1365] sm:$0xff]
        %v1367 = vld [vmem:[%s1365 + $0x8] sm:$0xff]
        %v1368 = vld [vmem:[%s1365 + $0x10] sm:$0xff]
        %v1369 = vld [vmem:[%s1365 + $0x18] sm:$0xff]
        %v1370 = vld [vmem:[%s1365 + $0x20] sm:$0xff]
        %v1371 = vld [vmem:[%s1365 + $0x28] sm:$0xff]
        %v1372 = vld [vmem:[%s1365 + $0x30] sm:$0xff]
        %v1373 = vld [vmem:[%s1365 + $0x38] sm:$0xff]
        %v1374 = vld [vmem:[%s1365 + $0x40] sm:$0xff]
        %v1375 = vld [vmem:[%s1365 + $0x48] sm:$0xff]
        %v1376 = vld [vmem:[%s1365 + $0x50] sm:$0xff]
        %v1377 = vld [vmem:[%s1365 + $0x58] sm:$0xff]
        %v1378 = vld [vmem:[%s1365 + $0x60] sm:$0xff]
        %v1379 = vld [vmem:[%s1365 + $0x68] sm:$0xff]
        %v1380 = vld [vmem:[%s1365 + $0x70] sm:$0xff]
        %v1381 = vld [vmem:[%s1365 + $0x78] sm:$0xff]
        %v1382 = vld [vmem:[%s1365 + $0x80] sm:$0xff]
        %v1383 = vld [vmem:[%s1365 + $0x88] sm:$0xff]
        %v1384 = vld [vmem:[%s1365 + $0x90] sm:$0xff]
        %v1385 = vld [vmem:[%s1365 + $0x98] sm:$0xff]
        %v1386 = vld [vmem:[%s1365 + $0xa0] sm:$0xff]
        %v1387 = vld [vmem:[%s1365 + $0xa8] sm:$0xff]
        %v1388 = vld [vmem:[%s1365 + $0xb0] sm:$0xff]
        %v1389 = vld [vmem:[%s1365 + $0xb8] sm:$0xff]
        %v1390 = vld [vmem:[%s1365 + $0xc0] sm:$0xff]
        %v1391 = vld [vmem:[%s1365 + $0xc8] sm:$0xff]
        %v1392 = vld [vmem:[%s1365 + $0xd0] sm:$0xff]
        %v1393 = vld [vmem:[%s1365 + $0xd8] sm:$0xff]
        %v1394 = vld [vmem:[%s1365 + $0xe0] sm:$0xff]
        %v1395 = vld [vmem:[%s1365 + $0xe8] sm:$0xff]
        %v1396 = vld [vmem:[%s1365 + $0xf0] sm:$0xff]
        %v1397 = vld [vmem:[%s1365 + $0xf8] sm:$0xff]
        %v1398 = vpack.c.bf16 %v1368, %v1366
        %v1399 = vpack.c.bf16 %v1369, %v1367
        %v1400 = vpack.c.bf16 %v1372, %v1370
        %v1401 = vpack.c.bf16 %v1373, %v1371
        %v1402 = vpack.c.bf16 %v1376, %v1374
        %v1403 = vpack.c.bf16 %v1377, %v1375
        %v1404 = vpack.c.bf16 %v1380, %v1378
        %v1405 = vpack.c.bf16 %v1381, %v1379
        %v1406 = vpack.c.bf16 %v1384, %v1382
        %v1407 = vpack.c.bf16 %v1385, %v1383
        %v1408 = vpack.c.bf16 %v1388, %v1386
        %v1409 = vpack.c.bf16 %v1389, %v1387
        %v1410 = vpack.c.bf16 %v1392, %v1390
        %v1411 = vpack.c.bf16 %v1393, %v1391
        %v1412 = vpack.c.bf16 %v1396, %v1394
        %v1413 = vpack.c.bf16 %v1397, %v1395
        %s1414 = smul.u32 %s41, 32
        %s1415 = smul.addr %s1414, 4
        %s1416 = scalar_lea.vmem [#allocation8], %s1415
        %v1417 = vld [vmem:[%s1416] sm:$0xf]
        %v1418 = vld [vmem:[%s1416 + $0x4] sm:$0xf]
        %v1419 = vld [vmem:[%s1416 + $0x8] sm:$0xf]
        %v1420 = vld [vmem:[%s1416 + $0xc] sm:$0xf]
        %v1421 = vld [vmem:[%s1416 + $0x10] sm:$0xf]
        %v1422 = vld [vmem:[%s1416 + $0x14] sm:$0xf]
        %v1423 = vld [vmem:[%s1416 + $0x18] sm:$0xf]
        %v1424 = vld [vmem:[%s1416 + $0x1c] sm:$0xf]
        %v1425 = vld [vmem:[%s1416 + $0x20] sm:$0xf]
        %v1426 = vld [vmem:[%s1416 + $0x24] sm:$0xf]
        %v1427 = vld [vmem:[%s1416 + $0x28] sm:$0xf]
        %v1428 = vld [vmem:[%s1416 + $0x2c] sm:$0xf]
        %v1429 = vld [vmem:[%s1416 + $0x30] sm:$0xf]
        %v1430 = vld [vmem:[%s1416 + $0x34] sm:$0xf]
        %v1431 = vld [vmem:[%s1416 + $0x38] sm:$0xf]
        %v1432 = vld [vmem:[%s1416 + $0x3c] sm:$0xf]
        %v1433 = vld [vmem:[%s1416 + $0x40] sm:$0xf]
        %v1434 = vld [vmem:[%s1416 + $0x44] sm:$0xf]
        %v1435 = vld [vmem:[%s1416 + $0x48] sm:$0xf]
        %v1436 = vld [vmem:[%s1416 + $0x4c] sm:$0xf]
        %v1437 = vld [vmem:[%s1416 + $0x50] sm:$0xf]
        %v1438 = vld [vmem:[%s1416 + $0x54] sm:$0xf]
        %v1439 = vld [vmem:[%s1416 + $0x58] sm:$0xf]
        %v1440 = vld [vmem:[%s1416 + $0x5c] sm:$0xf]
        %v1441 = vld [vmem:[%s1416 + $0x60] sm:$0xf]
        %v1442 = vld [vmem:[%s1416 + $0x64] sm:$0xf]
        %v1443 = vld [vmem:[%s1416 + $0x68] sm:$0xf]
        %v1444 = vld [vmem:[%s1416 + $0x6c] sm:$0xf]
        %v1445 = vld [vmem:[%s1416 + $0x70] sm:$0xf]
        %v1446 = vld [vmem:[%s1416 + $0x74] sm:$0xf]
        %v1447 = vld [vmem:[%s1416 + $0x78] sm:$0xf]
        %v1448 = vld [vmem:[%s1416 + $0x7c] sm:$0xf]
        %s1449 = scalar_lea.vmem [#allocation10], %s41
        %v1450 = vld [vmem:[%s1449] sm:$0x1]
        %v1452 = vperm.slane %v1450, 0
        %v1486 = vunpack.c.l.b16 %v1417
        %v1487 = vunpack.c.l.b16 %v1418
        %v1488 = vunpack.c.l.b16 %v1419
        %v1489 = vunpack.c.l.b16 %v1420
        %v1490 = vunpack.c.l.b16 %v1421
        %v1491 = vunpack.c.l.b16 %v1422
        %v1492 = vunpack.c.l.b16 %v1423
        %v1493 = vunpack.c.l.b16 %v1424
        %v1494 = vunpack.c.l.b16 %v1425
        %v1495 = vunpack.c.l.b16 %v1426
        %v1496 = vunpack.c.l.b16 %v1427
        %v1497 = vunpack.c.l.b16 %v1428
        %v1498 = vunpack.c.l.b16 %v1429
        %v1499 = vunpack.c.l.b16 %v1430
        %v1500 = vunpack.c.l.b16 %v1431
        %v1501 = vunpack.c.l.b16 %v1432
        %v1502 = vunpack.c.l.b16 %v1433
        %v1503 = vunpack.c.l.b16 %v1434
        %v1504 = vunpack.c.l.b16 %v1435
        %v1505 = vunpack.c.l.b16 %v1436
        %v1506 = vunpack.c.l.b16 %v1437
        %v1507 = vunpack.c.l.b16 %v1438
        %v1508 = vunpack.c.l.b16 %v1439
        %v1509 = vunpack.c.l.b16 %v1440
        %v1510 = vunpack.c.l.b16 %v1441
        %v1511 = vunpack.c.l.b16 %v1442
        %v1512 = vunpack.c.l.b16 %v1443
        %v1513 = vunpack.c.l.b16 %v1444
        %v1514 = vunpack.c.l.b16 %v1445
        %v1515 = vunpack.c.l.b16 %v1446
        %v1516 = vunpack.c.l.b16 %v1447
        %v1517 = vunpack.c.l.b16 %v1448
        %v1518 = vpack.c.b16 %v1487, %v1486
        %v1519 = vpack.c.b16 %v1489, %v1488
        %v1520 = vpack.c.b16 %v1491, %v1490
        %v1521 = vpack.c.b16 %v1493, %v1492
        %v1522 = vpack.c.b16 %v1495, %v1494
        %v1523 = vpack.c.b16 %v1497, %v1496
        %v1524 = vpack.c.b16 %v1499, %v1498
        %v1525 = vpack.c.b16 %v1501, %v1500
        %v1526 = vpack.c.b16 %v1503, %v1502
        %v1527 = vpack.c.b16 %v1505, %v1504
        %v1528 = vpack.c.b16 %v1507, %v1506
        %v1529 = vpack.c.b16 %v1509, %v1508
        %v1530 = vpack.c.b16 %v1511, %v1510
        %v1531 = vpack.c.b16 %v1513, %v1512
        %v1532 = vpack.c.b16 %v1515, %v1514
        %v1533 = vpack.c.b16 %v1517, %v1516
        %1550 = vmatpush.bf16.msra.mxu0 %v1525
        %1551 = vmatpush.bf16.msra.mxu0 %v1524
        %1552 = vmatpush.bf16.msra.mxu0 %v1523
        %1553 = vmatpush.bf16.msra.mxu0 %v1522
        %1554 = vmatpush.bf16.msra.mxu0 %v1521
        %1555 = vmatpush.bf16.msra.mxu0 %v1520
        %1556 = vmatpush.bf16.msra.mxu0 %v1519
        %1557 = vmatpush.bf16.msra.mxu0 %v1518
        %1558 = vmatmul.bf16.gmra.mxu0 %v1398
        %v1559 = vpop.f32.mrf.mxu0
        %v1560 = vadd.f32 %v1452, %v1559
        %v1561 = vpop.f32.mrf.mxu0
        %v1562 = vadd.f32 %v1452, %v1561
        %1563 = vmatmul.bf16.gmra.mxu0 %v1400
        %v1564 = vpop.f32.mrf.mxu0
        %v1565 = vadd.f32 %v1452, %v1564
        %v1566 = vpop.f32.mrf.mxu0
        %v1567 = vadd.f32 %v1452, %v1566
        %1568 = vmatmul.bf16.gmra.mxu0 %v1402
        %v1569 = vpop.f32.mrf.mxu0
        %v1570 = vadd.f32 %v1452, %v1569
        %v1571 = vpop.f32.mrf.mxu0
        %v1572 = vadd.f32 %v1452, %v1571
        %1573 = vmatmul.bf16.gmra.mxu0 %v1404
        %v1574 = vpop.f32.mrf.mxu0
        %v1575 = vadd.f32 %v1452, %v1574
        %v1576 = vpop.f32.mrf.mxu0
        %v1577 = vadd.f32 %v1452, %v1576
        %1578 = vmatmul.bf16.gmra.mxu0 %v1406
        %v1579 = vpop.f32.mrf.mxu0
        %v1580 = vadd.f32 %v1452, %v1579
        %v1581 = vpop.f32.mrf.mxu0
        %v1582 = vadd.f32 %v1452, %v1581
        %1583 = vmatmul.bf16.gmra.mxu0 %v1408
        %v1584 = vpop.f32.mrf.mxu0
        %v1585 = vadd.f32 %v1452, %v1584
        %v1586 = vpop.f32.mrf.mxu0
        %v1587 = vadd.f32 %v1452, %v1586
        %1588 = vmatmul.bf16.gmra.mxu0 %v1410
        %v1589 = vpop.f32.mrf.mxu0
        %v1590 = vadd.f32 %v1452, %v1589
        %v1591 = vpop.f32.mrf.mxu0
        %v1592 = vadd.f32 %v1452, %v1591
        %1593 = vmatmul.bf16.gmra.mxu0 %v1412
        %v1594 = vpop.f32.mrf.mxu0
        %v1595 = vadd.f32 %v1452, %v1594
        %v1596 = vpop.f32.mrf.mxu0
        %v1597 = vadd.f32 %v1452, %v1596
        %1598 = vdwg.mxu0
        %1599 = vmatpush.bf16.msra.mxu0 %v1533
        %1600 = vmatpush.bf16.msra.mxu0 %v1532
        %1601 = vmatpush.bf16.msra.mxu0 %v1531
        %1602 = vmatpush.bf16.msra.mxu0 %v1530
        %1603 = vmatpush.bf16.msra.mxu0 %v1529
        %1604 = vmatpush.bf16.msra.mxu0 %v1528
        %1605 = vmatpush.bf16.msra.mxu0 %v1527
        %1606 = vmatpush.bf16.msra.mxu0 %v1526
        %1607 = vmatmul.bf16.gmra.mxu0 %v1399
        %v1608 = vpop.f32.mrf.mxu0
        %v1609 = vadd.f32 %v1560, %v1608
        %v1610 = vpop.f32.mrf.mxu0
        %v1611 = vadd.f32 %v1562, %v1610
        %1612 = vmatmul.bf16.gmra.mxu0 %v1401
        %v1613 = vpop.f32.mrf.mxu0
        %v1614 = vadd.f32 %v1565, %v1613
        %v1615 = vpop.f32.mrf.mxu0
        %v1616 = vadd.f32 %v1567, %v1615
        %1617 = vmatmul.bf16.gmra.mxu0 %v1403
        %v1618 = vpop.f32.mrf.mxu0
        %v1619 = vadd.f32 %v1570, %v1618
        %v1620 = vpop.f32.mrf.mxu0
        %v1621 = vadd.f32 %v1572, %v1620
        %1622 = vmatmul.bf16.gmra.mxu0 %v1405
        %v1623 = vpop.f32.mrf.mxu0
        %v1624 = vadd.f32 %v1575, %v1623
        %v1625 = vpop.f32.mrf.mxu0
        %v1626 = vadd.f32 %v1577, %v1625
        %1627 = vmatmul.bf16.gmra.mxu0 %v1407
        %v1628 = vpop.f32.mrf.mxu0
        %v1629 = vadd.f32 %v1580, %v1628
        %v1630 = vpop.f32.mrf.mxu0
        %v1631 = vadd.f32 %v1582, %v1630
        %1632 = vmatmul.bf16.gmra.mxu0 %v1409
        %v1633 = vpop.f32.mrf.mxu0
        %v1634 = vadd.f32 %v1585, %v1633
        %v1635 = vpop.f32.mrf.mxu0
        %v1636 = vadd.f32 %v1587, %v1635
        %1637 = vmatmul.bf16.gmra.mxu0 %v1411
        %v1638 = vpop.f32.mrf.mxu0
        %v1639 = vadd.f32 %v1590, %v1638
        %v1640 = vpop.f32.mrf.mxu0
        %v1641 = vadd.f32 %v1592, %v1640
        %1642 = vmatmul.bf16.gmra.mxu0 %v1413
        %v1643 = vpop.f32.mrf.mxu0
        %v1644 = vadd.f32 %v1595, %v1643
        %v1645 = vpop.f32.mrf.mxu0
        %v1646 = vadd.f32 %v1597, %v1645
        %1647 = vdwg.mxu0
        %v1648 = vpack.c.bf16 %v1611, %v1609
        %v1649 = vpack.c.bf16 %v1616, %v1614
        %v1650 = vpack.c.bf16 %v1621, %v1619
        %v1651 = vpack.c.bf16 %v1626, %v1624
        %v1652 = vpack.c.bf16 %v1631, %v1629
        %v1653 = vpack.c.bf16 %v1636, %v1634
        %v1654 = vpack.c.bf16 %v1641, %v1639
        %v1655 = vpack.c.bf16 %v1646, %v1644
        %s1656 = smul.addr %s1414, 4
        %s1657 = scalar_lea.vmem [#allocation2], %s1656
        %v1658 = vld [vmem:[%s1657] sm:$0xf]
        %v1659 = vld [vmem:[%s1657 + $0x4] sm:$0xf]
        %v1660 = vld [vmem:[%s1657 + $0x8] sm:$0xf]
        %v1661 = vld [vmem:[%s1657 + $0xc] sm:$0xf]
        %v1662 = vld [vmem:[%s1657 + $0x10] sm:$0xf]
        %v1663 = vld [vmem:[%s1657 + $0x14] sm:$0xf]
        %v1664 = vld [vmem:[%s1657 + $0x18] sm:$0xf]
        %v1665 = vld [vmem:[%s1657 + $0x1c] sm:$0xf]
        %v1666 = vld [vmem:[%s1657 + $0x20] sm:$0xf]
        %v1667 = vld [vmem:[%s1657 + $0x24] sm:$0xf]
        %v1668 = vld [vmem:[%s1657 + $0x28] sm:$0xf]
        %v1669 = vld [vmem:[%s1657 + $0x2c] sm:$0xf]
        %v1670 = vld [vmem:[%s1657 + $0x30] sm:$0xf]
        %v1671 = vld [vmem:[%s1657 + $0x34] sm:$0xf]
        %v1672 = vld [vmem:[%s1657 + $0x38] sm:$0xf]
        %v1673 = vld [vmem:[%s1657 + $0x3c] sm:$0xf]
        %v1674 = vld [vmem:[%s1657 + $0x40] sm:$0xf]
        %v1675 = vld [vmem:[%s1657 + $0x44] sm:$0xf]
        %v1676 = vld [vmem:[%s1657 + $0x48] sm:$0xf]
        %v1677 = vld [vmem:[%s1657 + $0x4c] sm:$0xf]
        %v1678 = vld [vmem:[%s1657 + $0x50] sm:$0xf]
        %v1679 = vld [vmem:[%s1657 + $0x54] sm:$0xf]
        %v1680 = vld [vmem:[%s1657 + $0x58] sm:$0xf]
        %v1681 = vld [vmem:[%s1657 + $0x5c] sm:$0xf]
        %v1682 = vld [vmem:[%s1657 + $0x60] sm:$0xf]
        %v1683 = vld [vmem:[%s1657 + $0x64] sm:$0xf]
        %v1684 = vld [vmem:[%s1657 + $0x68] sm:$0xf]
        %v1685 = vld [vmem:[%s1657 + $0x6c] sm:$0xf]
        %v1686 = vld [vmem:[%s1657 + $0x70] sm:$0xf]
        %v1687 = vld [vmem:[%s1657 + $0x74] sm:$0xf]
        %v1688 = vld [vmem:[%s1657 + $0x78] sm:$0xf]
        %v1689 = vld [vmem:[%s1657 + $0x7c] sm:$0xf]
        %s1690 = smul.addr %s1414, 4
        %s1691 = scalar_lea.vmem [#allocation3], %s1690
        %v1692 = vld [vmem:[%s1691] sm:$0xf]
        %v1693 = vld [vmem:[%s1691 + $0x4] sm:$0xf]
        %v1694 = vld [vmem:[%s1691 + $0x8] sm:$0xf]
        %v1695 = vld [vmem:[%s1691 + $0xc] sm:$0xf]
        %v1696 = vld [vmem:[%s1691 + $0x10] sm:$0xf]
        %v1697 = vld [vmem:[%s1691 + $0x14] sm:$0xf]
        %v1698 = vld [vmem:[%s1691 + $0x18] sm:$0xf]
        %v1699 = vld [vmem:[%s1691 + $0x1c] sm:$0xf]
        %v1700 = vld [vmem:[%s1691 + $0x20] sm:$0xf]
        %v1701 = vld [vmem:[%s1691 + $0x24] sm:$0xf]
        %v1702 = vld [vmem:[%s1691 + $0x28] sm:$0xf]
        %v1703 = vld [vmem:[%s1691 + $0x2c] sm:$0xf]
        %v1704 = vld [vmem:[%s1691 + $0x30] sm:$0xf]
        %v1705 = vld [vmem:[%s1691 + $0x34] sm:$0xf]
        %v1706 = vld [vmem:[%s1691 + $0x38] sm:$0xf]
        %v1707 = vld [vmem:[%s1691 + $0x3c] sm:$0xf]
        %v1708 = vld [vmem:[%s1691 + $0x40] sm:$0xf]
        %v1709 = vld [vmem:[%s1691 + $0x44] sm:$0xf]
        %v1710 = vld [vmem:[%s1691 + $0x48] sm:$0xf]
        %v1711 = vld [vmem:[%s1691 + $0x4c] sm:$0xf]
        %v1712 = vld [vmem:[%s1691 + $0x50] sm:$0xf]
        %v1713 = vld [vmem:[%s1691 + $0x54] sm:$0xf]
        %v1714 = vld [vmem:[%s1691 + $0x58] sm:$0xf]
        %v1715 = vld [vmem:[%s1691 + $0x5c] sm:$0xf]
        %v1716 = vld [vmem:[%s1691 + $0x60] sm:$0xf]
        %v1717 = vld [vmem:[%s1691 + $0x64] sm:$0xf]
        %v1718 = vld [vmem:[%s1691 + $0x68] sm:$0xf]
        %v1719 = vld [vmem:[%s1691 + $0x6c] sm:$0xf]
        %v1720 = vld [vmem:[%s1691 + $0x70] sm:$0xf]
        %v1721 = vld [vmem:[%s1691 + $0x74] sm:$0xf]
        %v1722 = vld [vmem:[%s1691 + $0x78] sm:$0xf]
        %v1723 = vld [vmem:[%s1691 + $0x7c] sm:$0xf]
        %v1756 = vunpack.c.l.b16 %v1658
        %v1757 = vunpack.c.l.b16 %v1659
        %v1758 = vunpack.c.l.b16 %v1660
        %v1759 = vunpack.c.l.b16 %v1661
        %v1760 = vunpack.c.l.b16 %v1662
        %v1761 = vunpack.c.l.b16 %v1663
        %v1762 = vunpack.c.l.b16 %v1664
        %v1763 = vunpack.c.l.b16 %v1665
        %v1764 = vunpack.c.l.b16 %v1666
        %v1765 = vunpack.c.l.b16 %v1667
        %v1766 = vunpack.c.l.b16 %v1668
        %v1767 = vunpack.c.l.b16 %v1669
        %v1768 = vunpack.c.l.b16 %v1670
        %v1769 = vunpack.c.l.b16 %v1671
        %v1770 = vunpack.c.l.b16 %v1672
        %v1771 = vunpack.c.l.b16 %v1673
        %v1772 = vunpack.c.l.b16 %v1674
        %v1773 = vunpack.c.l.b16 %v1675
        %v1774 = vunpack.c.l.b16 %v1676
        %v1775 = vunpack.c.l.b16 %v1677
        %v1776 = vunpack.c.l.b16 %v1678
        %v1777 = vunpack.c.l.b16 %v1679
        %v1778 = vunpack.c.l.b16 %v1680
        %v1779 = vunpack.c.l.b16 %v1681
        %v1780 = vunpack.c.l.b16 %v1682
        %v1781 = vunpack.c.l.b16 %v1683
        %v1782 = vunpack.c.l.b16 %v1684
        %v1783 = vunpack.c.l.b16 %v1685
        %v1784 = vunpack.c.l.b16 %v1686
        %v1785 = vunpack.c.l.b16 %v1687
        %v1786 = vunpack.c.l.b16 %v1688
        %v1787 = vunpack.c.l.b16 %v1689
        %v1788 = vpack.c.b16 %v1757, %v1756
        %v1789 = vpack.c.b16 %v1759, %v1758
        %v1790 = vpack.c.b16 %v1761, %v1760
        %v1791 = vpack.c.b16 %v1763, %v1762
        %v1792 = vpack.c.b16 %v1765, %v1764
        %v1793 = vpack.c.b16 %v1767, %v1766
        %v1794 = vpack.c.b16 %v1769, %v1768
        %v1795 = vpack.c.b16 %v1771, %v1770
        %v1796 = vpack.c.b16 %v1773, %v1772
        %v1797 = vpack.c.b16 %v1775, %v1774
        %v1798 = vpack.c.b16 %v1777, %v1776
        %v1799 = vpack.c.b16 %v1779, %v1778
        %v1800 = vpack.c.b16 %v1781, %v1780
        %v1801 = vpack.c.b16 %v1783, %v1782
        %v1802 = vpack.c.b16 %v1785, %v1784
        %v1803 = vpack.c.b16 %v1787, %v1786
        %1820 = vmatpush.bf16.xpose.msra.mxu0 %v1795
        %1821 = vmatpush.bf16.xpose.msra.mxu0 %v1794
        %1822 = vmatpush.bf16.xpose.msra.mxu0 %v1793
        %1823 = vmatpush.bf16.xpose.msra.mxu0 %v1792
        %1824 = vmatpush.bf16.xpose.msra.mxu0 %v1791
        %1825 = vmatpush.bf16.xpose.msra.mxu0 %v1790
        %1826 = vmatpush.bf16.xpose.msra.mxu0 %v1789
        %1827 = vmatpush.bf16.xpose.msra.mxu0 %v1788
        %1828 = vmatmul.bf16.gmra.mxu0 %v1648
        %v1829 = vpop.f32.mrf.mxu0
        %v1830 = vadd.f32 0.0, %v1829
        %v1831 = vpop.f32.mrf.mxu0
        %v1832 = vadd.f32 0.0, %v1831
        %1833 = vmatmul.bf16.gmra.mxu0 %v1649
        %v1834 = vpop.f32.mrf.mxu0
        %v1835 = vadd.f32 0.0, %v1834
        %v1836 = vpop.f32.mrf.mxu0
        %v1837 = vadd.f32 0.0, %v1836
        %1838 = vmatmul.bf16.gmra.mxu0 %v1650
        %v1839 = vpop.f32.mrf.mxu0
        %v1840 = vadd.f32 0.0, %v1839
        %v1841 = vpop.f32.mrf.mxu0
        %v1842 = vadd.f32 0.0, %v1841
        %1843 = vmatmul.bf16.gmra.mxu0 %v1651
        %v1844 = vpop.f32.mrf.mxu0
        %v1845 = vadd.f32 0.0, %v1844
        %v1846 = vpop.f32.mrf.mxu0
        %v1847 = vadd.f32 0.0, %v1846
        %1848 = vmatmul.bf16.gmra.mxu0 %v1652
        %v1849 = vpop.f32.mrf.mxu0
        %v1850 = vadd.f32 0.0, %v1849
        %v1851 = vpop.f32.mrf.mxu0
        %v1852 = vadd.f32 0.0, %v1851
        %1853 = vmatmul.bf16.gmra.mxu0 %v1653
        %v1854 = vpop.f32.mrf.mxu0
        %v1855 = vadd.f32 0.0, %v1854
        %v1856 = vpop.f32.mrf.mxu0
        %v1857 = vadd.f32 0.0, %v1856
        %1858 = vmatmul.bf16.gmra.mxu0 %v1654
        %v1859 = vpop.f32.mrf.mxu0
        %v1860 = vadd.f32 0.0, %v1859
        %v1861 = vpop.f32.mrf.mxu0
        %v1862 = vadd.f32 0.0, %v1861
        %1863 = vmatmul.bf16.gmra.mxu0 %v1655
        %v1864 = vpop.f32.mrf.mxu0
        %v1865 = vadd.f32 0.0, %v1864
        %v1866 = vpop.f32.mrf.mxu0
        %v1867 = vadd.f32 0.0, %v1866
        %1868 = vdwg.mxu0
        %1869 = vmatpush.bf16.xpose.msra.mxu0 %v1803
        %1870 = vmatpush.bf16.xpose.msra.mxu0 %v1802
        %1871 = vmatpush.bf16.xpose.msra.mxu0 %v1801
        %1872 = vmatpush.bf16.xpose.msra.mxu0 %v1800
        %1873 = vmatpush.bf16.xpose.msra.mxu0 %v1799
        %1874 = vmatpush.bf16.xpose.msra.mxu0 %v1798
        %1875 = vmatpush.bf16.xpose.msra.mxu0 %v1797
        %1876 = vmatpush.bf16.xpose.msra.mxu0 %v1796
        %1877 = vmatmul.bf16.gmra.mxu0 %v1648
        %v1878 = vpop.f32.mrf.mxu0
        %v1879 = vadd.f32 0.0, %v1878
        %v1880 = vpop.f32.mrf.mxu0
        %v1881 = vadd.f32 0.0, %v1880
        %1882 = vmatmul.bf16.gmra.mxu0 %v1649
        %v1883 = vpop.f32.mrf.mxu0
        %v1884 = vadd.f32 0.0, %v1883
        %v1885 = vpop.f32.mrf.mxu0
        %v1886 = vadd.f32 0.0, %v1885
        %1887 = vmatmul.bf16.gmra.mxu0 %v1650
        %v1888 = vpop.f32.mrf.mxu0
        %v1889 = vadd.f32 0.0, %v1888
        %v1890 = vpop.f32.mrf.mxu0
        %v1891 = vadd.f32 0.0, %v1890
        %1892 = vmatmul.bf16.gmra.mxu0 %v1651
        %v1893 = vpop.f32.mrf.mxu0
        %v1894 = vadd.f32 0.0, %v1893
        %v1895 = vpop.f32.mrf.mxu0
        %v1896 = vadd.f32 0.0, %v1895
        %1897 = vmatmul.bf16.gmra.mxu0 %v1652
        %v1898 = vpop.f32.mrf.mxu0
        %v1899 = vadd.f32 0.0, %v1898
        %v1900 = vpop.f32.mrf.mxu0
        %v1901 = vadd.f32 0.0, %v1900
        %1902 = vmatmul.bf16.gmra.mxu0 %v1653
        %v1903 = vpop.f32.mrf.mxu0
        %v1904 = vadd.f32 0.0, %v1903
        %v1905 = vpop.f32.mrf.mxu0
        %v1906 = vadd.f32 0.0, %v1905
        %1907 = vmatmul.bf16.gmra.mxu0 %v1654
        %v1908 = vpop.f32.mrf.mxu0
        %v1909 = vadd.f32 0.0, %v1908
        %v1910 = vpop.f32.mrf.mxu0
        %v1911 = vadd.f32 0.0, %v1910
        %1912 = vmatmul.bf16.gmra.mxu0 %v1655
        %v1913 = vpop.f32.mrf.mxu0
        %v1914 = vadd.f32 0.0, %v1913
        %v1915 = vpop.f32.mrf.mxu0
        %v1916 = vadd.f32 0.0, %v1915
        %1917 = vdwg.mxu0
        %v1918 = vmax.f32 %v1830, %v1879
        %1919 = vmax.xlane.f32.xlu0 %v1918
        %v1920 = vpop.xlane.xlu0 %1919
        %v1921 = vmax.f32 %v1832, %v1881
        %1922 = vmax.xlane.f32.xlu0 %v1921
        %v1923 = vpop.xlane.xlu0 %1922
        %v1924 = vmax.f32 %v1835, %v1884
        %1925 = vmax.xlane.f32.xlu0 %v1924
        %v1926 = vpop.xlane.xlu0 %1925
        %v1927 = vmax.f32 %v1837, %v1886
        %1928 = vmax.xlane.f32.xlu0 %v1927
        %v1929 = vpop.xlane.xlu0 %1928
        %v1930 = vmax.f32 %v1840, %v1889
        %1931 = vmax.xlane.f32.xlu0 %v1930
        %v1932 = vpop.xlane.xlu0 %1931
        %v1933 = vmax.f32 %v1842, %v1891
        %1934 = vmax.xlane.f32.xlu0 %v1933
        %v1935 = vpop.xlane.xlu0 %1934
        %v1936 = vmax.f32 %v1845, %v1894
        %1937 = vmax.xlane.f32.xlu0 %v1936
        %v1938 = vpop.xlane.xlu0 %1937
        %v1939 = vmax.f32 %v1847, %v1896
        %1940 = vmax.xlane.f32.xlu0 %v1939
        %v1941 = vpop.xlane.xlu0 %1940
        %v1942 = vmax.f32 %v1850, %v1899
        %1943 = vmax.xlane.f32.xlu0 %v1942
        %v1944 = vpop.xlane.xlu0 %1943
        %v1945 = vmax.f32 %v1852, %v1901
        %1946 = vmax.xlane.f32.xlu0 %v1945
        %v1947 = vpop.xlane.xlu0 %1946
        %v1948 = vmax.f32 %v1855, %v1904
        %1949 = vmax.xlane.f32.xlu0 %v1948
        %v1950 = vpop.xlane.xlu0 %1949
        %v1951 = vmax.f32 %v1857, %v1906
        %1952 = vmax.xlane.f32.xlu0 %v1951
        %v1953 = vpop.xlane.xlu0 %1952
        %v1954 = vmax.f32 %v1860, %v1909
        %1955 = vmax.xlane.f32.xlu0 %v1954
        %v1956 = vpop.xlane.xlu0 %1955
        %v1957 = vmax.f32 %v1862, %v1911
        %1958 = vmax.xlane.f32.xlu0 %v1957
        %v1959 = vpop.xlane.xlu0 %1958
        %v1960 = vmax.f32 %v1865, %v1914
        %1961 = vmax.xlane.f32.xlu0 %v1960
        %v1962 = vpop.xlane.xlu0 %1961
        %v1963 = vmax.f32 %v1867, %v1916
        %1964 = vmax.xlane.f32.xlu0 %v1963
        %v1965 = vpop.xlane.xlu0 %1964
        %v1966 = vsub.f32 %v1830, %v1920
        %v1967 = vsub.f32 %v1879, %v1920
        %v1968 = vsub.f32 %v1832, %v1923
        %v1969 = vsub.f32 %v1881, %v1923
        %v1970 = vsub.f32 %v1835, %v1926
        %v1971 = vsub.f32 %v1884, %v1926
        %v1972 = vsub.f32 %v1837, %v1929
        %v1973 = vsub.f32 %v1886, %v1929
        %v1974 = vsub.f32 %v1840, %v1932
        %v1975 = vsub.f32 %v1889, %v1932
        %v1976 = vsub.f32 %v1842, %v1935
        %v1977 = vsub.f32 %v1891, %v1935
        %v1978 = vsub.f32 %v1845, %v1938
        %v1979 = vsub.f32 %v1894, %v1938
        %v1980 = vsub.f32 %v1847, %v1941
        %v1981 = vsub.f32 %v1896, %v1941
        %v1982 = vsub.f32 %v1850, %v1944
        %v1983 = vsub.f32 %v1899, %v1944
        %v1984 = vsub.f32 %v1852, %v1947
        %v1985 = vsub.f32 %v1901, %v1947
        %v1986 = vsub.f32 %v1855, %v1950
        %v1987 = vsub.f32 %v1904, %v1950
        %v1988 = vsub.f32 %v1857, %v1953
        %v1989 = vsub.f32 %v1906, %v1953
        %v1990 = vsub.f32 %v1860, %v1956
        %v1991 = vsub.f32 %v1909, %v1956
        %v1992 = vsub.f32 %v1862, %v1959
        %v1993 = vsub.f32 %v1911, %v1959
        %v1994 = vsub.f32 %v1865, %v1962
        %v1995 = vsub.f32 %v1914, %v1962
        %v1996 = vsub.f32 %v1867, %v1965
        %v1997 = vsub.f32 %v1916, %v1965
        %v1998 = vmul.f32 %v1966, 1.442695
        %v1999 = vpow.pop %v1998
        %v2000 = vmul.f32 %v1967, 1.442695
        %v2001 = vpow.pop %v2000
        %v2002 = vmul.f32 %v1968, 1.442695
        %v2003 = vpow.pop %v2002
        %v2004 = vmul.f32 %v1969, 1.442695
        %v2005 = vpow.pop %v2004
        %v2006 = vmul.f32 %v1970, 1.442695
        %v2007 = vpow.pop %v2006
        %v2008 = vmul.f32 %v1971, 1.442695
        %v2009 = vpow.pop %v2008
        %v2010 = vmul.f32 %v1972, 1.442695
        %v2011 = vpow.pop %v2010
        %v2012 = vmul.f32 %v1973, 1.442695
        %v2013 = vpow.pop %v2012
        %v2014 = vmul.f32 %v1974, 1.442695
        %v2015 = vpow.pop %v2014
        %v2016 = vmul.f32 %v1975, 1.442695
        %v2017 = vpow.pop %v2016
        %v2018 = vmul.f32 %v1976, 1.442695
        %v2019 = vpow.pop %v2018
        %v2020 = vmul.f32 %v1977, 1.442695
        %v2021 = vpow.pop %v2020
        %v2022 = vmul.f32 %v1978, 1.442695
        %v2023 = vpow.pop %v2022
        %v2024 = vmul.f32 %v1979, 1.442695
        %v2025 = vpow.pop %v2024
        %v2026 = vmul.f32 %v1980, 1.442695
        %v2027 = vpow.pop %v2026
        %v2028 = vmul.f32 %v1981, 1.442695
        %v2029 = vpow.pop %v2028
        %v2030 = vmul.f32 %v1982, 1.442695
        %v2031 = vpow.pop %v2030
        %v2032 = vmul.f32 %v1983, 1.442695
        %v2033 = vpow.pop %v2032
        %v2034 = vmul.f32 %v1984, 1.442695
        %v2035 = vpow.pop %v2034
        %v2036 = vmul.f32 %v1985, 1.442695
        %v2037 = vpow.pop %v2036
        %v2038 = vmul.f32 %v1986, 1.442695
        %v2039 = vpow.pop %v2038
        %v2040 = vmul.f32 %v1987, 1.442695
        %v2041 = vpow.pop %v2040
        %v2042 = vmul.f32 %v1988, 1.442695
        %v2043 = vpow.pop %v2042
        %v2044 = vmul.f32 %v1989, 1.442695
        %v2045 = vpow.pop %v2044
        %v2046 = vmul.f32 %v1990, 1.442695
        %v2047 = vpow.pop %v2046
        %v2048 = vmul.f32 %v1991, 1.442695
        %v2049 = vpow.pop %v2048
        %v2050 = vmul.f32 %v1992, 1.442695
        %v2051 = vpow.pop %v2050
        %v2052 = vmul.f32 %v1993, 1.442695
        %v2053 = vpow.pop %v2052
        %v2054 = vmul.f32 %v1994, 1.442695
        %v2055 = vpow.pop %v2054
        %v2056 = vmul.f32 %v1995, 1.442695
        %v2057 = vpow.pop %v2056
        %v2058 = vmul.f32 %v1996, 1.442695
        %v2059 = vpow.pop %v2058
        %v2060 = vmul.f32 %v1997, 1.442695
        %v2061 = vpow.pop %v2060
        %v2062 = vadd.f32 %v1999, %v2001
        %2063 = vadd.xlane.f32.xlu0 %v2062
        %v2064 = vpop.xlane.xlu0 %2063
        %v2065 = vadd.f32 %v2003, %v2005
        %2066 = vadd.xlane.f32.xlu0 %v2065
        %v2067 = vpop.xlane.xlu0 %2066
        %v2068 = vadd.f32 %v2007, %v2009
        %2069 = vadd.xlane.f32.xlu0 %v2068
        %v2070 = vpop.xlane.xlu0 %2069
        %v2071 = vadd.f32 %v2011, %v2013
        %2072 = vadd.xlane.f32.xlu0 %v2071
        %v2073 = vpop.xlane.xlu0 %2072
        %v2074 = vadd.f32 %v2015, %v2017
        %2075 = vadd.xlane.f32.xlu0 %v2074
        %v2076 = vpop.xlane.xlu0 %2075
        %v2077 = vadd.f32 %v2019, %v2021
        %2078 = vadd.xlane.f32.xlu0 %v2077
        %v2079 = vpop.xlane.xlu0 %2078
        %v2080 = vadd.f32 %v2023, %v2025
        %2081 = vadd.xlane.f32.xlu0 %v2080
        %v2082 = vpop.xlane.xlu0 %2081
        %v2083 = vadd.f32 %v2027, %v2029
        %2084 = vadd.xlane.f32.xlu0 %v2083
        %v2085 = vpop.xlane.xlu0 %2084
        %v2086 = vadd.f32 %v2031, %v2033
        %2087 = vadd.xlane.f32.xlu0 %v2086
        %v2088 = vpop.xlane.xlu0 %2087
        %v2089 = vadd.f32 %v2035, %v2037
        %2090 = vadd.xlane.f32.xlu0 %v2089
        %v2091 = vpop.xlane.xlu0 %2090
        %v2092 = vadd.f32 %v2039, %v2041
        %2093 = vadd.xlane.f32.xlu0 %v2092
        %v2094 = vpop.xlane.xlu0 %2093
        %v2095 = vadd.f32 %v2043, %v2045
        %2096 = vadd.xlane.f32.xlu0 %v2095
        %v2097 = vpop.xlane.xlu0 %2096
        %v2098 = vadd.f32 %v2047, %v2049
        %2099 = vadd.xlane.f32.xlu0 %v2098
        %v2100 = vpop.xlane.xlu0 %2099
        %v2101 = vadd.f32 %v2051, %v2053
        %2102 = vadd.xlane.f32.xlu0 %v2101
        %v2103 = vpop.xlane.xlu0 %2102
        %v2104 = vadd.f32 %v2055, %v2057
        %2105 = vadd.xlane.f32.xlu0 %v2104
        %v2106 = vpop.xlane.xlu0 %2105
        %v2107 = vadd.f32 %v2059, %v2061
        %2108 = vadd.xlane.f32.xlu0 %v2107
        %v2109 = vpop.xlane.xlu0 %2108
        %v2110 = vrcp.pop %v2064
        %v2111 = vrcp.pop %v2067
        %v2112 = vrcp.pop %v2070
        %v2113 = vrcp.pop %v2073
        %v2114 = vrcp.pop %v2076
        %v2115 = vrcp.pop %v2079
        %v2116 = vrcp.pop %v2082
        %v2117 = vrcp.pop %v2085
        %v2118 = vrcp.pop %v2088
        %v2119 = vrcp.pop %v2091
        %v2120 = vrcp.pop %v2094
        %v2121 = vrcp.pop %v2097
        %v2122 = vrcp.pop %v2100
        %v2123 = vrcp.pop %v2103
        %v2124 = vrcp.pop %v2106
        %v2125 = vrcp.pop %v2109
        %v2126 = vmul.f32 %v1999, %v2110
        %v2127 = vmul.f32 %v2001, %v2110
        %v2128 = vmul.f32 %v2003, %v2111
        %v2129 = vmul.f32 %v2005, %v2111
        %v2130 = vmul.f32 %v2007, %v2112
        %v2131 = vmul.f32 %v2009, %v2112
        %v2132 = vmul.f32 %v2011, %v2113
        %v2133 = vmul.f32 %v2013, %v2113
        %v2134 = vmul.f32 %v2015, %v2114
        %v2135 = vmul.f32 %v2017, %v2114
        %v2136 = vmul.f32 %v2019, %v2115
        %v2137 = vmul.f32 %v2021, %v2115
        %v2138 = vmul.f32 %v2023, %v2116
        %v2139 = vmul.f32 %v2025, %v2116
        %v2140 = vmul.f32 %v2027, %v2117
        %v2141 = vmul.f32 %v2029, %v2117
        %v2142 = vmul.f32 %v2031, %v2118
        %v2143 = vmul.f32 %v2033, %v2118
        %v2144 = vmul.f32 %v2035, %v2119
        %v2145 = vmul.f32 %v2037, %v2119
        %v2146 = vmul.f32 %v2039, %v2120
        %v2147 = vmul.f32 %v2041, %v2120
        %v2148 = vmul.f32 %v2043, %v2121
        %v2149 = vmul.f32 %v2045, %v2121
        %v2150 = vmul.f32 %v2047, %v2122
        %v2151 = vmul.f32 %v2049, %v2122
        %v2152 = vmul.f32 %v2051, %v2123
        %v2153 = vmul.f32 %v2053, %v2123
        %v2154 = vmul.f32 %v2055, %v2124
        %v2155 = vmul.f32 %v2057, %v2124
        %v2156 = vmul.f32 %v2059, %v2125
        %v2157 = vmul.f32 %v2061, %v2125
        %2158 = vst [vmem:[%s498] sm:$0xff] %v2126
        %2159 = vst [vmem:[%s498 + $0x8] sm:$0xff] %v2127
        %2160 = vst [vmem:[%s498 + $0x10] sm:$0xff] %v2128
        %2161 = vst [vmem:[%s498 + $0x18] sm:$0xff] %v2129
        %2162 = vst [vmem:[%s498 + $0x20] sm:$0xff] %v2130
        %2163 = vst [vmem:[%s498 + $0x28] sm:$0xff] %v2131
        %2164 = vst [vmem:[%s498 + $0x30] sm:$0xff] %v2132
        %2165 = vst [vmem:[%s498 + $0x38] sm:$0xff] %v2133
        %2166 = vst [vmem:[%s498 + $0x40] sm:$0xff] %v2134
        %2167 = vst [vmem:[%s498 + $0x48] sm:$0xff] %v2135
        %2168 = vst [vmem:[%s498 + $0x50] sm:$0xff] %v2136
        %2169 = vst [vmem:[%s498 + $0x58] sm:$0xff] %v2137
        %2170 = vst [vmem:[%s498 + $0x60] sm:$0xff] %v2138
        %2171 = vst [vmem:[%s498 + $0x68] sm:$0xff] %v2139
        %2172 = vst [vmem:[%s498 + $0x70] sm:$0xff] %v2140
        %2173 = vst [vmem:[%s498 + $0x78] sm:$0xff] %v2141
        %2174 = vst [vmem:[%s498 + $0x80] sm:$0xff] %v2142
        %2175 = vst [vmem:[%s498 + $0x88] sm:$0xff] %v2143
        %2176 = vst [vmem:[%s498 + $0x90] sm:$0xff] %v2144
        %2177 = vst [vmem:[%s498 + $0x98] sm:$0xff] %v2145
        %2178 = vst [vmem:[%s498 + $0xa0] sm:$0xff] %v2146
        %2179 = vst [vmem:[%s498 + $0xa8] sm:$0xff] %v2147
        %2180 = vst [vmem:[%s498 + $0xb0] sm:$0xff] %v2148
        %2181 = vst [vmem:[%s498 + $0xb8] sm:$0xff] %v2149
        %2182 = vst [vmem:[%s498 + $0xc0] sm:$0xff] %v2150
        %2183 = vst [vmem:[%s498 + $0xc8] sm:$0xff] %v2151
        %2184 = vst [vmem:[%s498 + $0xd0] sm:$0xff] %v2152
        %2185 = vst [vmem:[%s498 + $0xd8] sm:$0xff] %v2153
        %2186 = vst [vmem:[%s498 + $0xe0] sm:$0xff] %v2154
        %2187 = vst [vmem:[%s498 + $0xe8] sm:$0xff] %v2155
        %2188 = vst [vmem:[%s498 + $0xf0] sm:$0xff] %v2156
        %2189 = vst [vmem:[%s498 + $0xf8] sm:$0xff] %v2157
        %v2190 = vpack.c.bf16 %v2128, %v2126
        %v2191 = vpack.c.bf16 %v2129, %v2127
        %v2192 = vpack.c.bf16 %v2132, %v2130
        %v2193 = vpack.c.bf16 %v2133, %v2131
        %v2194 = vpack.c.bf16 %v2136, %v2134
        %v2195 = vpack.c.bf16 %v2137, %v2135
        %v2196 = vpack.c.bf16 %v2140, %v2138
        %v2197 = vpack.c.bf16 %v2141, %v2139
        %v2198 = vpack.c.bf16 %v2144, %v2142
        %v2199 = vpack.c.bf16 %v2145, %v2143
        %v2200 = vpack.c.bf16 %v2148, %v2146
        %v2201 = vpack.c.bf16 %v2149, %v2147
        %v2202 = vpack.c.bf16 %v2152, %v2150
        %v2203 = vpack.c.bf16 %v2153, %v2151
        %v2204 = vpack.c.bf16 %v2156, %v2154
        %v2205 = vpack.c.bf16 %v2157, %v2155
        %v2238 = vunpack.c.l.b16 %v1692
        %v2239 = vunpack.c.l.b16 %v1693
        %v2240 = vunpack.c.l.b16 %v1694
        %v2241 = vunpack.c.l.b16 %v1695
        %v2242 = vunpack.c.l.b16 %v1696
        %v2243 = vunpack.c.l.b16 %v1697
        %v2244 = vunpack.c.l.b16 %v1698
        %v2245 = vunpack.c.l.b16 %v1699
        %v2246 = vunpack.c.l.b16 %v1700
        %v2247 = vunpack.c.l.b16 %v1701
        %v2248 = vunpack.c.l.b16 %v1702
        %v2249 = vunpack.c.l.b16 %v1703
        %v2250 = vunpack.c.l.b16 %v1704
        %v2251 = vunpack.c.l.b16 %v1705
        %v2252 = vunpack.c.l.b16 %v1706
        %v2253 = vunpack.c.l.b16 %v1707
        %v2254 = vunpack.c.l.b16 %v1708
        %v2255 = vunpack.c.l.b16 %v1709
        %v2256 = vunpack.c.l.b16 %v1710
        %v2257 = vunpack.c.l.b16 %v1711
        %v2258 = vunpack.c.l.b16 %v1712
        %v2259 = vunpack.c.l.b16 %v1713
        %v2260 = vunpack.c.l.b16 %v1714
        %v2261 = vunpack.c.l.b16 %v1715
        %v2262 = vunpack.c.l.b16 %v1716
        %v2263 = vunpack.c.l.b16 %v1717
        %v2264 = vunpack.c.l.b16 %v1718
        %v2265 = vunpack.c.l.b16 %v1719
        %v2266 = vunpack.c.l.b16 %v1720
        %v2267 = vunpack.c.l.b16 %v1721
        %v2268 = vunpack.c.l.b16 %v1722
        %v2269 = vunpack.c.l.b16 %v1723
        %v2270 = vpack.c.b16 %v2239, %v2238
        %v2271 = vpack.c.b16 %v2241, %v2240
        %v2272 = vpack.c.b16 %v2243, %v2242
        %v2273 = vpack.c.b16 %v2245, %v2244
        %v2274 = vpack.c.b16 %v2247, %v2246
        %v2275 = vpack.c.b16 %v2249, %v2248
        %v2276 = vpack.c.b16 %v2251, %v2250
        %v2277 = vpack.c.b16 %v2253, %v2252
        %v2278 = vpack.c.b16 %v2255, %v2254
        %v2279 = vpack.c.b16 %v2257, %v2256
        %v2280 = vpack.c.b16 %v2259, %v2258
        %v2281 = vpack.c.b16 %v2261, %v2260
        %v2282 = vpack.c.b16 %v2263, %v2262
        %v2283 = vpack.c.b16 %v2265, %v2264
        %v2284 = vpack.c.b16 %v2267, %v2266
        %v2285 = vpack.c.b16 %v2269, %v2268
        %2302 = vmatpush.bf16.msra.mxu0 %v2277
        %2303 = vmatpush.bf16.msra.mxu0 %v2276
        %2304 = vmatpush.bf16.msra.mxu0 %v2275
        %2305 = vmatpush.bf16.msra.mxu0 %v2274
        %2306 = vmatpush.bf16.msra.mxu0 %v2273
        %2307 = vmatpush.bf16.msra.mxu0 %v2272
        %2308 = vmatpush.bf16.msra.mxu0 %v2271
        %2309 = vmatpush.bf16.msra.mxu0 %v2270
        %2310 = vmatmul.bf16.gmra.mxu0 %v2190
        %v2311 = vpop.f32.mrf.mxu0
        %v2312 = vadd.f32 0.0, %v2311
        %v2313 = vpop.f32.mrf.mxu0
        %v2314 = vadd.f32 0.0, %v2313
        %2315 = vmatmul.bf16.gmra.mxu0 %v2192
        %v2316 = vpop.f32.mrf.mxu0
        %v2317 = vadd.f32 0.0, %v2316
        %v2318 = vpop.f32.mrf.mxu0
        %v2319 = vadd.f32 0.0, %v2318
        %2320 = vmatmul.bf16.gmra.mxu0 %v2194
        %v2321 = vpop.f32.mrf.mxu0
        %v2322 = vadd.f32 0.0, %v2321
        %v2323 = vpop.f32.mrf.mxu0
        %v2324 = vadd.f32 0.0, %v2323
        %2325 = vmatmul.bf16.gmra.mxu0 %v2196
        %v2326 = vpop.f32.mrf.mxu0
        %v2327 = vadd.f32 0.0, %v2326
        %v2328 = vpop.f32.mrf.mxu0
        %v2329 = vadd.f32 0.0, %v2328
        %2330 = vmatmul.bf16.gmra.mxu0 %v2198
        %v2331 = vpop.f32.mrf.mxu0
        %v2332 = vadd.f32 0.0, %v2331
        %v2333 = vpop.f32.mrf.mxu0
        %v2334 = vadd.f32 0.0, %v2333
        %2335 = vmatmul.bf16.gmra.mxu0 %v2200
        %v2336 = vpop.f32.mrf.mxu0
        %v2337 = vadd.f32 0.0, %v2336
        %v2338 = vpop.f32.mrf.mxu0
        %v2339 = vadd.f32 0.0, %v2338
        %2340 = vmatmul.bf16.gmra.mxu0 %v2202
        %v2341 = vpop.f32.mrf.mxu0
        %v2342 = vadd.f32 0.0, %v2341
        %v2343 = vpop.f32.mrf.mxu0
        %v2344 = vadd.f32 0.0, %v2343
        %2345 = vmatmul.bf16.gmra.mxu0 %v2204
        %v2346 = vpop.f32.mrf.mxu0
        %v2347 = vadd.f32 0.0, %v2346
        %v2348 = vpop.f32.mrf.mxu0
        %v2349 = vadd.f32 0.0, %v2348
        %2350 = vdwg.mxu0
        %2351 = vmatpush.bf16.msra.mxu0 %v2285
        %2352 = vmatpush.bf16.msra.mxu0 %v2284
        %2353 = vmatpush.bf16.msra.mxu0 %v2283
        %2354 = vmatpush.bf16.msra.mxu0 %v2282
        %2355 = vmatpush.bf16.msra.mxu0 %v2281
        %2356 = vmatpush.bf16.msra.mxu0 %v2280
        %2357 = vmatpush.bf16.msra.mxu0 %v2279
        %2358 = vmatpush.bf16.msra.mxu0 %v2278
        %2359 = vmatmul.bf16.gmra.mxu0 %v2191
        %v2360 = vpop.f32.mrf.mxu0
        %v2361 = vadd.f32 %v2312, %v2360
        %v2362 = vpop.f32.mrf.mxu0
        %v2363 = vadd.f32 %v2314, %v2362
        %2364 = vmatmul.bf16.gmra.mxu0 %v2193
        %v2365 = vpop.f32.mrf.mxu0
        %v2366 = vadd.f32 %v2317, %v2365
        %v2367 = vpop.f32.mrf.mxu0
        %v2368 = vadd.f32 %v2319, %v2367
        %2369 = vmatmul.bf16.gmra.mxu0 %v2195
        %v2370 = vpop.f32.mrf.mxu0
        %v2371 = vadd.f32 %v2322, %v2370
        %v2372 = vpop.f32.mrf.mxu0
        %v2373 = vadd.f32 %v2324, %v2372
        %2374 = vmatmul.bf16.gmra.mxu0 %v2197
        %v2375 = vpop.f32.mrf.mxu0
        %v2376 = vadd.f32 %v2327, %v2375
        %v2377 = vpop.f32.mrf.mxu0
        %v2378 = vadd.f32 %v2329, %v2377
        %2379 = vmatmul.bf16.gmra.mxu0 %v2199
        %v2380 = vpop.f32.mrf.mxu0
        %v2381 = vadd.f32 %v2332, %v2380
        %v2382 = vpop.f32.mrf.mxu0
        %v2383 = vadd.f32 %v2334, %v2382
        %2384 = vmatmul.bf16.gmra.mxu0 %v2201
        %v2385 = vpop.f32.mrf.mxu0
        %v2386 = vadd.f32 %v2337, %v2385
        %v2387 = vpop.f32.mrf.mxu0
        %v2388 = vadd.f32 %v2339, %v2387
        %2389 = vmatmul.bf16.gmra.mxu0 %v2203
        %v2390 = vpop.f32.mrf.mxu0
        %v2391 = vadd.f32 %v2342, %v2390
        %v2392 = vpop.f32.mrf.mxu0
        %v2393 = vadd.f32 %v2344, %v2392
        %2394 = vmatmul.bf16.gmra.mxu0 %v2205
        %v2395 = vpop.f32.mrf.mxu0
        %v2396 = vadd.f32 %v2347, %v2395
        %v2397 = vpop.f32.mrf.mxu0
        %v2398 = vadd.f32 %v2349, %v2397
        %2399 = vdwg.mxu0
        %v2400 = vpack.c.bf16 %v2363, %v2361
        %v2401 = vpack.c.bf16 %v2368, %v2366
        %v2402 = vpack.c.bf16 %v2373, %v2371
        %v2403 = vpack.c.bf16 %v2378, %v2376
        %v2404 = vpack.c.bf16 %v2383, %v2381
        %v2405 = vpack.c.bf16 %v2388, %v2386
        %v2406 = vpack.c.bf16 %v2393, %v2391
        %v2407 = vpack.c.bf16 %v2398, %v2396
        %s2408 = smul.addr %s1414, 4
        %s2409 = scalar_lea.vmem [#allocation14], %s2408
        %v2410 = vld [vmem:[%s2409] sm:$0xff]
        %v2411 = vld [vmem:[%s2409 + $0x8] sm:$0xff]
        %v2412 = vld [vmem:[%s2409 + $0x10] sm:$0xff]
        %v2413 = vld [vmem:[%s2409 + $0x18] sm:$0xff]
        %v2414 = vld [vmem:[%s2409 + $0x20] sm:$0xff]
        %v2415 = vld [vmem:[%s2409 + $0x28] sm:$0xff]
        %v2416 = vld [vmem:[%s2409 + $0x30] sm:$0xff]
        %v2417 = vld [vmem:[%s2409 + $0x38] sm:$0xff]
        %v2418 = vld [vmem:[%s2409 + $0x40] sm:$0xff]
        %v2419 = vld [vmem:[%s2409 + $0x48] sm:$0xff]
        %v2420 = vld [vmem:[%s2409 + $0x50] sm:$0xff]
        %v2421 = vld [vmem:[%s2409 + $0x58] sm:$0xff]
        %v2422 = vld [vmem:[%s2409 + $0x60] sm:$0xff]
        %v2423 = vld [vmem:[%s2409 + $0x68] sm:$0xff]
        %v2424 = vld [vmem:[%s2409 + $0x70] sm:$0xff]
        %v2425 = vld [vmem:[%s2409 + $0x78] sm:$0xff]
        %v2442 = vunpack.c.l.b16 %v2410
        %v2443 = vunpack.c.h.b16 %v2410
        %v2444 = vunpack.c.l.b16 %v2411
        %v2445 = vunpack.c.h.b16 %v2411
        %v2446 = vunpack.c.l.b16 %v2412
        %v2447 = vunpack.c.h.b16 %v2412
        %v2448 = vunpack.c.l.b16 %v2413
        %v2449 = vunpack.c.h.b16 %v2413
        %v2450 = vunpack.c.l.b16 %v2414
        %v2451 = vunpack.c.h.b16 %v2414
        %v2452 = vunpack.c.l.b16 %v2415
        %v2453 = vunpack.c.h.b16 %v2415
        %v2454 = vunpack.c.l.b16 %v2416
        %v2455 = vunpack.c.h.b16 %v2416
        %v2456 = vunpack.c.l.b16 %v2417
        %v2457 = vunpack.c.h.b16 %v2417
        %v2458 = vunpack.c.l.b16 %v2418
        %v2459 = vunpack.c.h.b16 %v2418
        %v2460 = vunpack.c.l.b16 %v2419
        %v2461 = vunpack.c.h.b16 %v2419
        %v2462 = vunpack.c.l.b16 %v2420
        %v2463 = vunpack.c.h.b16 %v2420
        %v2464 = vunpack.c.l.b16 %v2421
        %v2465 = vunpack.c.h.b16 %v2421
        %v2466 = vunpack.c.l.b16 %v2422
        %v2467 = vunpack.c.h.b16 %v2422
        %v2468 = vunpack.c.l.b16 %v2423
        %v2469 = vunpack.c.h.b16 %v2423
        %v2470 = vunpack.c.l.b16 %v2424
        %v2471 = vunpack.c.h.b16 %v2424
        %v2472 = vunpack.c.l.b16 %v2425
        %v2473 = vunpack.c.h.b16 %v2425
        %v2474 = vpack.c.b16 %v2444, %v2442
        %v2475 = vpack.c.b16 %v2445, %v2443
        %v2476 = vpack.c.b16 %v2448, %v2446
        %v2477 = vpack.c.b16 %v2449, %v2447
        %v2478 = vpack.c.b16 %v2452, %v2450
        %v2479 = vpack.c.b16 %v2453, %v2451
        %v2480 = vpack.c.b16 %v2456, %v2454
        %v2481 = vpack.c.b16 %v2457, %v2455
        %v2482 = vpack.c.b16 %v2460, %v2458
        %v2483 = vpack.c.b16 %v2461, %v2459
        %v2484 = vpack.c.b16 %v2464, %v2462
        %v2485 = vpack.c.b16 %v2465, %v2463
        %v2486 = vpack.c.b16 %v2468, %v2466
        %v2487 = vpack.c.b16 %v2469, %v2467
        %v2488 = vpack.c.b16 %v2472, %v2470
        %v2489 = vpack.c.b16 %v2473, %v2471
        %2506 = vmatpush.bf16.msra.mxu0 %v2488
        %2507 = vmatpush.bf16.msra.mxu0 %v2486
        %2508 = vmatpush.bf16.msra.mxu0 %v2484
        %2509 = vmatpush.bf16.msra.mxu0 %v2482
        %2510 = vmatpush.bf16.msra.mxu0 %v2480
        %2511 = vmatpush.bf16.msra.mxu0 %v2478
        %2512 = vmatpush.bf16.msra.mxu0 %v2476
        %2513 = vmatpush.bf16.msra.mxu0 %v2474
        %2514 = vmatmul.bf16.gmra.mxu0 %v2400
        %v2515 = vpop.f32.mrf.mxu0
        %v2516 = vadd.f32 0.0, %v2515
        %v2517 = vpop.f32.mrf.mxu0
        %v2518 = vadd.f32 0.0, %v2517
        %2519 = vmatmul.bf16.gmra.mxu0 %v2401
        %v2520 = vpop.f32.mrf.mxu0
        %v2521 = vadd.f32 0.0, %v2520
        %v2522 = vpop.f32.mrf.mxu0
        %v2523 = vadd.f32 0.0, %v2522
        %2524 = vmatmul.bf16.gmra.mxu0 %v2402
        %v2525 = vpop.f32.mrf.mxu0
        %v2526 = vadd.f32 0.0, %v2525
        %v2527 = vpop.f32.mrf.mxu0
        %v2528 = vadd.f32 0.0, %v2527
        %2529 = vmatmul.bf16.gmra.mxu0 %v2403
        %v2530 = vpop.f32.mrf.mxu0
        %v2531 = vadd.f32 0.0, %v2530
        %v2532 = vpop.f32.mrf.mxu0
        %v2533 = vadd.f32 0.0, %v2532
        %2534 = vmatmul.bf16.gmra.mxu0 %v2404
        %v2535 = vpop.f32.mrf.mxu0
        %v2536 = vadd.f32 0.0, %v2535
        %v2537 = vpop.f32.mrf.mxu0
        %v2538 = vadd.f32 0.0, %v2537
        %2539 = vmatmul.bf16.gmra.mxu0 %v2405
        %v2540 = vpop.f32.mrf.mxu0
        %v2541 = vadd.f32 0.0, %v2540
        %v2542 = vpop.f32.mrf.mxu0
        %v2543 = vadd.f32 0.0, %v2542
        %2544 = vmatmul.bf16.gmra.mxu0 %v2406
        %v2545 = vpop.f32.mrf.mxu0
        %v2546 = vadd.f32 0.0, %v2545
        %v2547 = vpop.f32.mrf.mxu0
        %v2548 = vadd.f32 0.0, %v2547
        %2549 = vmatmul.bf16.gmra.mxu0 %v2407
        %v2550 = vpop.f32.mrf.mxu0
        %v2551 = vadd.f32 0.0, %v2550
        %v2552 = vpop.f32.mrf.mxu0
        %v2553 = vadd.f32 0.0, %v2552
        %2554 = vdwg.mxu0
        %2555 = vmatpush.bf16.msra.mxu0 %v2489
        %2556 = vmatpush.bf16.msra.mxu0 %v2487
        %2557 = vmatpush.bf16.msra.mxu0 %v2485
        %2558 = vmatpush.bf16.msra.mxu0 %v2483
        %2559 = vmatpush.bf16.msra.mxu0 %v2481
        %2560 = vmatpush.bf16.msra.mxu0 %v2479
        %2561 = vmatpush.bf16.msra.mxu0 %v2477
        %2562 = vmatpush.bf16.msra.mxu0 %v2475
        %2563 = vmatmul.bf16.gmra.mxu0 %v2400
        %v2564 = vpop.f32.mrf.mxu0
        %v2565 = vadd.f32 0.0, %v2564
        %v2566 = vpop.f32.mrf.mxu0
        %v2567 = vadd.f32 0.0, %v2566
        %2568 = vmatmul.bf16.gmra.mxu0 %v2401
        %v2569 = vpop.f32.mrf.mxu0
        %v2570 = vadd.f32 0.0, %v2569
        %v2571 = vpop.f32.mrf.mxu0
        %v2572 = vadd.f32 0.0, %v2571
        %2573 = vmatmul.bf16.gmra.mxu0 %v2402
        %v2574 = vpop.f32.mrf.mxu0
        %v2575 = vadd.f32 0.0, %v2574
        %v2576 = vpop.f32.mrf.mxu0
        %v2577 = vadd.f32 0.0, %v2576
        %2578 = vmatmul.bf16.gmra.mxu0 %v2403
        %v2579 = vpop.f32.mrf.mxu0
        %v2580 = vadd.f32 0.0, %v2579
        %v2581 = vpop.f32.mrf.mxu0
        %v2582 = vadd.f32 0.0, %v2581
        %2583 = vmatmul.bf16.gmra.mxu0 %v2404
        %v2584 = vpop.f32.mrf.mxu0
        %v2585 = vadd.f32 0.0, %v2584
        %v2586 = vpop.f32.mrf.mxu0
        %v2587 = vadd.f32 0.0, %v2586
        %2588 = vmatmul.bf16.gmra.mxu0 %v2405
        %v2589 = vpop.f32.mrf.mxu0
        %v2590 = vadd.f32 0.0, %v2589
        %v2591 = vpop.f32.mrf.mxu0
        %v2592 = vadd.f32 0.0, %v2591
        %2593 = vmatmul.bf16.gmra.mxu0 %v2406
        %v2594 = vpop.f32.mrf.mxu0
        %v2595 = vadd.f32 0.0, %v2594
        %v2596 = vpop.f32.mrf.mxu0
        %v2597 = vadd.f32 0.0, %v2596
        %2598 = vmatmul.bf16.gmra.mxu0 %v2407
        %v2599 = vpop.f32.mrf.mxu0
        %v2600 = vadd.f32 0.0, %v2599
        %v2601 = vpop.f32.mrf.mxu0
        %v2602 = vadd.f32 0.0, %v2601
        %2603 = vdwg.mxu0
        %p2604 = scmp.eq.s32.totalorder %s41, 0
        // Predicated region
        $region85: #{tpu_custom_call.1} parent=55 // pred_check
          %p2605 = pneg %p2604
        $region86: #{tpu_custom_call.1} parent=55 // pred_check_branch
          %2607 = sbr.rel (%p2605) target = $region88
        $region87: #{tpu_custom_call.1} parent=55 // pred_region
          %2608 = vst [vmem:[#allocation4] sm:$0xff] %v2516
          %2609 = vst [vmem:[#allocation4 + $0x8] sm:$0xff] %v2565
          %2610 = vst [vmem:[#allocation4 + $0x10] sm:$0xff] %v2518
          %2611 = vst [vmem:[#allocation4 + $0x18] sm:$0xff] %v2567
          %2612 = vst [vmem:[#allocation4 + $0x20] sm:$0xff] %v2521
          %2613 = vst [vmem:[#allocation4 + $0x28] sm:$0xff] %v2570
          %2614 = vst [vmem:[#allocation4 + $0x30] sm:$0xff] %v2523
          %2615 = vst [vmem:[#allocation4 + $0x38] sm:$0xff] %v2572
          %2616 = vst [vmem:[#allocation4 + $0x40] sm:$0xff] %v2526
          %2617 = vst [vmem:[#allocation4 + $0x48] sm:$0xff] %v2575
          %2618 = vst [vmem:[#allocation4 + $0x50] sm:$0xff] %v2528
          %2619 = vst [vmem:[#allocation4 + $0x58] sm:$0xff] %v2577
          %2620 = vst [vmem:[#allocation4 + $0x60] sm:$0xff] %v2531
          %2621 = vst [vmem:[#allocation4 + $0x68] sm:$0xff] %v2580
          %2622 = vst [vmem:[#allocation4 + $0x70] sm:$0xff] %v2533
          %2623 = vst [vmem:[#allocation4 + $0x78] sm:$0xff] %v2582
          %2624 = vst [vmem:[#allocation4 + $0x80] sm:$0xff] %v2536
          %2625 = vst [vmem:[#allocation4 + $0x88] sm:$0xff] %v2585
          %2626 = vst [vmem:[#allocation4 + $0x90] sm:$0xff] %v2538
          %2627 = vst [vmem:[#allocation4 + $0x98] sm:$0xff] %v2587
          %2628 = vst [vmem:[#allocation4 + $0xa0] sm:$0xff] %v2541
          %2629 = vst [vmem:[#allocation4 + $0xa8] sm:$0xff] %v2590
          %2630 = vst [vmem:[#allocation4 + $0xb0] sm:$0xff] %v2543
          %2631 = vst [vmem:[#allocation4 + $0xb8] sm:$0xff] %v2592
          %2632 = vst [vmem:[#allocation4 + $0xc0] sm:$0xff] %v2546
          %2633 = vst [vmem:[#allocation4 + $0xc8] sm:$0xff] %v2595
          %2634 = vst [vmem:[#allocation4 + $0xd0] sm:$0xff] %v2548
          %2635 = vst [vmem:[#allocation4 + $0xd8] sm:$0xff] %v2597
          %2636 = vst [vmem:[#allocation4 + $0xe0] sm:$0xff] %v2551
          %2637 = vst [vmem:[#allocation4 + $0xe8] sm:$0xff] %v2600
          %2638 = vst [vmem:[#allocation4 + $0xf0] sm:$0xff] %v2553
          %2639 = vst [vmem:[#allocation4 + $0xf8] sm:$0xff] %v2602
        $region88: #{tpu_custom_call.1} parent=55 // pred_fallthru
          _
        %p2640 = scmp.gt.s32.totalorder %s41, 0
        // Predicated region
        $region89: #{tpu_custom_call.1} parent=55 // pred_check
          %p2641 = pneg %p2640
        $region90: #{tpu_custom_call.1} parent=55 // pred_check_branch
          %2643 = sbr.rel (%p2641) target = $region92
        $region91: #{tpu_custom_call.1} parent=55 // pred_region
          %v2644 = vld [vmem:[#allocation4] sm:$0xff]
          %v2645 = vld [vmem:[#allocation4 + $0x8] sm:$0xff]
          %v2646 = vld [vmem:[#allocation4 + $0x10] sm:$0xff]
          %v2647 = vld [vmem:[#allocation4 + $0x18] sm:$0xff]
          %v2648 = vld [vmem:[#allocation4 + $0x20] sm:$0xff]
          %v2649 = vld [vmem:[#allocation4 + $0x28] sm:$0xff]
          %v2650 = vld [vmem:[#allocation4 + $0x30] sm:$0xff]
          %v2651 = vld [vmem:[#allocation4 + $0x38] sm:$0xff]
          %v2652 = vld [vmem:[#allocation4 + $0x40] sm:$0xff]
          %v2653 = vld [vmem:[#allocation4 + $0x48] sm:$0xff]
          %v2654 = vld [vmem:[#allocation4 + $0x50] sm:$0xff]
          %v2655 = vld [vmem:[#allocation4 + $0x58] sm:$0xff]
          %v2656 = vld [vmem:[#allocation4 + $0x60] sm:$0xff]
          %v2657 = vld [vmem:[#allocation4 + $0x68] sm:$0xff]
          %v2658 = vld [vmem:[#allocation4 + $0x70] sm:$0xff]
          %v2659 = vld [vmem:[#allocation4 + $0x78] sm:$0xff]
          %v2660 = vld [vmem:[#allocation4 + $0x80] sm:$0xff]
          %v2661 = vld [vmem:[#allocation4 + $0x88] sm:$0xff]
          %v2662 = vld [vmem:[#allocation4 + $0x90] sm:$0xff]
          %v2663 = vld [vmem:[#allocation4 + $0x98] sm:$0xff]
          %v2664 = vld [vmem:[#allocation4 + $0xa0] sm:$0xff]
          %v2665 = vld [vmem:[#allocation4 + $0xa8] sm:$0xff]
          %v2666 = vld [vmem:[#allocation4 + $0xb0] sm:$0xff]
          %v2667 = vld [vmem:[#allocation4 + $0xb8] sm:$0xff]
          %v2668 = vld [vmem:[#allocation4 + $0xc0] sm:$0xff]
          %v2669 = vld [vmem:[#allocation4 + $0xc8] sm:$0xff]
          %v2670 = vld [vmem:[#allocation4 + $0xd0] sm:$0xff]
          %v2671 = vld [vmem:[#allocation4 + $0xd8] sm:$0xff]
          %v2672 = vld [vmem:[#allocation4 + $0xe0] sm:$0xff]
          %v2673 = vld [vmem:[#allocation4 + $0xe8] sm:$0xff]
          %v2674 = vld [vmem:[#allocation4 + $0xf0] sm:$0xff]
          %v2675 = vld [vmem:[#allocation4 + $0xf8] sm:$0xff]
          %v2676 = vadd.f32 %v2644, %v2516
          %v2677 = vadd.f32 %v2645, %v2565
          %v2678 = vadd.f32 %v2646, %v2518
          %v2679 = vadd.f32 %v2647, %v2567
          %v2680 = vadd.f32 %v2648, %v2521
          %v2681 = vadd.f32 %v2649, %v2570
          %v2682 = vadd.f32 %v2650, %v2523
          %v2683 = vadd.f32 %v2651, %v2572
          %v2684 = vadd.f32 %v2652, %v2526
          %v2685 = vadd.f32 %v2653, %v2575
          %v2686 = vadd.f32 %v2654, %v2528
          %v2687 = vadd.f32 %v2655, %v2577
          %v2688 = vadd.f32 %v2656, %v2531
          %v2689 = vadd.f32 %v2657, %v2580
          %v2690 = vadd.f32 %v2658, %v2533
          %v2691 = vadd.f32 %v2659, %v2582
          %v2692 = vadd.f32 %v2660, %v2536
          %v2693 = vadd.f32 %v2661, %v2585
          %v2694 = vadd.f32 %v2662, %v2538
          %v2695 = vadd.f32 %v2663, %v2587
          %v2696 = vadd.f32 %v2664, %v2541
          %v2697 = vadd.f32 %v2665, %v2590
          %v2698 = vadd.f32 %v2666, %v2543
          %v2699 = vadd.f32 %v2667, %v2592
          %v2700 = vadd.f32 %v2668, %v2546
          %v2701 = vadd.f32 %v2669, %v2595
          %v2702 = vadd.f32 %v2670, %v2548
          %v2703 = vadd.f32 %v2671, %v2597
          %v2704 = vadd.f32 %v2672, %v2551
          %v2705 = vadd.f32 %v2673, %v2600
          %v2706 = vadd.f32 %v2674, %v2553
          %v2707 = vadd.f32 %v2675, %v2602
          %2708 = vst [vmem:[#allocation4] sm:$0xff] %v2676
          %2709 = vst [vmem:[#allocation4 + $0x8] sm:$0xff] %v2677
          %2710 = vst [vmem:[#allocation4 + $0x10] sm:$0xff] %v2678
          %2711 = vst [vmem:[#allocation4 + $0x18] sm:$0xff] %v2679
          %2712 = vst [vmem:[#allocation4 + $0x20] sm:$0xff] %v2680
          %2713 = vst [vmem:[#allocation4 + $0x28] sm:$0xff] %v2681
          %2714 = vst [vmem:[#allocation4 + $0x30] sm:$0xff] %v2682
          %2715 = vst [vmem:[#allocation4 + $0x38] sm:$0xff] %v2683
          %2716 = vst [vmem:[#allocation4 + $0x40] sm:$0xff] %v2684
          %2717 = vst [vmem:[#allocation4 + $0x48] sm:$0xff] %v2685
          %2718 = vst [vmem:[#allocation4 + $0x50] sm:$0xff] %v2686
          %2719 = vst [vmem:[#allocation4 + $0x58] sm:$0xff] %v2687
          %2720 = vst [vmem:[#allocation4 + $0x60] sm:$0xff] %v2688
          %2721 = vst [vmem:[#allocation4 + $0x68] sm:$0xff] %v2689
          %2722 = vst [vmem:[#allocation4 + $0x70] sm:$0xff] %v2690
          %2723 = vst [vmem:[#allocation4 + $0x78] sm:$0xff] %v2691
          %2724 = vst [vmem:[#allocation4 + $0x80] sm:$0xff] %v2692
          %2725 = vst [vmem:[#allocation4 + $0x88] sm:$0xff] %v2693
          %2726 = vst [vmem:[#allocation4 + $0x90] sm:$0xff] %v2694
          %2727 = vst [vmem:[#allocation4 + $0x98] sm:$0xff] %v2695
          %2728 = vst [vmem:[#allocation4 + $0xa0] sm:$0xff] %v2696
          %2729 = vst [vmem:[#allocation4 + $0xa8] sm:$0xff] %v2697
          %2730 = vst [vmem:[#allocation4 + $0xb0] sm:$0xff] %v2698
          %2731 = vst [vmem:[#allocation4 + $0xb8] sm:$0xff] %v2699
          %2732 = vst [vmem:[#allocation4 + $0xc0] sm:$0xff] %v2700
          %2733 = vst [vmem:[#allocation4 + $0xc8] sm:$0xff] %v2701
          %2734 = vst [vmem:[#allocation4 + $0xd0] sm:$0xff] %v2702
          %2735 = vst [vmem:[#allocation4 + $0xd8] sm:$0xff] %v2703
          %2736 = vst [vmem:[#allocation4 + $0xe0] sm:$0xff] %v2704
          %2737 = vst [vmem:[#allocation4 + $0xe8] sm:$0xff] %v2705
          %2738 = vst [vmem:[#allocation4 + $0xf0] sm:$0xff] %v2706
          %2739 = vst [vmem:[#allocation4 + $0xf8] sm:$0xff] %v2707
        $region92: #{tpu_custom_call.1} parent=55 // pred_fallthru
          _
        %p2740 = scmp.eq.s32.totalorder %s41, 1
        // Predicated region
        $region93: #{tpu_custom_call.1} parent=55 // pred_check
          %p2741 = pneg %p2740
        $region94: #{tpu_custom_call.1} parent=55 // pred_check_branch
          %2743 = sbr.rel (%p2741) target = $region96
        $region95: #{tpu_custom_call.1} parent=55 // pred_region
          %v2744 = vld [vmem:[#allocation4] sm:$0xff]
          %v2745 = vld [vmem:[#allocation4 + $0x8] sm:$0xff]
          %v2746 = vld [vmem:[#allocation4 + $0x10] sm:$0xff]
          %v2747 = vld [vmem:[#allocation4 + $0x18] sm:$0xff]
          %v2748 = vld [vmem:[#allocation4 + $0x20] sm:$0xff]
          %v2749 = vld [vmem:[#allocation4 + $0x28] sm:$0xff]
          %v2750 = vld [vmem:[#allocation4 + $0x30] sm:$0xff]
          %v2751 = vld [vmem:[#allocation4 + $0x38] sm:$0xff]
          %v2752 = vld [vmem:[#allocation4 + $0x40] sm:$0xff]
          %v2753 = vld [vmem:[#allocation4 + $0x48] sm:$0xff]
          %v2754 = vld [vmem:[#allocation4 + $0x50] sm:$0xff]
          %v2755 = vld [vmem:[#allocation4 + $0x58] sm:$0xff]
          %v2756 = vld [vmem:[#allocation4 + $0x60] sm:$0xff]
          %v2757 = vld [vmem:[#allocation4 + $0x68] sm:$0xff]
          %v2758 = vld [vmem:[#allocation4 + $0x70] sm:$0xff]
          %v2759 = vld [vmem:[#allocation4 + $0x78] sm:$0xff]
          %v2760 = vld [vmem:[#allocation4 + $0x80] sm:$0xff]
          %v2761 = vld [vmem:[#allocation4 + $0x88] sm:$0xff]
          %v2762 = vld [vmem:[#allocation4 + $0x90] sm:$0xff]
          %v2763 = vld [vmem:[#allocation4 + $0x98] sm:$0xff]
          %v2764 = vld [vmem:[#allocation4 + $0xa0] sm:$0xff]
          %v2765 = vld [vmem:[#allocation4 + $0xa8] sm:$0xff]
          %v2766 = vld [vmem:[#allocation4 + $0xb0] sm:$0xff]
          %v2767 = vld [vmem:[#allocation4 + $0xb8] sm:$0xff]
          %v2768 = vld [vmem:[#allocation4 + $0xc0] sm:$0xff]
          %v2769 = vld [vmem:[#allocation4 + $0xc8] sm:$0xff]
          %v2770 = vld [vmem:[#allocation4 + $0xd0] sm:$0xff]
          %v2771 = vld [vmem:[#allocation4 + $0xd8] sm:$0xff]
          %v2772 = vld [vmem:[#allocation4 + $0xe0] sm:$0xff]
          %v2773 = vld [vmem:[#allocation4 + $0xe8] sm:$0xff]
          %v2774 = vld [vmem:[#allocation4 + $0xf0] sm:$0xff]
          %v2775 = vld [vmem:[#allocation4 + $0xf8] sm:$0xff]
          %v2776 = vld [vmem:[%s8] sm:$0x3]
          %v2778 = vperm.slane %v2776, 0
          %v2779 = vperm.slane %v2776, 1
          %v2782 = vadd.f32 %v2744, %v2778
          %v2783 = vadd.f32 %v2745, %v2779
          %v2784 = vadd.f32 %v2746, %v2778
          %v2785 = vadd.f32 %v2747, %v2779
          %v2786 = vadd.f32 %v2748, %v2778
          %v2787 = vadd.f32 %v2749, %v2779
          %v2788 = vadd.f32 %v2750, %v2778
          %v2789 = vadd.f32 %v2751, %v2779
          %v2790 = vadd.f32 %v2752, %v2778
          %v2791 = vadd.f32 %v2753, %v2779
          %v2792 = vadd.f32 %v2754, %v2778
          %v2793 = vadd.f32 %v2755, %v2779
          %v2794 = vadd.f32 %v2756, %v2778
          %v2795 = vadd.f32 %v2757, %v2779
          %v2796 = vadd.f32 %v2758, %v2778
          %v2797 = vadd.f32 %v2759, %v2779
          %v2798 = vadd.f32 %v2760, %v2778
          %v2799 = vadd.f32 %v2761, %v2779
          %v2800 = vadd.f32 %v2762, %v2778
          %v2801 = vadd.f32 %v2763, %v2779
          %v2802 = vadd.f32 %v2764, %v2778
          %v2803 = vadd.f32 %v2765, %v2779
          %v2804 = vadd.f32 %v2766, %v2778
          %v2805 = vadd.f32 %v2767, %v2779
          %v2806 = vadd.f32 %v2768, %v2778
          %v2807 = vadd.f32 %v2769, %v2779
          %v2808 = vadd.f32 %v2770, %v2778
          %v2809 = vadd.f32 %v2771, %v2779
          %v2810 = vadd.f32 %v2772, %v2778
          %v2811 = vadd.f32 %v2773, %v2779
          %v2812 = vadd.f32 %v2774, %v2778
          %v2813 = vadd.f32 %v2775, %v2779
          %2814 = vst [vmem:[%s491] sm:$0xff] %v2782
          %2815 = vst [vmem:[%s491 + $0x8] sm:$0xff] %v2783
          %2816 = vst [vmem:[%s491 + $0x10] sm:$0xff] %v2784
          %2817 = vst [vmem:[%s491 + $0x18] sm:$0xff] %v2785
          %2818 = vst [vmem:[%s491 + $0x20] sm:$0xff] %v2786
          %2819 = vst [vmem:[%s491 + $0x28] sm:$0xff] %v2787
          %2820 = vst [vmem:[%s491 + $0x30] sm:$0xff] %v2788
          %2821 = vst [vmem:[%s491 + $0x38] sm:$0xff] %v2789
          %2822 = vst [vmem:[%s491 + $0x40] sm:$0xff] %v2790
          %2823 = vst [vmem:[%s491 + $0x48] sm:$0xff] %v2791
          %2824 = vst [vmem:[%s491 + $0x50] sm:$0xff] %v2792
          %2825 = vst [vmem:[%s491 + $0x58] sm:$0xff] %v2793
          %2826 = vst [vmem:[%s491 + $0x60] sm:$0xff] %v2794
          %2827 = vst [vmem:[%s491 + $0x68] sm:$0xff] %v2795
          %2828 = vst [vmem:[%s491 + $0x70] sm:$0xff] %v2796
          %2829 = vst [vmem:[%s491 + $0x78] sm:$0xff] %v2797
          %2830 = vst [vmem:[%s491 + $0x80] sm:$0xff] %v2798
          %2831 = vst [vmem:[%s491 + $0x88] sm:$0xff] %v2799
          %2832 = vst [vmem:[%s491 + $0x90] sm:$0xff] %v2800
          %2833 = vst [vmem:[%s491 + $0x98] sm:$0xff] %v2801
          %2834 = vst [vmem:[%s491 + $0xa0] sm:$0xff] %v2802
          %2835 = vst [vmem:[%s491 + $0xa8] sm:$0xff] %v2803
          %2836 = vst [vmem:[%s491 + $0xb0] sm:$0xff] %v2804
          %2837 = vst [vmem:[%s491 + $0xb8] sm:$0xff] %v2805
          %2838 = vst [vmem:[%s491 + $0xc0] sm:$0xff] %v2806
          %2839 = vst [vmem:[%s491 + $0xc8] sm:$0xff] %v2807
          %2840 = vst [vmem:[%s491 + $0xd0] sm:$0xff] %v2808
          %2841 = vst [vmem:[%s491 + $0xd8] sm:$0xff] %v2809
          %2842 = vst [vmem:[%s491 + $0xe0] sm:$0xff] %v2810
          %2843 = vst [vmem:[%s491 + $0xe8] sm:$0xff] %v2811
          %2844 = vst [vmem:[%s491 + $0xf0] sm:$0xff] %v2812
          %2845 = vst [vmem:[%s491 + $0xf8] sm:$0xff] %v2813
        $region96: #{tpu_custom_call.1} parent=55 // pred_fallthru
          _
        %s2846 = sand.u32 %s257, 1
        %s2847 = scalar_lea.sflag [#allocation7], %s2846
        %s2848 = sand.u32 %s257, 1
        %s2849 = smul.addr %s2848, 256
        %s2850 = scalar_lea.vmem [#allocation16], %s2849
        %s2851 = sand.u32 %s287, 1
        %s2852 = scalar_lea.sflag [#allocation18], %s2851
        %s2853 = sand.u32 %s287, 1
        %s2854 = smul.addr %s2853, 256
        %s2855 = scalar_lea.vmem [#allocation17], %s2854
        // Predicated region
        $region97: #{tpu_custom_call.1} parent=55 // pred_check
          %p2856 = pneg %p267
        $region98: #{tpu_custom_call.1} parent=55 // pred_check_branch
          %2858 = sbr.rel (%p2856) target = $region100
        $region99: #{tpu_custom_call.1} parent=55 // pred_region
          %s2859 = smul.u32 16, %s40
          %2861 = vsyncadd %s2847, 0
          %s2862 = smul.addr %s2859, 2
          %s2863 = smul.addr %s39, 64
          %s2864 = sadd.s32 %s2862, %s2863
          %s2865 = smul.addr %s2864, 8
          %s2866 = scalar_lea.hbm %s9, %s2865
          %s2867 = sshll.u32 %s2850, 4
          %s2868 = int_to_ptr.vmem [resolvable:$true] %s2867
          %s2869 = sshll.u32 %s2866, 4
          %s2870 = int_to_ptr.hbm [resolvable:$true] %s2869
          %2875 = dma.vmem_to_hbm [thread:$0]  %s2868, 4096, %s2870, %s2847, 256, 256, 16
        $region100: #{tpu_custom_call.1} parent=55 // pred_fallthru
          _
        // Predicated region
        $region101: #{tpu_custom_call.1} parent=55 // pred_check
          %p2876 = pneg %p297
        $region102: #{tpu_custom_call.1} parent=55 // pred_check_branch
          %2878 = sbr.rel (%p2876) target = $region104
        $region103: #{tpu_custom_call.1} parent=55 // pred_region
          %s2879 = smul.u32 16, %s40
          %2881 = vsyncadd %s2852, 0
          %s2882 = smul.addr %s2879, 2
          %s2883 = smul.addr %s41, 64
          %s2884 = sadd.s32 %s2882, %s2883
          %s2885 = smul.addr %s39, 128
          %s2886 = sadd.s32 %s2884, %s2885
          %s2887 = smul.addr %s2886, 8
          %s2888 = scalar_lea.hbm %s10, %s2887
          %s2889 = sshll.u32 %s2855, 4
          %s2890 = int_to_ptr.vmem [resolvable:$true] %s2889
          %s2891 = sshll.u32 %s2888, 4
          %s2892 = int_to_ptr.hbm [resolvable:$true] %s2891
          %2897 = dma.vmem_to_hbm [thread:$0]  %s2890, 4096, %s2892, %s2852, 256, 256, 16
        $region104: #{tpu_custom_call.1} parent=55 // pred_fallthru
          _
      $region56: #{tpu_custom_call.1} parent=5 // pred_fallthru
        _
      %p2898 = scmp.le.s32.totalorder 2, %s29
      // Predicated region
      $region105: #{tpu_custom_call.1} parent=5 // pred_check
        %p2899 = pneg %p2898
      $region106: #{tpu_custom_call.1} parent=5 // pred_check_branch
        %2901 = sbr.rel (%p2899) target = $region108
      $region107: #{tpu_custom_call.1} parent=5 // pred_region
        %s2902 = ssub.s32 %s29, 2
        // Predicated region
        $region109: #{tpu_custom_call.1} parent=107 // pred_check
          %p2903 = pneg %p273
        $region110: #{tpu_custom_call.1} parent=107 // pred_check_branch
          %2905 = sbr.rel (%p2903) target = $region112
        $region111: #{tpu_custom_call.1} parent=107 // pred_region
          %s2906 = sand.u32 %s258, 1
          %s2907 = scalar_lea.sflag [#allocation7], %s2906
          %s2908 = sand.u32 %s258, 1
          %s2909 = smul.addr %s2908, 256
          %s2910 = scalar_lea.vmem [#allocation16], %s2909
          %2912 = dma.done %s2907, 4096
        $region112: #{tpu_custom_call.1} parent=107 // pred_fallthru
          _
        // Predicated region
        $region113: #{tpu_custom_call.1} parent=107 // pred_check
          %p2913 = pneg %p303
        $region114: #{tpu_custom_call.1} parent=107 // pred_check_branch
          %2915 = sbr.rel (%p2913) target = $region116
        $region115: #{tpu_custom_call.1} parent=107 // pred_region
          %s2916 = sand.u32 %s288, 1
          %s2917 = scalar_lea.sflag [#allocation18], %s2916
          %s2918 = sand.u32 %s288, 1
          %s2919 = smul.addr %s2918, 256
          %s2920 = scalar_lea.vmem [#allocation17], %s2919
          %2922 = dma.done %s2917, 4096
        $region116: #{tpu_custom_call.1} parent=107 // pred_fallthru
          _
      $region108: #{tpu_custom_call.1} parent=5 // pred_fallthru
        _
    $region6: #{tpu_custom_call.1} parent=1 // loop_footer
      %s33 = sadd.s32 1, %s29
    $region7: #{tpu_custom_call.1} parent=1 // loop_footer_branch
      %28 = sbr.rel target = $region3
    $region8: #{tpu_custom_call.1} parent=1 // loop_exit
      _
    %2923 = vsyncpa [#allocation6], 1
    %s2924 = scalar_lea.sflag [#allocation6], 1
    %2925 = vsyncpa %s2924, 1
    %2926 = vsyncpa [#allocation9], 1
    %2927 = vsyncpa [#allocation12], 1
    %2928 = vsyncpa [#allocation15], 1
    %2929 = vsyncpa [#allocation7], 1
    %s2930 = scalar_lea.sflag [#allocation7], 1
    %2931 = vsyncpa %s2930, 1
    %2932 = vsyncpa [#allocation18], 1
    %s2933 = scalar_lea.sflag [#allocation18], 1
    %2934 = vsyncpa %s2933, 1

</llo_original>
